<compile_context>
chip_gen: v6e
topology: v6e:2x2x1
jax: 0.10.0
libtpu: 0.0.40
codegen_flags: <defaults>
</compile_context>

<pallas_src>
import math
import functools

import jax
import jax.numpy as jnp
from jax.experimental import pallas as pl
from jax.experimental.pallas import tpu as pltpu


# ----------------------------------------------------------------------------
# small numerics helpers (pure jnp: usable inside the kernel and in the ref)
# ----------------------------------------------------------------------------
def _silu(v):
    return v * (1.0 / (1.0 + jnp.exp(-v)))


def _softplus(v):
    return jnp.maximum(v, 0.0) + jnp.log(1.0 + jnp.exp(-jnp.abs(v)))


def _lane_tile(v, reps):
    # (N, C) -> (N, reps*C), lane layout q = s*C + c  (proven-to-lower pattern)
    return jnp.concatenate([v] * reps, axis=1)


# ----------------------------------------------------------------------------
# Fused GroupMamba kernel: Bt batch elements per grid step, everything in VMEM.
# In-kernel row order is time-major: r = t*Bt + b.
# ----------------------------------------------------------------------------
def _group_mamba_kernel(x_ref, w_in_ref, cw_ref, cb_ref, w_mid_ref, b_mid_ref,
                        a_ref, dvec_ref, w_oexp_ref, w_out_ref, out_ref,
                        xpad_ref, proj_ref, dA_ref, dBu_ref, hall_ref,
                        *, L, Bt, C, Q, S, K, D):
    N = L * Bt                      # rows per grid step (time-major)
    P = (K - 1) * Bt                # causal pad rows (whole sublane tiles)

    # --- in_proj on (N, D): M = Bt*L rows feed the MXU properly --------------
    x2d = x_ref[...].reshape(N, D)                                     # r = t*Bt+b
    xz = jnp.dot(x2d, w_in_ref[...], preferred_element_type=jnp.float32)  # (N, 2C)
    x_in = xz[:, :C]
    z = xz[:, C:]

    # --- depthwise causal conv via zero-padded VMEM windows ------------------
    # shift by s timesteps == shift by s*Bt rows -> aligned starts, and never
    # crosses a batch boundary because the shift is a multiple of Bt.
    xpad_ref[pl.ds(0, P), :] = jnp.zeros((P, C), jnp.float32)
    xpad_ref[pl.ds(P, N), :] = x_in
    cw = cw_ref[...]                                                   # (K, C)
    u = cb_ref[...]                                                    # (1, C) bcast
    for k in range(K):                                                 # K static
        u = u + xpad_ref[pl.ds(k * Bt, N), :] * cw[k:k + 1, :]
    u = _silu(u)                                                       # (N, C)

    # --- fused x_proj + dt_proj; columns [B_exp | C_exp | dt] -----------------
    # (dt kept at width C: softplus on N*C elements only, not N*Q)
    proj_ref[...] = (jnp.dot(u, w_mid_ref[...],
                             preferred_element_type=jnp.float32) + b_mid_ref[...])
    dt = _softplus(proj_ref[:, pl.ds(2 * Q, C)])                       # (N, C)

    # stage the scan inputs in VMEM (lane layout q = s*C + c)
    dA_ref[...] = jnp.exp(_lane_tile(dt, S) * a_ref[...])              # (N, Q)
    dBu_ref[...] = _lane_tile(dt * u, S) * proj_ref[:, pl.ds(0, Q)]    # (N, Q)

    # epilogue pieces that do not depend on h (kept small across the loop)
    gate = _silu(z)                                                    # (N, C)
    y_skip = jnp.dot(dvec_ref[...] * u * gate, w_out_ref[...],
                     preferred_element_type=jnp.float32)               # (N, D)

    # --- selective scan: one lane-dense (Bt, Q) FMA per timestep -------------
    def step(t, h):
        r = pl.multiple_of(t * Bt, Bt)
        h = dA_ref[pl.ds(r, Bt), :] * h + dBu_ref[pl.ds(r, Bt), :]
        hall_ref[pl.ds(r, Bt), :] = h
        return h

    jax.lax.fori_loop(0, L, step, jnp.zeros((Bt, Q), jnp.float32), unroll=True)

    # --- epilogue: C contraction + sum over states folded into the MXU -------
    hcg = hall_ref[...] * proj_ref[:, pl.ds(Q, Q)] * _lane_tile(gate, S)   # (N, Q)
    out2d = jnp.dot(hcg, w_oexp_ref[...],
                    preferred_element_type=jnp.float32) + y_skip           # (N, D)
    out_ref[...] = out2d.reshape(L, Bt, D)


def group_mamba_forward(fp, x, *, batch_tile=8):
    """x: (B, L, d_model) float32 -> (B, L, d_model)."""
    B, L, D = x.shape
    K, C = fp["conv_w"].shape
    Q = fp["a_flat"].shape[1]
    S = Q // C
    Bt = batch_tile

    # pad batch to a multiple of the sublane tile
    Bp = ((B + Bt - 1) // Bt) * Bt
    if Bp != B:
        x = jnp.concatenate([x, jnp.zeros((Bp - B, L, D), x.dtype)], axis=0)

    # time-major layout for the kernel (tiny host-side transpose)
    xt = jnp.transpose(x, (1, 0, 2))                                   # (L, Bp, D)

    N = L * Bt
    kern = functools.partial(_group_mamba_kernel,
                             L=L, Bt=Bt, C=C, Q=Q, S=S, K=K, D=D)

    def full(a):  # whole-array block, constant index map
        return pl.BlockSpec(a.shape, lambda i: (0,) * a.ndim)

    out_t = pl.pallas_call(
        kern,
        grid=(Bp // Bt,),
        in_specs=[
            pl.BlockSpec((L, Bt, D), lambda i: (0, i, 0)),
            full(fp["w_in"]), full(fp["conv_w"]), full(fp["conv_b"]),
            full(fp["w_mid"]), full(fp["b_mid"]), full(fp["a_flat"]),
            full(fp["d_vec"]), full(fp["w_out_exp"]), full(fp["w_out"]),
        ],
        out_specs=pl.BlockSpec((L, Bt, D), lambda i: (0, i, 0)),
        out_shape=jax.ShapeDtypeStruct((L, Bp, D), jnp.float32),
        scratch_shapes=[
            pltpu.VMEM(((K - 1) * Bt + N, C), jnp.float32),   # padded conv input
            pltpu.VMEM((N, 2 * Q + C), jnp.float32),          # [B_exp|C_exp|dt]
            pltpu.VMEM((N, Q), jnp.float32),                  # dA = exp(dt*A)
            pltpu.VMEM((N, Q), jnp.float32),                  # dt*u*B
            pltpu.VMEM((N, Q), jnp.float32),                  # h_t for all t
        ],
        compiler_params=pltpu.CompilerParams(
            dimension_semantics=("parallel",)),
    )(xt, fp["w_in"], fp["conv_w"], fp["conv_b"], fp["w_mid"], fp["b_mid"],
      fp["a_flat"], fp["d_vec"], fp["w_out_exp"], fp["w_out"])

    out = jnp.transpose(out_t, (1, 0, 2))                              # (Bp, L, D)
    return out[:B]


# ----------------------------------------------------------------------------
# Parameter setup: per-group Mamba weights + host-side fusion into stacked
# block-diagonal / expanded matrices consumed by the kernel (done once).
# ----------------------------------------------------------------------------
def init_group_params(key, *, d_model, d_state, d_conv, expand, n_groups):
    gs = d_model // n_groups
    d_inner = expand * gs
    dt_rank = max(1, math.ceil(gs / 16))
    groups = []
    for g in range(n_groups):
        k = jax.random.split(jax.random.fold_in(key, g), 8)

        def rn(kk, shape, fan_in):
            return jax.random.normal(kk, shape, jnp.float32) / math.sqrt(fan_in)

        A = -jnp.tile(jnp.arange(1, d_state + 1, dtype=jnp.float32)[None, :],
                      (d_inner, 1))            # A = -exp(A_log), A_log = log(1..S)
        groups.append(dict(
            in_w=rn(k[0], (gs, 2 * d_inner), gs),
            conv_w=rn(k[1], (d_conv, d_inner), d_conv),
            conv_b=0.1 * jax.random.normal(k[2], (d_inner,), jnp.float32),
            x_w=rn(k[3], (d_inner, dt_rank + 2 * d_state), d_inner),
            dt_w=rn(k[4], (dt_rank, d_inner), dt_rank),
            dt_b=0.1 * jax.random.normal(k[5], (d_inner,), jnp.float32),
            A=A,
            D=jnp.ones((d_inner,), jnp.float32),
            out_w=rn(k[6], (d_inner, gs), d_inner),
        ))
    return dict(groups=groups, d_model=d_model, d_state=d_state, d_conv=d_conv,
                n_groups=n_groups, gs=gs, d_inner=d_inner, dt_rank=dt_rank)


def _block_diag(mats):
    rows = sum(m.shape[0] for m in mats)
    cols = sum(m.shape[1] for m in mats)
    out = jnp.zeros((rows, cols), jnp.float32)
    r = c = 0
    for m in mats:
        out = out.at[r:r + m.shape[0], c:c + m.shape[1]].set(m)
        r += m.shape[0]
        c += m.shape[1]
    return out


def fuse_group_params(raw):
    gp = raw["groups"]
    d_inner, d_state, dt_rank = raw["d_inner"], raw["d_state"], raw["dt_rank"]
    C = raw["n_groups"] * d_inner          # stacked inner channels
    Q = d_state * C                        # lane-dense state width

    # in_proj: block-diag, output columns [x_all | z_all]
    w_in = jnp.concatenate(
        [_block_diag([p["in_w"][:, :d_inner] for p in gp]),
         _block_diag([p["in_w"][:, d_inner:] for p in gp])], axis=1)     # (D, 2C)

    conv_w = jnp.concatenate([p["conv_w"] for p in gp], axis=1)          # (K, C)
    conv_b = jnp.concatenate([p["conv_b"] for p in gp])[None, :]         # (1, C)

    wx_dt = _block_diag([p["x_w"][:, :dt_rank] for p in gp])             # (C, G*dr)
    wx_B = _block_diag([p["x_w"][:, dt_rank:dt_rank + d_state] for p in gp])
    wx_C = _block_diag([p["x_w"][:, dt_rank + d_state:] for p in gp])    # (C, G*S)
    w_dt = _block_diag([p["dt_w"] for p in gp])                          # (G*dr, C)
    b_dt = jnp.concatenate([p["dt_b"] for p in gp])                      # (C,)

    # B/C group->channel expansion folded into the weight:
    # output column q = s*C + c reads original column  group(c)*d_state + s
    cols = jnp.array([(c // d_inner) * d_state + s
                      for s in range(d_state) for c in range(C)], dtype=jnp.int32)

    # x_proj columns ordered [B_exp | C_exp | dt]: every in-kernel lane slice
    # starts at a multiple of 128, and dt stays at width C (no d_state tiling).
    w_mid = jnp.concatenate([wx_B[:, cols], wx_C[:, cols], wx_dt @ w_dt], axis=1)
    b_mid = jnp.concatenate(
        [jnp.zeros((2 * Q,), jnp.float32), b_dt])[None, :]               # (1, 2Q+C)

    a_cat = jnp.concatenate([p["A"] for p in gp], axis=0)                # (C, S)
    a_flat = a_cat.T.reshape(1, Q)                                       # q = s*C+c
    d_vec = jnp.concatenate([p["D"] for p in gp])[None, :]               # (1, C)
    w_out = _block_diag([p["out_w"] for p in gp])                        # (C, D)
    w_out_exp = jnp.tile(w_out, (d_state, 1))                            # (Q, D)

    return dict(w_in=w_in, conv_w=conv_w, conv_b=conv_b, w_mid=w_mid,
                b_mid=b_mid, a_flat=a_flat, d_vec=d_vec, w_out=w_out,
                w_out_exp=w_out_exp)


# ----------------------------------------------------------------------------
# Pure-JAX reference (straight per-group Mamba, mirrors the PyTorch module)
# ----------------------------------------------------------------------------
def group_mamba_reference(raw, x):
    B, L, _ = x.shape
    gs, di, ds, dc, dr = (raw["gs"], raw["d_inner"], raw["d_state"],
                          raw["d_conv"], raw["dt_rank"])
    hi = jax.lax.Precision.HIGHEST
    outs = []
    for g in range(raw["n_groups"]):
        p = raw["groups"][g]
        xg = x[:, :, g * gs:(g + 1) * gs]
        xz = jnp.einsum("bld,de->ble", xg, p["in_w"], precision=hi)
        xi, z = xz[..., :di], xz[..., di:]
        xpad = jnp.pad(xi, ((0, 0), (dc - 1, 0), (0, 0)))
        u = p["conv_b"][None, None, :]
        for k in range(dc):
            u = u + xpad[:, k:k + L, :] * p["conv_w"][k][None, None, :]
        u = _silu(u)
        xdbl = jnp.einsum("bld,de->ble", u, p["x_w"], precision=hi)
        dt = _softplus(jnp.einsum("blr,rd->bld", xdbl[..., :dr], p["dt_w"],
                                  precision=hi) + p["dt_b"])
        Bm, Cm = xdbl[..., dr:dr + ds], xdbl[..., dr + ds:]
        dA = jnp.exp(dt[..., None] * p["A"][None, None, :, :])
        dBu = (dt * u)[..., None] * Bm[..., None, :]
        h = jnp.zeros((B, di, ds), jnp.float32)
        ys = []
        for t in range(L):
            h = dA[:, t] * h + dBu[:, t]
            ys.append(jnp.sum(h * Cm[:, t, None, :], axis=-1) + p["D"] * u[:, t])
        y = jnp.stack(ys, axis=1) * _silu(z)
        outs.append(jnp.einsum("bld,de->ble", y, p["out_w"], precision=hi))
    return jnp.concatenate(outs, axis=-1)


# ----------------------------------------------------------------------------
if __name__ == "__main__":
    B, L = 16, 16                      # 2 grid steps of Bt=8 (both TCs on v7x)
    d_model, d_state, d_conv, expand, n_groups = 32, 8, 4, 2, 4

    key = jax.random.PRNGKey(0)
    kp, kx = jax.random.split(key)
    raw = init_group_params(kp, d_model=d_model, d_state=d_state,
                            d_conv=d_conv, expand=expand, n_groups=n_groups)
    fused = fuse_group_params(raw)
    x = jax.random.normal(kx, (B, L, d_model), jnp.float32)

    fwd = jax.jit(group_mamba_forward)
    out = jax.block_until_ready(fwd(fused, x))
    assert out.shape == (B, L, d_model), out.shape
    assert bool(jnp.all(jnp.isfinite(out)))

    ref = group_mamba_reference(raw, x)
    err = float(jnp.max(jnp.abs(out - ref)))
    assert err < 2e-2, f"max abs err vs reference: {err}"

    print("KERNEL_OK")
</pallas_src>

<mosaic_0001>
module attributes {stable_mosaic.version = 11 : i64} {
  func.func @_group_mamba_kernel(%arg0: i32, %arg1: memref<16x8x32xf32, #tpu.memory_space<vmem>>, %arg2: memref<32x128xf32, #tpu.memory_space<vmem>>, %arg3: memref<4x64xf32, #tpu.memory_space<vmem>>, %arg4: memref<1x64xf32, #tpu.memory_space<vmem>>, %arg5: memref<64x1088xf32, #tpu.memory_space<vmem>>, %arg6: memref<1x1088xf32, #tpu.memory_space<vmem>>, %arg7: memref<1x512xf32, #tpu.memory_space<vmem>>, %arg8: memref<1x64xf32, #tpu.memory_space<vmem>>, %arg9: memref<512x32xf32, #tpu.memory_space<vmem>>, %arg10: memref<64x32xf32, #tpu.memory_space<vmem>>, %arg11: memref<16x8x32xf32, #tpu.memory_space<vmem>>, %arg12: memref<152x64xf32, #tpu.memory_space<vmem>>, %arg13: memref<128x1088xf32, #tpu.memory_space<vmem>>, %arg14: memref<128x512xf32, #tpu.memory_space<vmem>>, %arg15: memref<128x512xf32, #tpu.memory_space<vmem>>, %arg16: memref<128x512xf32, #tpu.memory_space<vmem>>) attributes {dimension_semantics = [#tpu.dimension_semantics<parallel>], iteration_bounds = array<i64: 2>, scalar_prefetch = 0 : i64, scratch_operands = 5 : i64, tpu.core_type = #tpu.core_type<tc>, window_params = [{transform_indices = @transform_0, window_bounds = array<i64: 16, 8, 32>}, {pipeline_mode = #tpu.pipeline_mode<synchronous>, transform_indices = @transform_1, window_bounds = array<i64: 32, 128>}, {pipeline_mode = #tpu.pipeline_mode<synchronous>, transform_indices = @transform_2, window_bounds = array<i64: 4, 64>}, {pipeline_mode = #tpu.pipeline_mode<synchronous>, transform_indices = @transform_3, window_bounds = array<i64: 1, 64>}, {pipeline_mode = #tpu.pipeline_mode<synchronous>, transform_indices = @transform_4, window_bounds = array<i64: 64, 1088>}, {pipeline_mode = #tpu.pipeline_mode<synchronous>, transform_indices = @transform_5, window_bounds = array<i64: 1, 1088>}, {pipeline_mode = #tpu.pipeline_mode<synchronous>, transform_indices = @transform_6, window_bounds = array<i64: 1, 512>}, {pipeline_mode = #tpu.pipeline_mode<synchronous>, transform_indices = @transform_7, window_bounds = array<i64: 1, 64>}, {pipeline_mode = #tpu.pipeline_mode<synchronous>, transform_indices = @transform_8, window_bounds = array<i64: 512, 32>}, {pipeline_mode = #tpu.pipeline_mode<synchronous>, transform_indices = @transform_9, window_bounds = array<i64: 64, 32>}, {transform_indices = @transform_10, window_bounds = array<i64: 16, 8, 32>}]} {
    %c0 = arith.constant 0 : index
    %c0_0 = arith.constant 0 : index
    %c0_1 = arith.constant 0 : index
    %0 = vector.load %arg1[%c0, %c0_0, %c0_1] : memref<16x8x32xf32, #tpu.memory_space<vmem>>, vector<16x8x32xf32>
    %1 = vector.shape_cast %0 : vector<16x8x32xf32> to vector<128x32xf32>
    %c0_2 = arith.constant 0 : index
    %c0_3 = arith.constant 0 : index
    %2 = vector.load %arg2[%c0_2, %c0_3] : memref<32x128xf32, #tpu.memory_space<vmem>>, vector<32x128xf32>
    %cst = arith.constant dense<0.000000e+00> : vector<128x128xf32>
    %3 = tpu.matmul %1, %2, %cst {dimension_numbers = #tpu.dot_dimension_numbers<[1], [0], [0], [1], [0, 0, 1, 1], [], []>} : vector<128x32xf32>, vector<32x128xf32>, vector<128x128xf32> -> vector<128x128xf32>
    %4 = vector.extract_strided_slice %3 {offsets = [0, 0], sizes = [128, 64], strides = [1, 1]} : vector<128x128xf32> to vector<128x64xf32>
    %5 = vector.extract_strided_slice %3 {offsets = [0, 64], sizes = [128, 64], strides = [1, 1]} : vector<128x128xf32> to vector<128x64xf32>
    %cst_4 = arith.constant 0.000000e+00 : f32
    %6 = vector.broadcast %cst_4 : f32 to vector<24x64xf32>
    %c0_5 = arith.constant 0 : index
    %c0_6 = arith.constant 0 : index
    %7 = vector.load %arg12[%c0_5, %c0_6] : memref<152x64xf32, #tpu.memory_space<vmem>>, vector<24x64xf32>
    tpu.vector_store %arg12[%c0_5, %c0_6], %6 {strides = array<i32>} : memref<152x64xf32, #tpu.memory_space<vmem>>, vector<24x64xf32>,
    %c24 = arith.constant 24 : index
    %c0_7 = arith.constant 0 : index
    %8 = vector.load %arg12[%c24, %c0_7] : memref<152x64xf32, #tpu.memory_space<vmem>>, vector<128x64xf32>
    tpu.vector_store %arg12[%c24, %c0_7], %4 {strides = array<i32>} : memref<152x64xf32, #tpu.memory_space<vmem>>, vector<128x64xf32>,
    %c0_8 = arith.constant 0 : index
    %c0_9 = arith.constant 0 : index
    %9 = vector.load %arg3[%c0_8, %c0_9] : memref<4x64xf32, #tpu.memory_space<vmem>>, vector<4x64xf32>
    %c0_10 = arith.constant 0 : index
    %c0_11 = arith.constant 0 : index
    %10 = vector.load %arg4[%c0_10, %c0_11] : memref<1x64xf32, #tpu.memory_space<vmem>>, vector<1x64xf32>
    %c0_12 = arith.constant 0 : index
    %c0_13 = arith.constant 0 : index
    %11 = vector.load %arg12[%c0_12, %c0_13] : memref<152x64xf32, #tpu.memory_space<vmem>>, vector<128x64xf32>
    %12 = vector.extract_strided_slice %9 {offsets = [0, 0], sizes = [1, 64], strides = [1, 1]} : vector<4x64xf32> to vector<1x64xf32>
    %13 = vector.broadcast %12 : vector<1x64xf32> to vector<128x64xf32>
    %14 = arith.mulf %11, %13 : vector<128x64xf32>
    %15 = vector.broadcast %10 : vector<1x64xf32> to vector<128x64xf32>
    %16 = arith.addf %15, %14 : vector<128x64xf32>
    %c8 = arith.constant 8 : index
    %c0_14 = arith.constant 0 : index
    %17 = vector.load %arg12[%c8, %c0_14] : memref<152x64xf32, #tpu.memory_space<vmem>>, vector<128x64xf32>
    %18 = vector.extract_strided_slice %9 {offsets = [1, 0], sizes = [1, 64], strides = [1, 1]} : vector<4x64xf32> to vector<1x64xf32>
    %19 = vector.broadcast %18 : vector<1x64xf32> to vector<128x64xf32>
    %20 = arith.mulf %17, %19 : vector<128x64xf32>
    %21 = arith.addf %16, %20 : vector<128x64xf32>
    %c16 = arith.constant 16 : index
    %c0_15 = arith.constant 0 : index
    %22 = vector.load %arg12[%c16, %c0_15] : memref<152x64xf32, #tpu.memory_space<vmem>>, vector<128x64xf32>
    %23 = vector.extract_strided_slice %9 {offsets = [2, 0], sizes = [1, 64], strides = [1, 1]} : vector<4x64xf32> to vector<1x64xf32>
    %24 = vector.broadcast %23 : vector<1x64xf32> to vector<128x64xf32>
    %25 = arith.mulf %22, %24 : vector<128x64xf32>
    %26 = arith.addf %21, %25 : vector<128x64xf32>
    %c24_16 = arith.constant 24 : index
    %c0_17 = arith.constant 0 : index
    %27 = vector.load %arg12[%c24_16, %c0_17] : memref<152x64xf32, #tpu.memory_space<vmem>>, vector<128x64xf32>
    %28 = vector.extract_strided_slice %9 {offsets = [3, 0], sizes = [1, 64], strides = [1, 1]} : vector<4x64xf32> to vector<1x64xf32>
    %29 = vector.broadcast %28 : vector<1x64xf32> to vector<128x64xf32>
    %30 = arith.mulf %27, %29 : vector<128x64xf32>
    %31 = arith.addf %26, %30 : vector<128x64xf32>
    %cst_18 = arith.constant 0.000000e+00 : f32
    %32 = vector.broadcast %cst_18 : f32 to vector<128x64xf32>
    %33 = arith.subf %32, %31 : vector<128x64xf32>
    %34 = math.exp %33 : vector<128x64xf32>
    %cst_19 = arith.constant 1.000000e+00 : f32
    %35 = vector.broadcast %cst_19 : f32 to vector<128x64xf32>
    %36 = arith.addf %35, %34 : vector<128x64xf32>
    %cst_20 = arith.constant 1.000000e+00 : f32
    %37 = vector.broadcast %cst_20 : f32 to vector<128x64xf32>
    %38 = arith.divf %37, %36 : vector<128x64xf32>
    %39 = arith.mulf %31, %38 : vector<128x64xf32>
    %c0_21 = arith.constant 0 : index
    %c0_22 = arith.constant 0 : index
    %40 = vector.load %arg5[%c0_21, %c0_22] : memref<64x1088xf32, #tpu.memory_space<vmem>>, vector<64x1088xf32>
    %cst_23 = arith.constant dense<0.000000e+00> : vector<128x1088xf32>
    %41 = tpu.matmul %39, %40, %cst_23 {dimension_numbers = #tpu.dot_dimension_numbers<[1], [0], [0], [1], [0, 0, 1, 1], [], []>} : vector<128x64xf32>, vector<64x1088xf32>, vector<128x1088xf32> -> vector<128x1088xf32>
    %c0_24 = arith.constant 0 : index
    %c0_25 = arith.constant 0 : index
    %42 = vector.load %arg6[%c0_24, %c0_25] : memref<1x1088xf32, #tpu.memory_space<vmem>>, vector<1x1088xf32>
    %43 = vector.broadcast %42 : vector<1x1088xf32> to vector<128x1088xf32>
    %44 = arith.addf %41, %43 : vector<128x1088xf32>
    %c0_26 = arith.constant 0 : index
    %c0_27 = arith.constant 0 : index
    %45 = vector.load %arg13[%c0_26, %c0_27] : memref<128x1088xf32, #tpu.memory_space<vmem>>, vector<128x1088xf32>
    tpu.vector_store %arg13[%c0_26, %c0_27], %44 {strides = array<i32>} : memref<128x1088xf32, #tpu.memory_space<vmem>>, vector<128x1088xf32>,
    %c0_28 = arith.constant 0 : index
    %c1024 = arith.constant 1024 : index
    %46 = vector.load %arg13[%c0_28, %c1024] : memref<128x1088xf32, #tpu.memory_space<vmem>>, vector<128x64xf32>
    %cst_29 = arith.constant 0.000000e+00 : f32
    %47 = vector.broadcast %cst_29 : f32 to vector<128x64xf32>
    %48 = arith.maximumf %46, %47 : vector<128x64xf32>
    %49 = math.absf %46 : vector<128x64xf32>
    %cst_30 = arith.constant 0.000000e+00 : f32
    %50 = vector.broadcast %cst_30 : f32 to vector<128x64xf32>
    %51 = arith.subf %50, %49 : vector<128x64xf32>
    %52 = math.exp %51 : vector<128x64xf32>
    %cst_31 = arith.constant 1.000000e+00 : f32
    %53 = vector.broadcast %cst_31 : f32 to vector<128x64xf32>
    %54 = arith.addf %53, %52 : vector<128x64xf32>
    %55 = math.log %54 : vector<128x64xf32>
    %56 = arith.addf %48, %55 : vector<128x64xf32>
    %57 = tpu.concatenate %56, %56, %56, %56, %56, %56, %56, %56 in 1 : vector<128x64xf32>, vector<128x64xf32>, vector<128x64xf32>, vector<128x64xf32>, vector<128x64xf32>, vector<128x64xf32>, vector<128x64xf32>, vector<128x64xf32> -> vector<128x512xf32>
    %c0_32 = arith.constant 0 : index
    %c0_33 = arith.constant 0 : index
    %58 = vector.load %arg7[%c0_32, %c0_33] : memref<1x512xf32, #tpu.memory_space<vmem>>, vector<1x512xf32>
    %59 = vector.broadcast %58 : vector<1x512xf32> to vector<128x512xf32>
    %60 = arith.mulf %57, %59 : vector<128x512xf32>
    %61 = math.exp %60 : vector<128x512xf32>
    %c0_34 = arith.constant 0 : index
    %c0_35 = arith.constant 0 : index
    %62 = vector.load %arg14[%c0_34, %c0_35] : memref<128x512xf32, #tpu.memory_space<vmem>>, vector<128x512xf32>
    tpu.vector_store %arg14[%c0_34, %c0_35], %61 {strides = array<i32>} : memref<128x512xf32, #tpu.memory_space<vmem>>, vector<128x512xf32>,
    %63 = arith.mulf %56, %39 : vector<128x64xf32>
    %64 = tpu.concatenate %63, %63, %63, %63, %63, %63, %63, %63 in 1 : vector<128x64xf32>, vector<128x64xf32>, vector<128x64xf32>, vector<128x64xf32>, vector<128x64xf32>, vector<128x64xf32>, vector<128x64xf32>, vector<128x64xf32> -> vector<128x512xf32>
    %c0_36 = arith.constant 0 : index
    %c0_37 = arith.constant 0 : index
    %65 = vector.load %arg13[%c0_36, %c0_37] : memref<128x1088xf32, #tpu.memory_space<vmem>>, vector<128x512xf32>
    %66 = arith.mulf %64, %65 : vector<128x512xf32>
    %c0_38 = arith.constant 0 : index
    %c0_39 = arith.constant 0 : index
    %67 = vector.load %arg15[%c0_38, %c0_39] : memref<128x512xf32, #tpu.memory_space<vmem>>, vector<128x512xf32>
    tpu.vector_store %arg15[%c0_38, %c0_39], %66 {strides = array<i32>} : memref<128x512xf32, #tpu.memory_space<vmem>>, vector<128x512xf32>,
    %cst_40 = arith.constant 0.000000e+00 : f32
    %68 = vector.broadcast %cst_40 : f32 to vector<128x64xf32>
    %69 = arith.subf %68, %5 : vector<128x64xf32>
    %70 = math.exp %69 : vector<128x64xf32>
    %cst_41 = arith.constant 1.000000e+00 : f32
    %71 = vector.broadcast %cst_41 : f32 to vector<128x64xf32>
    %72 = arith.addf %71, %70 : vector<128x64xf32>
    %cst_42 = arith.constant 1.000000e+00 : f32
    %73 = vector.broadcast %cst_42 : f32 to vector<128x64xf32>
    %74 = arith.divf %73, %72 : vector<128x64xf32>
    %75 = arith.mulf %5, %74 : vector<128x64xf32>
    %c0_43 = arith.constant 0 : index
    %c0_44 = arith.constant 0 : index
    %76 = vector.load %arg8[%c0_43, %c0_44] : memref<1x64xf32, #tpu.memory_space<vmem>>, vector<1x64xf32>
    %77 = vector.broadcast %76 : vector<1x64xf32> to vector<128x64xf32>
    %78 = arith.mulf %77, %39 : vector<128x64xf32>
    %79 = arith.mulf %78, %75 : vector<128x64xf32>
    %c0_45 = arith.constant 0 : index
    %c0_46 = arith.constant 0 : index
    %80 = vector.load %arg10[%c0_45, %c0_46] : memref<64x32xf32, #tpu.memory_space<vmem>>, vector<64x32xf32>
    %cst_47 = arith.constant dense<0.000000e+00> : vector<128x32xf32>
    %81 = tpu.matmul %79, %80, %cst_47 {dimension_numbers = #tpu.dot_dimension_numbers<[1], [0], [0], [1], [0, 0, 1, 1], [], []>} : vector<128x64xf32>, vector<64x32xf32>, vector<128x32xf32> -> vector<128x32xf32>
    %cst_48 = arith.constant 0.000000e+00 : f32
    %82 = vector.broadcast %cst_48 : f32 to vector<8x512xf32>
    %c0_i32 = arith.constant 0 : i32
    %c8_i32 = arith.constant 8 : i32
    %83 = arith.muli %c0_i32, %c8_i32 : i32
    %84 = tpu.assume_multiple %83, 8 : i32
    %85 = arith.index_cast %84 : i32 to index
    %c0_49 = arith.constant 0 : index
    %86 = vector.load %arg14[%85, %c0_49] : memref<128x512xf32, #tpu.memory_space<vmem>>, vector<8x512xf32>
    %87 = arith.mulf %86, %82 : vector<8x512xf32>
    %88 = arith.index_cast %84 : i32 to index
    %c0_50 = arith.constant 0 : index
    %89 = vector.load %arg15[%88, %c0_50] : memref<128x512xf32, #tpu.memory_space<vmem>>, vector<8x512xf32>
    %90 = arith.addf %87, %89 : vector<8x512xf32>
    %91 = arith.index_cast %84 : i32 to index
    %c0_51 = arith.constant 0 : index
    %92 = vector.load %arg16[%91, %c0_51] : memref<128x512xf32, #tpu.memory_space<vmem>>, vector<8x512xf32>
    tpu.vector_store %arg16[%91, %c0_51], %90 {strides = array<i32>} : memref<128x512xf32, #tpu.memory_space<vmem>>, vector<8x512xf32>,
    %c1_i32 = arith.constant 1 : i32
    %c8_i32_52 = arith.constant 8 : i32
    %93 = arith.muli %c1_i32, %c8_i32_52 : i32
    %94 = tpu.assume_multiple %93, 8 : i32
    %95 = arith.index_cast %94 : i32 to index
    %c0_53 = arith.constant 0 : index
    %96 = vector.load %arg14[%95, %c0_53] : memref<128x512xf32, #tpu.memory_space<vmem>>, vector<8x512xf32>
    %97 = arith.mulf %96, %90 : vector<8x512xf32>
    %98 = arith.index_cast %94 : i32 to index
    %c0_54 = arith.constant 0 : index
    %99 = vector.load %arg15[%98, %c0_54] : memref<128x512xf32, #tpu.memory_space<vmem>>, vector<8x512xf32>
    %100 = arith.addf %97, %99 : vector<8x512xf32>
    %101 = arith.index_cast %94 : i32 to index
    %c0_55 = arith.constant 0 : index
    %102 = vector.load %arg16[%101, %c0_55] : memref<128x512xf32, #tpu.memory_space<vmem>>, vector<8x512xf32>
    tpu.vector_store %arg16[%101, %c0_55], %100 {strides = array<i32>} : memref<128x512xf32, #tpu.memory_space<vmem>>, vector<8x512xf32>,
    %c2_i32 = arith.constant 2 : i32
    %c8_i32_56 = arith.constant 8 : i32
    %103 = arith.muli %c2_i32, %c8_i32_56 : i32
    %104 = tpu.assume_multiple %103, 8 : i32
    %105 = arith.index_cast %104 : i32 to index
    %c0_57 = arith.constant 0 : index
    %106 = vector.load %arg14[%105, %c0_57] : memref<128x512xf32, #tpu.memory_space<vmem>>, vector<8x512xf32>
    %107 = arith.mulf %106, %100 : vector<8x512xf32>
    %108 = arith.index_cast %104 : i32 to index
    %c0_58 = arith.constant 0 : index
    %109 = vector.load %arg15[%108, %c0_58] : memref<128x512xf32, #tpu.memory_space<vmem>>, vector<8x512xf32>
    %110 = arith.addf %107, %109 : vector<8x512xf32>
    %111 = arith.index_cast %104 : i32 to index
    %c0_59 = arith.constant 0 : index
    %112 = vector.load %arg16[%111, %c0_59] : memref<128x512xf32, #tpu.memory_space<vmem>>, vector<8x512xf32>
    tpu.vector_store %arg16[%111, %c0_59], %110 {strides = array<i32>} : memref<128x512xf32, #tpu.memory_space<vmem>>, vector<8x512xf32>,
    %c3_i32 = arith.constant 3 : i32
    %c8_i32_60 = arith.constant 8 : i32
    %113 = arith.muli %c3_i32, %c8_i32_60 : i32
    %114 = tpu.assume_multiple %113, 8 : i32
    %115 = arith.index_cast %114 : i32 to index
    %c0_61 = arith.constant 0 : index
    %116 = vector.load %arg14[%115, %c0_61] : memref<128x512xf32, #tpu.memory_space<vmem>>, vector<8x512xf32>
    %117 = arith.mulf %116, %110 : vector<8x512xf32>
    %118 = arith.index_cast %114 : i32 to index
    %c0_62 = arith.constant 0 : index
    %119 = vector.load %arg15[%118, %c0_62] : memref<128x512xf32, #tpu.memory_space<vmem>>, vector<8x512xf32>
    %120 = arith.addf %117, %119 : vector<8x512xf32>
    %121 = arith.index_cast %114 : i32 to index
    %c0_63 = arith.constant 0 : index
    %122 = vector.load %arg16[%121, %c0_63] : memref<128x512xf32, #tpu.memory_space<vmem>>, vector<8x512xf32>
    tpu.vector_store %arg16[%121, %c0_63], %120 {strides = array<i32>} : memref<128x512xf32, #tpu.memory_space<vmem>>, vector<8x512xf32>,
    %c4_i32 = arith.constant 4 : i32
    %c8_i32_64 = arith.constant 8 : i32
    %123 = arith.muli %c4_i32, %c8_i32_64 : i32
    %124 = tpu.assume_multiple %123, 8 : i32
    %125 = arith.index_cast %124 : i32 to index
    %c0_65 = arith.constant 0 : index
    %126 = vector.load %arg14[%125, %c0_65] : memref<128x512xf32, #tpu.memory_space<vmem>>, vector<8x512xf32>
    %127 = arith.mulf %126, %120 : vector<8x512xf32>
    %128 = arith.index_cast %124 : i32 to index
    %c0_66 = arith.constant 0 : index
    %129 = vector.load %arg15[%128, %c0_66] : memref<128x512xf32, #tpu.memory_space<vmem>>, vector<8x512xf32>
    %130 = arith.addf %127, %129 : vector<8x512xf32>
    %131 = arith.index_cast %124 : i32 to index
    %c0_67 = arith.constant 0 : index
    %132 = vector.load %arg16[%131, %c0_67] : memref<128x512xf32, #tpu.memory_space<vmem>>, vector<8x512xf32>
    tpu.vector_store %arg16[%131, %c0_67], %130 {strides = array<i32>} : memref<128x512xf32, #tpu.memory_space<vmem>>, vector<8x512xf32>,
    %c5_i32 = arith.constant 5 : i32
    %c8_i32_68 = arith.constant 8 : i32
    %133 = arith.muli %c5_i32, %c8_i32_68 : i32
    %134 = tpu.assume_multiple %133, 8 : i32
    %135 = arith.index_cast %134 : i32 to index
    %c0_69 = arith.constant 0 : index
    %136 = vector.load %arg14[%135, %c0_69] : memref<128x512xf32, #tpu.memory_space<vmem>>, vector<8x512xf32>
    %137 = arith.mulf %136, %130 : vector<8x512xf32>
    %138 = arith.index_cast %134 : i32 to index
    %c0_70 = arith.constant 0 : index
    %139 = vector.load %arg15[%138, %c0_70] : memref<128x512xf32, #tpu.memory_space<vmem>>, vector<8x512xf32>
    %140 = arith.addf %137, %139 : vector<8x512xf32>
    %141 = arith.index_cast %134 : i32 to index
    %c0_71 = arith.constant 0 : index
    %142 = vector.load %arg16[%141, %c0_71] : memref<128x512xf32, #tpu.memory_space<vmem>>, vector<8x512xf32>
    tpu.vector_store %arg16[%141, %c0_71], %140 {strides = array<i32>} : memref<128x512xf32, #tpu.memory_space<vmem>>, vector<8x512xf32>,
    %c6_i32 = arith.constant 6 : i32
    %c8_i32_72 = arith.constant 8 : i32
    %143 = arith.muli %c6_i32, %c8_i32_72 : i32
    %144 = tpu.assume_multiple %143, 8 : i32
    %145 = arith.index_cast %144 : i32 to index
    %c0_73 = arith.constant 0 : index
    %146 = vector.load %arg14[%145, %c0_73] : memref<128x512xf32, #tpu.memory_space<vmem>>, vector<8x512xf32>
    %147 = arith.mulf %146, %140 : vector<8x512xf32>
    %148 = arith.index_cast %144 : i32 to index
    %c0_74 = arith.constant 0 : index
    %149 = vector.load %arg15[%148, %c0_74] : memref<128x512xf32, #tpu.memory_space<vmem>>, vector<8x512xf32>
    %150 = arith.addf %147, %149 : vector<8x512xf32>
    %151 = arith.index_cast %144 : i32 to index
    %c0_75 = arith.constant 0 : index
    %152 = vector.load %arg16[%151, %c0_75] : memref<128x512xf32, #tpu.memory_space<vmem>>, vector<8x512xf32>
    tpu.vector_store %arg16[%151, %c0_75], %150 {strides = array<i32>} : memref<128x512xf32, #tpu.memory_space<vmem>>, vector<8x512xf32>,
    %c7_i32 = arith.constant 7 : i32
    %c8_i32_76 = arith.constant 8 : i32
    %153 = arith.muli %c7_i32, %c8_i32_76 : i32
    %154 = tpu.assume_multiple %153, 8 : i32
    %155 = arith.index_cast %154 : i32 to index
    %c0_77 = arith.constant 0 : index
    %156 = vector.load %arg14[%155, %c0_77] : memref<128x512xf32, #tpu.memory_space<vmem>>, vector<8x512xf32>
    %157 = arith.mulf %156, %150 : vector<8x512xf32>
    %158 = arith.index_cast %154 : i32 to index
    %c0_78 = arith.constant 0 : index
    %159 = vector.load %arg15[%158, %c0_78] : memref<128x512xf32, #tpu.memory_space<vmem>>, vector<8x512xf32>
    %160 = arith.addf %157, %159 : vector<8x512xf32>
    %161 = arith.index_cast %154 : i32 to index
    %c0_79 = arith.constant 0 : index
    %162 = vector.load %arg16[%161, %c0_79] : memref<128x512xf32, #tpu.memory_space<vmem>>, vector<8x512xf32>
    tpu.vector_store %arg16[%161, %c0_79], %160 {strides = array<i32>} : memref<128x512xf32, #tpu.memory_space<vmem>>, vector<8x512xf32>,
    %c8_i32_80 = arith.constant 8 : i32
    %c8_i32_81 = arith.constant 8 : i32
    %163 = arith.muli %c8_i32_80, %c8_i32_81 : i32
    %164 = tpu.assume_multiple %163, 8 : i32
    %165 = arith.index_cast %164 : i32 to index
    %c0_82 = arith.constant 0 : index
    %166 = vector.load %arg14[%165, %c0_82] : memref<128x512xf32, #tpu.memory_space<vmem>>, vector<8x512xf32>
    %167 = arith.mulf %166, %160 : vector<8x512xf32>
    %168 = arith.index_cast %164 : i32 to index
    %c0_83 = arith.constant 0 : index
    %169 = vector.load %arg15[%168, %c0_83] : memref<128x512xf32, #tpu.memory_space<vmem>>, vector<8x512xf32>
    %170 = arith.addf %167, %169 : vector<8x512xf32>
    %171 = arith.index_cast %164 : i32 to index
    %c0_84 = arith.constant 0 : index
    %172 = vector.load %arg16[%171, %c0_84] : memref<128x512xf32, #tpu.memory_space<vmem>>, vector<8x512xf32>
    tpu.vector_store %arg16[%171, %c0_84], %170 {strides = array<i32>} : memref<128x512xf32, #tpu.memory_space<vmem>>, vector<8x512xf32>,
    %c9_i32 = arith.constant 9 : i32
    %c8_i32_85 = arith.constant 8 : i32
    %173 = arith.muli %c9_i32, %c8_i32_85 : i32
    %174 = tpu.assume_multiple %173, 8 : i32
    %175 = arith.index_cast %174 : i32 to index
    %c0_86 = arith.constant 0 : index
    %176 = vector.load %arg14[%175, %c0_86] : memref<128x512xf32, #tpu.memory_space<vmem>>, vector<8x512xf32>
    %177 = arith.mulf %176, %170 : vector<8x512xf32>
    %178 = arith.index_cast %174 : i32 to index
    %c0_87 = arith.constant 0 : index
    %179 = vector.load %arg15[%178, %c0_87] : memref<128x512xf32, #tpu.memory_space<vmem>>, vector<8x512xf32>
    %180 = arith.addf %177, %179 : vector<8x512xf32>
    %181 = arith.index_cast %174 : i32 to index
    %c0_88 = arith.constant 0 : index
    %182 = vector.load %arg16[%181, %c0_88] : memref<128x512xf32, #tpu.memory_space<vmem>>, vector<8x512xf32>
    tpu.vector_store %arg16[%181, %c0_88], %180 {strides = array<i32>} : memref<128x512xf32, #tpu.memory_space<vmem>>, vector<8x512xf32>,
    %c10_i32 = arith.constant 10 : i32
    %c8_i32_89 = arith.constant 8 : i32
    %183 = arith.muli %c10_i32, %c8_i32_89 : i32
    %184 = tpu.assume_multiple %183, 8 : i32
    %185 = arith.index_cast %184 : i32 to index
    %c0_90 = arith.constant 0 : index
    %186 = vector.load %arg14[%185, %c0_90] : memref<128x512xf32, #tpu.memory_space<vmem>>, vector<8x512xf32>
    %187 = arith.mulf %186, %180 : vector<8x512xf32>
    %188 = arith.index_cast %184 : i32 to index
    %c0_91 = arith.constant 0 : index
    %189 = vector.load %arg15[%188, %c0_91] : memref<128x512xf32, #tpu.memory_space<vmem>>, vector<8x512xf32>
    %190 = arith.addf %187, %189 : vector<8x512xf32>
    %191 = arith.index_cast %184 : i32 to index
    %c0_92 = arith.constant 0 : index
    %192 = vector.load %arg16[%191, %c0_92] : memref<128x512xf32, #tpu.memory_space<vmem>>, vector<8x512xf32>
    tpu.vector_store %arg16[%191, %c0_92], %190 {strides = array<i32>} : memref<128x512xf32, #tpu.memory_space<vmem>>, vector<8x512xf32>,
    %c11_i32 = arith.constant 11 : i32
    %c8_i32_93 = arith.constant 8 : i32
    %193 = arith.muli %c11_i32, %c8_i32_93 : i32
    %194 = tpu.assume_multiple %193, 8 : i32
    %195 = arith.index_cast %194 : i32 to index
    %c0_94 = arith.constant 0 : index
    %196 = vector.load %arg14[%195, %c0_94] : memref<128x512xf32, #tpu.memory_space<vmem>>, vector<8x512xf32>
    %197 = arith.mulf %196, %190 : vector<8x512xf32>
    %198 = arith.index_cast %194 : i32 to index
    %c0_95 = arith.constant 0 : index
    %199 = vector.load %arg15[%198, %c0_95] : memref<128x512xf32, #tpu.memory_space<vmem>>, vector<8x512xf32>
    %200 = arith.addf %197, %199 : vector<8x512xf32>
    %201 = arith.index_cast %194 : i32 to index
    %c0_96 = arith.constant 0 : index
    %202 = vector.load %arg16[%201, %c0_96] : memref<128x512xf32, #tpu.memory_space<vmem>>, vector<8x512xf32>
    tpu.vector_store %arg16[%201, %c0_96], %200 {strides = array<i32>} : memref<128x512xf32, #tpu.memory_space<vmem>>, vector<8x512xf32>,
    %c12_i32 = arith.constant 12 : i32
    %c8_i32_97 = arith.constant 8 : i32
    %203 = arith.muli %c12_i32, %c8_i32_97 : i32
    %204 = tpu.assume_multiple %203, 8 : i32
    %205 = arith.index_cast %204 : i32 to index
    %c0_98 = arith.constant 0 : index
    %206 = vector.load %arg14[%205, %c0_98] : memref<128x512xf32, #tpu.memory_space<vmem>>, vector<8x512xf32>
    %207 = arith.mulf %206, %200 : vector<8x512xf32>
    %208 = arith.index_cast %204 : i32 to index
    %c0_99 = arith.constant 0 : index
    %209 = vector.load %arg15[%208, %c0_99] : memref<128x512xf32, #tpu.memory_space<vmem>>, vector<8x512xf32>
    %210 = arith.addf %207, %209 : vector<8x512xf32>
    %211 = arith.index_cast %204 : i32 to index
    %c0_100 = arith.constant 0 : index
    %212 = vector.load %arg16[%211, %c0_100] : memref<128x512xf32, #tpu.memory_space<vmem>>, vector<8x512xf32>
    tpu.vector_store %arg16[%211, %c0_100], %210 {strides = array<i32>} : memref<128x512xf32, #tpu.memory_space<vmem>>, vector<8x512xf32>,
    %c13_i32 = arith.constant 13 : i32
    %c8_i32_101 = arith.constant 8 : i32
    %213 = arith.muli %c13_i32, %c8_i32_101 : i32
    %214 = tpu.assume_multiple %213, 8 : i32
    %215 = arith.index_cast %214 : i32 to index
    %c0_102 = arith.constant 0 : index
    %216 = vector.load %arg14[%215, %c0_102] : memref<128x512xf32, #tpu.memory_space<vmem>>, vector<8x512xf32>
    %217 = arith.mulf %216, %210 : vector<8x512xf32>
    %218 = arith.index_cast %214 : i32 to index
    %c0_103 = arith.constant 0 : index
    %219 = vector.load %arg15[%218, %c0_103] : memref<128x512xf32, #tpu.memory_space<vmem>>, vector<8x512xf32>
    %220 = arith.addf %217, %219 : vector<8x512xf32>
    %221 = arith.index_cast %214 : i32 to index
    %c0_104 = arith.constant 0 : index
    %222 = vector.load %arg16[%221, %c0_104] : memref<128x512xf32, #tpu.memory_space<vmem>>, vector<8x512xf32>
    tpu.vector_store %arg16[%221, %c0_104], %220 {strides = array<i32>} : memref<128x512xf32, #tpu.memory_space<vmem>>, vector<8x512xf32>,
    %c14_i32 = arith.constant 14 : i32
    %c8_i32_105 = arith.constant 8 : i32
    %223 = arith.muli %c14_i32, %c8_i32_105 : i32
    %224 = tpu.assume_multiple %223, 8 : i32
    %225 = arith.index_cast %224 : i32 to index
    %c0_106 = arith.constant 0 : index
    %226 = vector.load %arg14[%225, %c0_106] : memref<128x512xf32, #tpu.memory_space<vmem>>, vector<8x512xf32>
    %227 = arith.mulf %226, %220 : vector<8x512xf32>
    %228 = arith.index_cast %224 : i32 to index
    %c0_107 = arith.constant 0 : index
    %229 = vector.load %arg15[%228, %c0_107] : memref<128x512xf32, #tpu.memory_space<vmem>>, vector<8x512xf32>
    %230 = arith.addf %227, %229 : vector<8x512xf32>
    %231 = arith.index_cast %224 : i32 to index
    %c0_108 = arith.constant 0 : index
    %232 = vector.load %arg16[%231, %c0_108] : memref<128x512xf32, #tpu.memory_space<vmem>>, vector<8x512xf32>
    tpu.vector_store %arg16[%231, %c0_108], %230 {strides = array<i32>} : memref<128x512xf32, #tpu.memory_space<vmem>>, vector<8x512xf32>,
    %c15_i32 = arith.constant 15 : i32
    %c8_i32_109 = arith.constant 8 : i32
    %233 = arith.muli %c15_i32, %c8_i32_109 : i32
    %234 = tpu.assume_multiple %233, 8 : i32
    %235 = arith.index_cast %234 : i32 to index
    %c0_110 = arith.constant 0 : index
    %236 = vector.load %arg14[%235, %c0_110] : memref<128x512xf32, #tpu.memory_space<vmem>>, vector<8x512xf32>
    %237 = arith.mulf %236, %230 : vector<8x512xf32>
    %238 = arith.index_cast %234 : i32 to index
    %c0_111 = arith.constant 0 : index
    %239 = vector.load %arg15[%238, %c0_111] : memref<128x512xf32, #tpu.memory_space<vmem>>, vector<8x512xf32>
    %240 = arith.addf %237, %239 : vector<8x512xf32>
    %241 = arith.index_cast %234 : i32 to index
    %c0_112 = arith.constant 0 : index
    %242 = vector.load %arg16[%241, %c0_112] : memref<128x512xf32, #tpu.memory_space<vmem>>, vector<8x512xf32>
    tpu.vector_store %arg16[%241, %c0_112], %240 {strides = array<i32>} : memref<128x512xf32, #tpu.memory_space<vmem>>, vector<8x512xf32>,
    %c16_i32 = arith.constant 16 : i32
    %c0_113 = arith.constant 0 : index
    %c0_114 = arith.constant 0 : index
    %243 = vector.load %arg16[%c0_113, %c0_114] : memref<128x512xf32, #tpu.memory_space<vmem>>, vector<128x512xf32>
    %c0_115 = arith.constant 0 : index
    %c512 = arith.constant 512 : index
    %244 = vector.load %arg13[%c0_115, %c512] : memref<128x1088xf32, #tpu.memory_space<vmem>>, vector<128x512xf32>
    %245 = arith.mulf %243, %244 : vector<128x512xf32>
    %246 = tpu.concatenate %75, %75, %75, %75, %75, %75, %75, %75 in 1 : vector<128x64xf32>, vector<128x64xf32>, vector<128x64xf32>, vector<128x64xf32>, vector<128x64xf32>, vector<128x64xf32>, vector<128x64xf32>, vector<128x64xf32> -> vector<128x512xf32>
    %247 = arith.mulf %245, %246 : vector<128x512xf32>
    %c0_116 = arith.constant 0 : index
    %c0_117 = arith.constant 0 : index
    %248 = vector.load %arg9[%c0_116, %c0_117] : memref<512x32xf32, #tpu.memory_space<vmem>>, vector<512x32xf32>
    %cst_118 = arith.constant dense<0.000000e+00> : vector<128x32xf32>
    %249 = tpu.matmul %247, %248, %cst_118 {dimension_numbers = #tpu.dot_dimension_numbers<[1], [0], [0], [1], [0, 0, 1, 1], [], []>} : vector<128x512xf32>, vector<512x32xf32>, vector<128x32xf32> -> vector<128x32xf32>
    %250 = arith.addf %249, %81 : vector<128x32xf32>
    %251 = vector.shape_cast %250 : vector<128x32xf32> to vector<16x8x32xf32>
    %c0_119 = arith.constant 0 : index
    %c0_120 = arith.constant 0 : index
    %c0_121 = arith.constant 0 : index
    %252 = vector.load %arg11[%c0_119, %c0_120, %c0_121] : memref<16x8x32xf32, #tpu.memory_space<vmem>>, vector<16x8x32xf32>
    tpu.vector_store %arg11[%c0_119, %c0_120, %c0_121], %251 {strides = array<i32>} : memref<16x8x32xf32, #tpu.memory_space<vmem>>, vector<16x8x32xf32>,
    return
  }
  func.func @transform_0(%arg0: i32) -> (i32, i32, i32) {
    %c0_i32 = arith.constant 0 : i32
    %c0_i32_0 = arith.constant 0 : i32
    %c0_i32_1 = arith.constant 0 : i32
    return %c0_i32, %arg0, %c0_i32_0 : i32, i32, i32
  }
  func.func @transform_1(%arg0: i32) -> (i32, i32) {
    %c0_i32 = arith.constant 0 : i32
    %c0_i32_0 = arith.constant 0 : i32
    %c0_i32_1 = arith.constant 0 : i32
    return %c0_i32, %c0_i32_0 : i32, i32
  }
  func.func @transform_2(%arg0: i32) -> (i32, i32) {
    %c0_i32 = arith.constant 0 : i32
    %c0_i32_0 = arith.constant 0 : i32
    %c0_i32_1 = arith.constant 0 : i32
    return %c0_i32, %c0_i32_0 : i32, i32
  }
  func.func @transform_3(%arg0: i32) -> (i32, i32) {
    %c0_i32 = arith.constant 0 : i32
    %c0_i32_0 = arith.constant 0 : i32
    %c0_i32_1 = arith.constant 0 : i32
    return %c0_i32, %c0_i32_0 : i32, i32
  }
  func.func @transform_4(%arg0: i32) -> (i32, i32) {
    %c0_i32 = arith.constant 0 : i32
    %c0_i32_0 = arith.constant 0 : i32
    %c0_i32_1 = arith.constant 0 : i32
    return %c0_i32, %c0_i32_0 : i32, i32
  }
  func.func @transform_5(%arg0: i32) -> (i32, i32) {
    %c0_i32 = arith.constant 0 : i32
    %c0_i32_0 = arith.constant 0 : i32
    %c0_i32_1 = arith.constant 0 : i32
    return %c0_i32, %c0_i32_0 : i32, i32
  }
  func.func @transform_6(%arg0: i32) -> (i32, i32) {
    %c0_i32 = arith.constant 0 : i32
    %c0_i32_0 = arith.constant 0 : i32
    %c0_i32_1 = arith.constant 0 : i32
    return %c0_i32, %c0_i32_0 : i32, i32
  }
  func.func @transform_7(%arg0: i32) -> (i32, i32) {
    %c0_i32 = arith.constant 0 : i32
    %c0_i32_0 = arith.constant 0 : i32
    %c0_i32_1 = arith.constant 0 : i32
    return %c0_i32, %c0_i32_0 : i32, i32
  }
  func.func @transform_8(%arg0: i32) -> (i32, i32) {
    %c0_i32 = arith.constant 0 : i32
    %c0_i32_0 = arith.constant 0 : i32
    %c0_i32_1 = arith.constant 0 : i32
    return %c0_i32, %c0_i32_0 : i32, i32
  }
  func.func @transform_9(%arg0: i32) -> (i32, i32) {
    %c0_i32 = arith.constant 0 : i32
    %c0_i32_0 = arith.constant 0 : i32
    %c0_i32_1 = arith.constant 0 : i32
    return %c0_i32, %c0_i32_0 : i32, i32
  }
  func.func @transform_10(%arg0: i32) -> (i32, i32, i32) {
    %c0_i32 = arith.constant 0 : i32
    %c0_i32_0 = arith.constant 0 : i32
    %c0_i32_1 = arith.constant 0 : i32
    return %c0_i32, %arg0, %c0_i32_0 : i32, i32, i32
  }
}

</mosaic_0001>

<llo_original>
// kernel: group_mamba_forward.1
$region0: #{group_mamba_forward.1}
  #allocation0 [shape = 'u32[]', space=smem, size = 0x4, offset = 0x4, fixed_abs, tag = 'smem constant byte address 0x4 - core index']
  #allocation1 [shape = 'u32[144,128]{1,0:T(1,128)}', space=vmem, size = 0x12000, scoped, tag = 'internal scratch']
  #allocation2 [shape = 'f32[152,64]{1,0:T(8,128)}', space=vmem, size = 0x13000, scoped, tag = 'scratch operand']
  #allocation3 [shape = 'f32[128,1088]{1,0:T(8,128)}', space=vmem, size = 0x90000, scoped, tag = 'scratch operand']
  #allocation4 [shape = 'f32[128,512]{1,0:T(8,128)}', space=vmem, size = 0x40000, scoped, tag = 'scratch operand']
  #allocation5 [shape = 'f32[128,512]{1,0:T(8,128)}', space=vmem, size = 0x40000, scoped, tag = 'scratch operand']
  #allocation6 [shape = 'f32[128,512]{1,0:T(8,128)}', space=vmem, size = 0x40000, scoped, tag = 'scratch operand']
  %s0 = inlined_call_operand.vmem [shape: f32[16,16,32], index: 0, kind: input, shape index: {}]
  %s1 = inlined_call_operand.vmem [shape: f32[32,128], index: 1, kind: input, shape index: {}]
  %s2 = inlined_call_operand.vmem [shape: f32[4,64], index: 2, kind: input, shape index: {}]
  %s3 = inlined_call_operand.vmem [shape: f32[1,64], index: 3, kind: input, shape index: {}]
  %s4 = inlined_call_operand.vmem [shape: f32[64,1088], index: 4, kind: input, shape index: {}]
  %s5 = inlined_call_operand.vmem [shape: f32[1,1088], index: 5, kind: input, shape index: {}]
  %s6 = inlined_call_operand.vmem [shape: f32[1,512], index: 6, kind: input, shape index: {}]
  %s7 = inlined_call_operand.vmem [shape: f32[1,64], index: 7, kind: input, shape index: {}]
  %s8 = inlined_call_operand.vmem [shape: f32[512,32], index: 8, kind: input, shape index: {}]
  %s9 = inlined_call_operand.vmem [shape: f32[64,32], index: 9, kind: input, shape index: {}]
  %s10 = inlined_call_operand.vmem [shape: f32[16,16,32], index: 10, kind: output, shape index: {}]
  %s11 = sld [smem:[#allocation0]]
  $region145: #{group_mamba_forward.1} parent=0
    _
  %s13 = ssub.s32 1, %s11
  %s14 = scalar_select 0, %s13, %s11
  $region1: #{group_mamba_forward.1} parent=0
    #allocation7 [shape = 'u8[131072]{0}', space=vmem, size = 0x20000, scoped, tag = 'input window, operand 0']
    #allocation8 [shape = 'u8[131072]{0}', space=vmem, size = 0x20000, scoped, tag = 'output window, operand 0']
    loop: start=0, step=1, limit=4
    $region2: #{group_mamba_forward.1} parent=1 // loop_pre_header
      _
    $region3: #{group_mamba_forward.1} parent=1 // loop_header
      %s16 = sphi 0, %s20
      %p17 = scmp.ge.s32.totalorder %s16, 4
      %s26 = sphi 0, %s28
      %s29 = sphi 0, %s26
      %s30 = sphi 0, %s29
      %s46 = sphi 0, %s30
      %s50 = sphi 0, %s50
      %s52 = sphi 0, %s50
      %s53 = sphi 0, %s52
      %s67 = sphi 0, %s53
      %s71 = sphi 0, %s71
      %s73 = sphi 0, %s71
      %s74 = sphi 0, %s73
      %s88 = sphi 0, %s74
      %s92 = sphi 0, %s92
      %s94 = sphi 0, %s92
      %s95 = sphi 0, %s94
      %s109 = sphi 0, %s95
      %s113 = sphi 0, %s113
      %s115 = sphi 0, %s113
      %s116 = sphi 0, %s115
      %s130 = sphi 0, %s116
      %s134 = sphi 0, %s134
      %s136 = sphi 0, %s134
      %s137 = sphi 0, %s136
      %s151 = sphi 0, %s137
      %s155 = sphi 0, %s155
      %s157 = sphi 0, %s155
      %s158 = sphi 0, %s157
      %s172 = sphi 0, %s158
      %s176 = sphi 0, %s176
      %s178 = sphi 0, %s176
      %s179 = sphi 0, %s178
      %s193 = sphi 0, %s179
      %s197 = sphi 0, %s197
      %s199 = sphi 0, %s197
      %s200 = sphi 0, %s199
      %s214 = sphi 0, %s200
      %s218 = sphi 0, %s218
      %s220 = sphi 0, %s218
      %s221 = sphi 0, %s220
      %s235 = sphi 0, %s221
      %s241 = sphi 0, %s243
      %s244 = sphi 0, %s241
      %s245 = sphi 0, %s244
      %s261 = sphi 0, %s245
    $region4: #{group_mamba_forward.1} parent=1 // loop_header_branch
      %19 = sbr.rel (%p17) target = $region8
    $region5: #{group_mamba_forward.1} parent=1 // loop_body
      %s21 = ssub.s32 %s16, 1
      %s22 = ssub.s32 %s16, 2
      %s23 = sadd.s32 %s16, 1
      %s24 = ssub.s32 %s16, %s23
      %p25 = scmp.eq.s32.totalorder %s24, 0
      %s27 = sadd.s32 %s26, 1
      %s28 = scalar_select %p25, %s26, %s27
      %p31 = pneg %p25
      %p32 = scmp.eq.s32.totalorder %s16, 1
      %p33 = por %p31, %p32
      %p34 = scmp.ne.s32.totalorder %s26, %s29
      %p35 = scmp.eq.s32.totalorder %s16, 0
      %p36 = por %p34, %p35
      %p37 = scmp.ne.s32.totalorder %s26, %s29
      %p38 = scmp.eq.s32.totalorder %s21, 1
      %p39 = por %p37, %p38
      %p40 = scmp.ne.s32.totalorder %s29, %s30
      %p41 = scmp.eq.s32.totalorder %s21, 0
      %p42 = por %p40, %p41
      %p43 = scmp.ne.s32.totalorder %s29, %s30
      %p44 = scmp.eq.s32.totalorder %s22, 1
      %p45 = por %p43, %p44
      %p47 = scmp.ne.s32.totalorder %s30, %s46
      %p48 = scmp.eq.s32.totalorder %s22, 0
      %p49 = por %p47, %p48
      %s51 = sadd.s32 %s50, 1
      %p54 = scmp.eq.s32.totalorder %s16, 1
      %p55 = scmp.ne.s32.totalorder %s50, %s52
      %p56 = scmp.eq.s32.totalorder %s16, 0
      %p57 = por %p55, %p56
      %p58 = scmp.ne.s32.totalorder %s50, %s52
      %p59 = scmp.eq.s32.totalorder %s21, 1
      %p60 = por %p58, %p59
      %p61 = scmp.ne.s32.totalorder %s52, %s53
      %p62 = scmp.eq.s32.totalorder %s21, 0
      %p63 = por %p61, %p62
      %p64 = scmp.ne.s32.totalorder %s52, %s53
      %p65 = scmp.eq.s32.totalorder %s22, 1
      %p66 = por %p64, %p65
      %p68 = scmp.ne.s32.totalorder %s53, %s67
      %p69 = scmp.eq.s32.totalorder %s22, 0
      %p70 = por %p68, %p69
      %s72 = sadd.s32 %s71, 1
      %p75 = scmp.eq.s32.totalorder %s16, 1
      %p76 = scmp.ne.s32.totalorder %s71, %s73
      %p77 = scmp.eq.s32.totalorder %s16, 0
      %p78 = por %p76, %p77
      %p79 = scmp.ne.s32.totalorder %s71, %s73
      %p80 = scmp.eq.s32.totalorder %s21, 1
      %p81 = por %p79, %p80
      %p82 = scmp.ne.s32.totalorder %s73, %s74
      %p83 = scmp.eq.s32.totalorder %s21, 0
      %p84 = por %p82, %p83
      %p85 = scmp.ne.s32.totalorder %s73, %s74
      %p86 = scmp.eq.s32.totalorder %s22, 1
      %p87 = por %p85, %p86
      %p89 = scmp.ne.s32.totalorder %s74, %s88
      %p90 = scmp.eq.s32.totalorder %s22, 0
      %p91 = por %p89, %p90
      %s93 = sadd.s32 %s92, 1
      %p96 = scmp.eq.s32.totalorder %s16, 1
      %p97 = scmp.ne.s32.totalorder %s92, %s94
      %p98 = scmp.eq.s32.totalorder %s16, 0
      %p99 = por %p97, %p98
      %p100 = scmp.ne.s32.totalorder %s92, %s94
      %p101 = scmp.eq.s32.totalorder %s21, 1
      %p102 = por %p100, %p101
      %p103 = scmp.ne.s32.totalorder %s94, %s95
      %p104 = scmp.eq.s32.totalorder %s21, 0
      %p105 = por %p103, %p104
      %p106 = scmp.ne.s32.totalorder %s94, %s95
      %p107 = scmp.eq.s32.totalorder %s22, 1
      %p108 = por %p106, %p107
      %p110 = scmp.ne.s32.totalorder %s95, %s109
      %p111 = scmp.eq.s32.totalorder %s22, 0
      %p112 = por %p110, %p111
      %s114 = sadd.s32 %s113, 1
      %p117 = scmp.eq.s32.totalorder %s16, 1
      %p118 = scmp.ne.s32.totalorder %s113, %s115
      %p119 = scmp.eq.s32.totalorder %s16, 0
      %p120 = por %p118, %p119
      %p121 = scmp.ne.s32.totalorder %s113, %s115
      %p122 = scmp.eq.s32.totalorder %s21, 1
      %p123 = por %p121, %p122
      %p124 = scmp.ne.s32.totalorder %s115, %s116
      %p125 = scmp.eq.s32.totalorder %s21, 0
      %p126 = por %p124, %p125
      %p127 = scmp.ne.s32.totalorder %s115, %s116
      %p128 = scmp.eq.s32.totalorder %s22, 1
      %p129 = por %p127, %p128
      %p131 = scmp.ne.s32.totalorder %s116, %s130
      %p132 = scmp.eq.s32.totalorder %s22, 0
      %p133 = por %p131, %p132
      %s135 = sadd.s32 %s134, 1
      %p138 = scmp.eq.s32.totalorder %s16, 1
      %p139 = scmp.ne.s32.totalorder %s134, %s136
      %p140 = scmp.eq.s32.totalorder %s16, 0
      %p141 = por %p139, %p140
      %p142 = scmp.ne.s32.totalorder %s134, %s136
      %p143 = scmp.eq.s32.totalorder %s21, 1
      %p144 = por %p142, %p143
      %p145 = scmp.ne.s32.totalorder %s136, %s137
      %p146 = scmp.eq.s32.totalorder %s21, 0
      %p147 = por %p145, %p146
      %p148 = scmp.ne.s32.totalorder %s136, %s137
      %p149 = scmp.eq.s32.totalorder %s22, 1
      %p150 = por %p148, %p149
      %p152 = scmp.ne.s32.totalorder %s137, %s151
      %p153 = scmp.eq.s32.totalorder %s22, 0
      %p154 = por %p152, %p153
      %s156 = sadd.s32 %s155, 1
      %p159 = scmp.eq.s32.totalorder %s16, 1
      %p160 = scmp.ne.s32.totalorder %s155, %s157
      %p161 = scmp.eq.s32.totalorder %s16, 0
      %p162 = por %p160, %p161
      %p163 = scmp.ne.s32.totalorder %s155, %s157
      %p164 = scmp.eq.s32.totalorder %s21, 1
      %p165 = por %p163, %p164
      %p166 = scmp.ne.s32.totalorder %s157, %s158
      %p167 = scmp.eq.s32.totalorder %s21, 0
      %p168 = por %p166, %p167
      %p169 = scmp.ne.s32.totalorder %s157, %s158
      %p170 = scmp.eq.s32.totalorder %s22, 1
      %p171 = por %p169, %p170
      %p173 = scmp.ne.s32.totalorder %s158, %s172
      %p174 = scmp.eq.s32.totalorder %s22, 0
      %p175 = por %p173, %p174
      %s177 = sadd.s32 %s176, 1
      %p180 = scmp.eq.s32.totalorder %s16, 1
      %p181 = scmp.ne.s32.totalorder %s176, %s178
      %p182 = scmp.eq.s32.totalorder %s16, 0
      %p183 = por %p181, %p182
      %p184 = scmp.ne.s32.totalorder %s176, %s178
      %p185 = scmp.eq.s32.totalorder %s21, 1
      %p186 = por %p184, %p185
      %p187 = scmp.ne.s32.totalorder %s178, %s179
      %p188 = scmp.eq.s32.totalorder %s21, 0
      %p189 = por %p187, %p188
      %p190 = scmp.ne.s32.totalorder %s178, %s179
      %p191 = scmp.eq.s32.totalorder %s22, 1
      %p192 = por %p190, %p191
      %p194 = scmp.ne.s32.totalorder %s179, %s193
      %p195 = scmp.eq.s32.totalorder %s22, 0
      %p196 = por %p194, %p195
      %s198 = sadd.s32 %s197, 1
      %p201 = scmp.eq.s32.totalorder %s16, 1
      %p202 = scmp.ne.s32.totalorder %s197, %s199
      %p203 = scmp.eq.s32.totalorder %s16, 0
      %p204 = por %p202, %p203
      %p205 = scmp.ne.s32.totalorder %s197, %s199
      %p206 = scmp.eq.s32.totalorder %s21, 1
      %p207 = por %p205, %p206
      %p208 = scmp.ne.s32.totalorder %s199, %s200
      %p209 = scmp.eq.s32.totalorder %s21, 0
      %p210 = por %p208, %p209
      %p211 = scmp.ne.s32.totalorder %s199, %s200
      %p212 = scmp.eq.s32.totalorder %s22, 1
      %p213 = por %p211, %p212
      %p215 = scmp.ne.s32.totalorder %s200, %s214
      %p216 = scmp.eq.s32.totalorder %s22, 0
      %p217 = por %p215, %p216
      %s219 = sadd.s32 %s218, 1
      %p222 = scmp.eq.s32.totalorder %s16, 1
      %p223 = scmp.ne.s32.totalorder %s218, %s220
      %p224 = scmp.eq.s32.totalorder %s16, 0
      %p225 = por %p223, %p224
      %p226 = scmp.ne.s32.totalorder %s218, %s220
      %p227 = scmp.eq.s32.totalorder %s21, 1
      %p228 = por %p226, %p227
      %p229 = scmp.ne.s32.totalorder %s220, %s221
      %p230 = scmp.eq.s32.totalorder %s21, 0
      %p231 = por %p229, %p230
      %p232 = scmp.ne.s32.totalorder %s220, %s221
      %p233 = scmp.eq.s32.totalorder %s22, 1
      %p234 = por %p232, %p233
      %p236 = scmp.ne.s32.totalorder %s221, %s235
      %p237 = scmp.eq.s32.totalorder %s22, 0
      %p238 = por %p236, %p237
      %s239 = ssub.s32 %s16, %s23
      %p240 = scmp.eq.s32.totalorder %s239, 0
      %s242 = sadd.s32 %s241, 1
      %s243 = scalar_select %p240, %s241, %s242
      %p246 = pneg %p240
      %p247 = scmp.eq.s32.totalorder %s16, 1
      %p248 = por %p246, %p247
      %p249 = scmp.ne.s32.totalorder %s241, %s244
      %p250 = scmp.eq.s32.totalorder %s16, 0
      %p251 = por %p249, %p250
      %p252 = scmp.ne.s32.totalorder %s241, %s244
      %p253 = scmp.eq.s32.totalorder %s21, 1
      %p254 = por %p252, %p253
      %p255 = scmp.ne.s32.totalorder %s244, %s245
      %p256 = scmp.eq.s32.totalorder %s21, 0
      %p257 = por %p255, %p256
      %p258 = scmp.ne.s32.totalorder %s244, %s245
      %p259 = scmp.eq.s32.totalorder %s22, 1
      %p260 = por %p258, %p259
      %p262 = scmp.ne.s32.totalorder %s245, %s261
      %p263 = scmp.eq.s32.totalorder %s22, 0
      %p264 = por %p262, %p263
      %p265 = scmp.le.s32.totalorder 1, %s16
      %p266 = scmp.lt.s32.totalorder %s16, 3
      %p267 = pnand %p265, %p266
      %p268 = pneg %p267
      // Predicated region
      $region9: #{group_mamba_forward.1} parent=5 // pred_check
        _
      $region10: #{group_mamba_forward.1} parent=5 // pred_check_branch
        %270 = sbr.rel (%p267) target = $region12
      $region11: #{group_mamba_forward.1} parent=5 // pred_region
        %s271 = ssub.s32 %s16, 1
        // Predicated region
        $region13: #{group_mamba_forward.1} parent=11 // pred_check
          %p272 = pneg %p63
        $region14: #{group_mamba_forward.1} parent=11 // pred_check_branch
          %274 = sbr.rel (%p272) target = $region16
        $region15: #{group_mamba_forward.1} parent=11 // pred_region
          _
        $region16: #{group_mamba_forward.1} parent=11 // pred_fallthru
          _
        // Predicated region
        $region17: #{group_mamba_forward.1} parent=11 // pred_check
          %p275 = pneg %p84
        $region18: #{group_mamba_forward.1} parent=11 // pred_check_branch
          %277 = sbr.rel (%p275) target = $region20
        $region19: #{group_mamba_forward.1} parent=11 // pred_region
          _
        $region20: #{group_mamba_forward.1} parent=11 // pred_fallthru
          _
        // Predicated region
        $region21: #{group_mamba_forward.1} parent=11 // pred_check
          %p278 = pneg %p105
        $region22: #{group_mamba_forward.1} parent=11 // pred_check_branch
          %280 = sbr.rel (%p278) target = $region24
        $region23: #{group_mamba_forward.1} parent=11 // pred_region
          _
        $region24: #{group_mamba_forward.1} parent=11 // pred_fallthru
          _
        // Predicated region
        $region25: #{group_mamba_forward.1} parent=11 // pred_check
          %p281 = pneg %p126
        $region26: #{group_mamba_forward.1} parent=11 // pred_check_branch
          %283 = sbr.rel (%p281) target = $region28
        $region27: #{group_mamba_forward.1} parent=11 // pred_region
          _
        $region28: #{group_mamba_forward.1} parent=11 // pred_fallthru
          _
        // Predicated region
        $region29: #{group_mamba_forward.1} parent=11 // pred_check
          %p284 = pneg %p147
        $region30: #{group_mamba_forward.1} parent=11 // pred_check_branch
          %286 = sbr.rel (%p284) target = $region32
        $region31: #{group_mamba_forward.1} parent=11 // pred_region
          _
        $region32: #{group_mamba_forward.1} parent=11 // pred_fallthru
          _
        // Predicated region
        $region33: #{group_mamba_forward.1} parent=11 // pred_check
          %p287 = pneg %p168
        $region34: #{group_mamba_forward.1} parent=11 // pred_check_branch
          %289 = sbr.rel (%p287) target = $region36
        $region35: #{group_mamba_forward.1} parent=11 // pred_region
          _
        $region36: #{group_mamba_forward.1} parent=11 // pred_fallthru
          _
        // Predicated region
        $region37: #{group_mamba_forward.1} parent=11 // pred_check
          %p290 = pneg %p189
        $region38: #{group_mamba_forward.1} parent=11 // pred_check_branch
          %292 = sbr.rel (%p290) target = $region40
        $region39: #{group_mamba_forward.1} parent=11 // pred_region
          _
        $region40: #{group_mamba_forward.1} parent=11 // pred_fallthru
          _
        // Predicated region
        $region41: #{group_mamba_forward.1} parent=11 // pred_check
          %p293 = pneg %p210
        $region42: #{group_mamba_forward.1} parent=11 // pred_check_branch
          %295 = sbr.rel (%p293) target = $region44
        $region43: #{group_mamba_forward.1} parent=11 // pred_region
          _
        $region44: #{group_mamba_forward.1} parent=11 // pred_fallthru
          _
        // Predicated region
        $region45: #{group_mamba_forward.1} parent=11 // pred_check
          %p296 = pneg %p231
        $region46: #{group_mamba_forward.1} parent=11 // pred_check_branch
          %298 = sbr.rel (%p296) target = $region48
        $region47: #{group_mamba_forward.1} parent=11 // pred_region
          _
        $region48: #{group_mamba_forward.1} parent=11 // pred_fallthru
          _
      $region12: #{group_mamba_forward.1} parent=5 // pred_fallthru
        _
      %p299 = scmp.lt.s32.totalorder %s16, 2
      // Predicated region
      $region49: #{group_mamba_forward.1} parent=5 // pred_check
        %p300 = pneg %p299
      $region50: #{group_mamba_forward.1} parent=5 // pred_check_branch
        %302 = sbr.rel (%p300) target = $region52
      $region51: #{group_mamba_forward.1} parent=5 // pred_region
        // Predicated region
        $region53: #{group_mamba_forward.1} parent=51 // pred_check
          %p303 = pneg %p36
        $region54: #{group_mamba_forward.1} parent=51 // pred_check_branch
          %305 = sbr.rel (%p303) target = $region56
        $region55: #{group_mamba_forward.1} parent=51 // pred_region
          %s306 = sand.u32 %s26, 1
          %s307 = sand.u32 %s26, 1
          %s308 = smul.addr %s307, 128
          %s309 = scalar_lea.vmem [#allocation7], %s308
          %s310 = smul.addr %s16, 8
          %s311 = scalar_lea.vmem %s0, %s310
          // Predicated region
          $region57: #{group_mamba_forward.1} parent=55 // pred_check
            _
          $region58: #{group_mamba_forward.1} parent=55 // pred_check_branch
            %313 = sbr.rel (0) target = $region60
          $region59: #{group_mamba_forward.1} parent=55 // pred_region
            // Predicated region
            $region61: #{group_mamba_forward.1} parent=59 // pred_check
              _
            $region62: #{group_mamba_forward.1} parent=59 // pred_check_branch
              %315 = sbr.rel (0) target = $region64
            $region63: #{group_mamba_forward.1} parent=59 // pred_region
              // Predicated region
              $region76: #{group_mamba_forward.1} parent=63 // pred_check
                _
              $region77: #{group_mamba_forward.1} parent=63 // pred_check_branch
                %361 = sbr.rel (0) target = $region79
              $region78: #{group_mamba_forward.1} parent=63 // pred_region
                loop: start=0, step=1, limit=1
                $region80: #{group_mamba_forward.1} parent=78 // loop_pre_header
                  _
                $region81: #{group_mamba_forward.1} parent=78 // loop_header
                  %s363 = sphi 0, %s367
                  %p364 = scmp.ge.s32.totalorder %s363, 1
                  %s368 = sphi %s311, %s311
                  %s369 = sphi %s309, %s309
                $region82: #{group_mamba_forward.1} parent=78 // loop_header_branch
                  %366 = sbr.rel (%p364) target = $region86
                $region83: #{group_mamba_forward.1} parent=78 // loop_body
                  %v370 = vld [vmem:[%s368] sm:$0xff]
                  %371 = vst [vmem:[%s369] sm:$0xff] %v370
                  %v372 = vld [vmem:[%s368 + $0x10] sm:$0xff]
                  %373 = vst [vmem:[%s369 + $0x8] sm:$0xff] %v372
                  %v374 = vld [vmem:[%s368 + $0x20] sm:$0xff]
                  %375 = vst [vmem:[%s369 + $0x10] sm:$0xff] %v374
                  %v376 = vld [vmem:[%s368 + $0x30] sm:$0xff]
                  %377 = vst [vmem:[%s369 + $0x18] sm:$0xff] %v376
                  %v378 = vld [vmem:[%s368 + $0x40] sm:$0xff]
                  %379 = vst [vmem:[%s369 + $0x20] sm:$0xff] %v378
                  %v380 = vld [vmem:[%s368 + $0x50] sm:$0xff]
                  %381 = vst [vmem:[%s369 + $0x28] sm:$0xff] %v380
                  %v382 = vld [vmem:[%s368 + $0x60] sm:$0xff]
                  %383 = vst [vmem:[%s369 + $0x30] sm:$0xff] %v382
                  %v384 = vld [vmem:[%s368 + $0x70] sm:$0xff]
                  %385 = vst [vmem:[%s369 + $0x38] sm:$0xff] %v384
                  %v386 = vld [vmem:[%s368 + $0x80] sm:$0xff]
                  %387 = vst [vmem:[%s369 + $0x40] sm:$0xff] %v386
                  %v388 = vld [vmem:[%s368 + $0x90] sm:$0xff]
                  %389 = vst [vmem:[%s369 + $0x48] sm:$0xff] %v388
                  %v390 = vld [vmem:[%s368 + $0xa0] sm:$0xff]
                  %391 = vst [vmem:[%s369 + $0x50] sm:$0xff] %v390
                  %v392 = vld [vmem:[%s368 + $0xb0] sm:$0xff]
                  %393 = vst [vmem:[%s369 + $0x58] sm:$0xff] %v392
                  %v394 = vld [vmem:[%s368 + $0xc0] sm:$0xff]
                  %395 = vst [vmem:[%s369 + $0x60] sm:$0xff] %v394
                  %v396 = vld [vmem:[%s368 + $0xd0] sm:$0xff]
                  %397 = vst [vmem:[%s369 + $0x68] sm:$0xff] %v396
                  %v398 = vld [vmem:[%s368 + $0xe0] sm:$0xff]
                  %399 = vst [vmem:[%s369 + $0x70] sm:$0xff] %v398
                  %v400 = vld [vmem:[%s368 + $0xf0] sm:$0xff]
                  %401 = vst [vmem:[%s369 + $0x78] sm:$0xff] %v400
                $region84: #{group_mamba_forward.1} parent=78 // loop_footer
                  %s367 = sadd.s32 1, %s363
                $region85: #{group_mamba_forward.1} parent=78 // loop_footer_branch
                  %362 = sbr.rel target = $region81
                $region86: #{group_mamba_forward.1} parent=78 // loop_exit
                  _
              $region79: #{group_mamba_forward.1} parent=63 // pred_fallthru
                _
              // Predicated region
              $region87: #{group_mamba_forward.1} parent=63 // pred_check
                _
              $region88: #{group_mamba_forward.1} parent=63 // pred_check_branch
                %403 = sbr.rel target = $region90
              $region89: #{group_mamba_forward.1} parent=63 // pred_region
                _
              $region90: #{group_mamba_forward.1} parent=63 // pred_fallthru
                _
            $region64: #{group_mamba_forward.1} parent=59 // pred_fallthru
              _
            // Predicated region
            $region65: #{group_mamba_forward.1} parent=59 // pred_check
              _
            $region66: #{group_mamba_forward.1} parent=59 // pred_check_branch
              %317 = sbr.rel target = $region68
            $region67: #{group_mamba_forward.1} parent=59 // pred_region
              %s319 = ssub.s32 256, 1
              loop: start=0, step=1, limit=1
              $region69: #{group_mamba_forward.1} parent=67 // loop_pre_header
                _
              $region70: #{group_mamba_forward.1} parent=67 // loop_header
                %s321 = sphi 0, %s325
                %p322 = scmp.ge.s32.totalorder %s321, 1
                %s326 = sphi %s311, %s311
                %s327 = sphi %s309, %s309
              $region71: #{group_mamba_forward.1} parent=67 // loop_header_branch
                %324 = sbr.rel (%p322) target = $region75
              $region72: #{group_mamba_forward.1} parent=67 // loop_body
                %v328 = vld [vmem:[%s326] sm:%s319]
                %329 = vst [vmem:[%s327] sm:%s319] %v328
                %v330 = vld [vmem:[%s326 + $0x10] sm:%s319]
                %331 = vst [vmem:[%s327 + $0x8] sm:%s319] %v330
                %v332 = vld [vmem:[%s326 + $0x20] sm:%s319]
                %333 = vst [vmem:[%s327 + $0x10] sm:%s319] %v332
                %v334 = vld [vmem:[%s326 + $0x30] sm:%s319]
                %335 = vst [vmem:[%s327 + $0x18] sm:%s319] %v334
                %v336 = vld [vmem:[%s326 + $0x40] sm:%s319]
                %337 = vst [vmem:[%s327 + $0x20] sm:%s319] %v336
                %v338 = vld [vmem:[%s326 + $0x50] sm:%s319]
                %339 = vst [vmem:[%s327 + $0x28] sm:%s319] %v338
                %v340 = vld [vmem:[%s326 + $0x60] sm:%s319]
                %341 = vst [vmem:[%s327 + $0x30] sm:%s319] %v340
                %v342 = vld [vmem:[%s326 + $0x70] sm:%s319]
                %343 = vst [vmem:[%s327 + $0x38] sm:%s319] %v342
                %v344 = vld [vmem:[%s326 + $0x80] sm:%s319]
                %345 = vst [vmem:[%s327 + $0x40] sm:%s319] %v344
                %v346 = vld [vmem:[%s326 + $0x90] sm:%s319]
                %347 = vst [vmem:[%s327 + $0x48] sm:%s319] %v346
                %v348 = vld [vmem:[%s326 + $0xa0] sm:%s319]
                %349 = vst [vmem:[%s327 + $0x50] sm:%s319] %v348
                %v350 = vld [vmem:[%s326 + $0xb0] sm:%s319]
                %351 = vst [vmem:[%s327 + $0x58] sm:%s319] %v350
                %v352 = vld [vmem:[%s326 + $0xc0] sm:%s319]
                %353 = vst [vmem:[%s327 + $0x60] sm:%s319] %v352
                %v354 = vld [vmem:[%s326 + $0xd0] sm:%s319]
                %355 = vst [vmem:[%s327 + $0x68] sm:%s319] %v354
                %v356 = vld [vmem:[%s326 + $0xe0] sm:%s319]
                %357 = vst [vmem:[%s327 + $0x70] sm:%s319] %v356
                %v358 = vld [vmem:[%s326 + $0xf0] sm:%s319]
                %359 = vst [vmem:[%s327 + $0x78] sm:%s319] %v358
              $region73: #{group_mamba_forward.1} parent=67 // loop_footer
                %s325 = sadd.s32 1, %s321
              $region74: #{group_mamba_forward.1} parent=67 // loop_footer_branch
                %320 = sbr.rel target = $region70
              $region75: #{group_mamba_forward.1} parent=67 // loop_exit
                _
            $region68: #{group_mamba_forward.1} parent=59 // pred_fallthru
              _
          $region60: #{group_mamba_forward.1} parent=55 // pred_fallthru
            _
          %404 = vnop
        $region56: #{group_mamba_forward.1} parent=51 // pred_fallthru
          _
      $region52: #{group_mamba_forward.1} parent=5 // pred_fallthru
        _
      %p405 = scmp.le.s32.totalorder 1, %s16
      %p406 = scmp.lt.s32.totalorder %s16, 3
      %p407 = pnand %p405, %p406
      %p408 = pneg %p407
      // Predicated region
      $region91: #{group_mamba_forward.1} parent=5 // pred_check
        _
      $region92: #{group_mamba_forward.1} parent=5 // pred_check_branch
        %410 = sbr.rel (%p407) target = $region94
      $region93: #{group_mamba_forward.1} parent=5 // pred_region
        %s411 = ssub.s32 %s16, 1
        %s412 = sand.u32 %s29, 1
        %s413 = sand.u32 %s29, 1
        %s414 = smul.addr %s413, 128
        %s415 = scalar_lea.vmem [#allocation7], %s414
        // Predicated region
        $region95: #{group_mamba_forward.1} parent=93 // pred_check
          %p416 = pneg %p42
        $region96: #{group_mamba_forward.1} parent=93 // pred_check_branch
          %418 = sbr.rel (%p416) target = $region98
        $region97: #{group_mamba_forward.1} parent=93 // pred_region
          _
        $region98: #{group_mamba_forward.1} parent=93 // pred_fallthru
          _
        %s419 = sand.u32 %s29, 1
        %s420 = sand.u32 %s29, 1
        %s421 = smul.addr %s420, 128
        %s422 = scalar_lea.vmem [#allocation7], %s421
        %p423 = pneg %p42
        %p424 = pneg %p39
        %p425 = pneg %p63
        %p426 = pneg %p60
        %p427 = pneg %p84
        %p428 = pneg %p81
        %p429 = pneg %p105
        %p430 = pneg %p102
        %p431 = pneg %p126
        %p432 = pneg %p123
        %p433 = pneg %p147
        %p434 = pneg %p144
        %p435 = pneg %p168
        %p436 = pneg %p165
        %p437 = pneg %p189
        %p438 = pneg %p186
        %p439 = pneg %p210
        %p440 = pneg %p207
        %p441 = pneg %p231
        %p442 = pneg %p228
        %p443 = pneg %p257
        %p444 = pneg %p254
        %s445 = sand.u32 %s244, 1
        %s446 = sand.u32 %s244, 1
        %s447 = smul.addr %s446, 128
        %s448 = scalar_lea.vmem [#allocation8], %s447
        %v449 = vld [vmem:[%s415] sm:$0xff]
        %v450 = vld [vmem:[%s415 + $0x8] sm:$0xff]
        %v451 = vld [vmem:[%s415 + $0x10] sm:$0xff]
        %v452 = vld [vmem:[%s415 + $0x18] sm:$0xff]
        %v453 = vld [vmem:[%s415 + $0x20] sm:$0xff]
        %v454 = vld [vmem:[%s415 + $0x28] sm:$0xff]
        %v455 = vld [vmem:[%s415 + $0x30] sm:$0xff]
        %v456 = vld [vmem:[%s415 + $0x38] sm:$0xff]
        %v457 = vld [vmem:[%s415 + $0x40] sm:$0xff]
        %v458 = vld [vmem:[%s415 + $0x48] sm:$0xff]
        %v459 = vld [vmem:[%s415 + $0x50] sm:$0xff]
        %v460 = vld [vmem:[%s415 + $0x58] sm:$0xff]
        %v461 = vld [vmem:[%s415 + $0x60] sm:$0xff]
        %v462 = vld [vmem:[%s415 + $0x68] sm:$0xff]
        %v463 = vld [vmem:[%s415 + $0x70] sm:$0xff]
        %v464 = vld [vmem:[%s415 + $0x78] sm:$0xff]
        %v465 = vld [vmem:[%s1] sm:$0xff]
        %v466 = vld [vmem:[%s1 + $0x8] sm:$0xff]
        %v467 = vld [vmem:[%s1 + $0x10] sm:$0xff]
        %v468 = vld [vmem:[%s1 + $0x18] sm:$0xff]
        %vm469 = vcmask 261120
        %v471 = vsel %vm469, %v449, 0
        %v474 = vsel %vm469, %v450, 0
        %v477 = vsel %vm469, %v451, 0
        %v480 = vsel %vm469, %v452, 0
        %v483 = vsel %vm469, %v453, 0
        %v486 = vsel %vm469, %v454, 0
        %v489 = vsel %vm469, %v455, 0
        %v492 = vsel %vm469, %v456, 0
        %v495 = vsel %vm469, %v457, 0
        %v498 = vsel %vm469, %v458, 0
        %v501 = vsel %vm469, %v459, 0
        %v504 = vsel %vm469, %v460, 0
        %v507 = vsel %vm469, %v461, 0
        %v510 = vsel %vm469, %v462, 0
        %v513 = vsel %vm469, %v463, 0
        %v516 = vsel %vm469, %v464, 0
        %518 = vmatprep.subr.mxu0 0.0
        %519 = vmatpush1.msra.mxu0 0.0
        %520 = vmatprep.subr.mxu0 0.0
        %521 = vmatpush1.msra.mxu0 0.0
        %522 = vmatprep.subr.mxu0 0.0
        %523 = vmatpush1.msra.mxu0 0.0
        %524 = vmatprep.subr.mxu0 0.0
        %525 = vmatpush1.msra.mxu0 0.0
        %526 = vmatprep.subr.mxu0 0.0
        %527 = vmatpush1.msra.mxu0 0.0
        %528 = vmatprep.subr.mxu0 0.0
        %529 = vmatpush1.msra.mxu0 0.0
        %530 = vmatprep.subr.mxu0 0.0
        %531 = vmatpush1.msra.mxu0 0.0
        %532 = vmatprep.subr.mxu0 0.0
        %533 = vmatpush1.msra.mxu0 0.0
        %534 = vmatprep.subr.mxu0 0.0
        %535 = vmatpush1.msra.mxu0 0.0
        %536 = vmatprep.subr.mxu0 0.0
        %537 = vmatpush1.msra.mxu0 0.0
        %538 = vmatprep.subr.mxu0 0.0
        %539 = vmatpush1.msra.mxu0 0.0
        %540 = vmatprep.subr.mxu0 0.0
        %541 = vmatpush1.msra.mxu0 0.0
        %542 = vmatprep.subr.mxu0 0.0
        %543 = vmatpush1.msra.mxu0 %v468
        %544 = vmatprep.subr.mxu0 0.0
        %545 = vmatpush1.msra.mxu0 %v467
        %546 = vmatprep.subr.mxu0 0.0
        %547 = vmatpush1.msra.mxu0 %v466
        %548 = vmatprep.subr.mxu0 0.0
        %549 = vmatpush1.msra.mxu0 %v465
        %550 = vmatprep.subr.mxu0 0.0
        %551 = vmatpush2.msra.mxu0 0.0
        %552 = vmatprep.subr.mxu0 0.0
        %553 = vmatpush2.msra.mxu0 0.0
        %554 = vmatprep.subr.mxu0 0.0
        %555 = vmatpush2.msra.mxu0 0.0
        %556 = vmatprep.subr.mxu0 0.0
        %557 = vmatpush2.msra.mxu0 0.0
        %558 = vmatprep.subr.mxu0 0.0
        %559 = vmatpush2.msra.mxu0 0.0
        %560 = vmatprep.subr.mxu0 0.0
        %561 = vmatpush2.msra.mxu0 0.0
        %562 = vmatprep.subr.mxu0 0.0
        %563 = vmatpush2.msra.mxu0 0.0
        %564 = vmatprep.subr.mxu0 0.0
        %565 = vmatpush2.msra.mxu0 0.0
        %566 = vmatprep.subr.mxu0 0.0
        %567 = vmatpush2.msra.mxu0 0.0
        %568 = vmatprep.subr.mxu0 0.0
        %569 = vmatpush2.msra.mxu0 0.0
        %570 = vmatprep.subr.mxu0 0.0
        %571 = vmatpush2.msra.mxu0 0.0
        %572 = vmatprep.subr.mxu0 0.0
        %573 = vmatpush2.msra.mxu0 0.0
        %574 = vmatprep.subr.mxu0 0.0
        %575 = vmatpush2.msra.mxu0 0.0
        %576 = vmatprep.subr.mxu0 0.0
        %577 = vmatpush2.msra.mxu0 0.0
        %578 = vmatprep.subr.mxu0 0.0
        %579 = vmatpush2.msra.mxu0 0.0
        %580 = vmatprep.subr.mxu0 0.0
        %581 = vmatpush2.msra.mxu0 0.0
        %582 = vmatprep.mubr.f32.mxu0 0.0
        %583 = vmatmul.mubr.f32.gmra.mxu0 %v471
        %v584 = vpop.f32.mrf.mxu0
        %v585 = vadd.f32 0.0, %v584
        %v586 = vpop.f32.mrf.mxu0
        %587 = vmatprep.mubr.f32.mxu0 0.0
        %588 = vmatmul.mubr.f32.gmra.mxu0 %v474
        %v589 = vpop.f32.mrf.mxu0
        %v590 = vadd.f32 0.0, %v589
        %v591 = vpop.f32.mrf.mxu0
        %592 = vmatprep.mubr.f32.mxu0 0.0
        %593 = vmatmul.mubr.f32.gmra.mxu0 %v477
        %v594 = vpop.f32.mrf.mxu0
        %v595 = vadd.f32 0.0, %v594
        %v596 = vpop.f32.mrf.mxu0
        %597 = vmatprep.mubr.f32.mxu0 0.0
        %598 = vmatmul.mubr.f32.gmra.mxu0 %v480
        %v599 = vpop.f32.mrf.mxu0
        %v600 = vadd.f32 0.0, %v599
        %v601 = vpop.f32.mrf.mxu0
        %602 = vmatprep.mubr.f32.mxu0 0.0
        %603 = vmatmul.mubr.f32.gmra.mxu0 %v483
        %v604 = vpop.f32.mrf.mxu0
        %v605 = vadd.f32 0.0, %v604
        %v606 = vpop.f32.mrf.mxu0
        %607 = vmatprep.mubr.f32.mxu0 0.0
        %608 = vmatmul.mubr.f32.gmra.mxu0 %v486
        %v609 = vpop.f32.mrf.mxu0
        %v610 = vadd.f32 0.0, %v609
        %v611 = vpop.f32.mrf.mxu0
        %612 = vmatprep.mubr.f32.mxu0 0.0
        %613 = vmatmul.mubr.f32.gmra.mxu0 %v489
        %v614 = vpop.f32.mrf.mxu0
        %v615 = vadd.f32 0.0, %v614
        %v616 = vpop.f32.mrf.mxu0
        %617 = vmatprep.mubr.f32.mxu0 0.0
        %618 = vmatmul.mubr.f32.gmra.mxu0 %v492
        %v619 = vpop.f32.mrf.mxu0
        %v620 = vadd.f32 0.0, %v619
        %v621 = vpop.f32.mrf.mxu0
        %622 = vmatprep.mubr.f32.mxu0 0.0
        %623 = vmatmul.mubr.f32.gmra.mxu0 %v495
        %v624 = vpop.f32.mrf.mxu0
        %v625 = vadd.f32 0.0, %v624
        %v626 = vpop.f32.mrf.mxu0
        %627 = vmatprep.mubr.f32.mxu0 0.0
        %628 = vmatmul.mubr.f32.gmra.mxu0 %v498
        %v629 = vpop.f32.mrf.mxu0
        %v630 = vadd.f32 0.0, %v629
        %v631 = vpop.f32.mrf.mxu0
        %632 = vmatprep.mubr.f32.mxu0 0.0
        %633 = vmatmul.mubr.f32.gmra.mxu0 %v501
        %v634 = vpop.f32.mrf.mxu0
        %v635 = vadd.f32 0.0, %v634
        %v636 = vpop.f32.mrf.mxu0
        %637 = vmatprep.mubr.f32.mxu0 0.0
        %638 = vmatmul.mubr.f32.gmra.mxu0 %v504
        %v639 = vpop.f32.mrf.mxu0
        %v640 = vadd.f32 0.0, %v639
        %v641 = vpop.f32.mrf.mxu0
        %642 = vmatprep.mubr.f32.mxu0 0.0
        %643 = vmatmul.mubr.f32.gmra.mxu0 %v507
        %v644 = vpop.f32.mrf.mxu0
        %v645 = vadd.f32 0.0, %v644
        %v646 = vpop.f32.mrf.mxu0
        %647 = vmatprep.mubr.f32.mxu0 0.0
        %648 = vmatmul.mubr.f32.gmra.mxu0 %v510
        %v649 = vpop.f32.mrf.mxu0
        %v650 = vadd.f32 0.0, %v649
        %v651 = vpop.f32.mrf.mxu0
        %652 = vmatprep.mubr.f32.mxu0 0.0
        %653 = vmatmul.mubr.f32.gmra.mxu0 %v513
        %v654 = vpop.f32.mrf.mxu0
        %v655 = vadd.f32 0.0, %v654
        %v656 = vpop.f32.mrf.mxu0
        %657 = vmatprep.mubr.f32.mxu0 0.0
        %658 = vmatmul.mubr.f32.gmra.mxu0 %v516
        %v659 = vpop.f32.mrf.mxu0
        %v660 = vadd.f32 0.0, %v659
        %v661 = vpop.f32.mrf.mxu0
        %662 = vdwg.mxu0
        %vm663 = vcmask 523264
        %664 = vst.msk [vmem:[#allocation2] sm:$0xff] %vm663, 0.0
        %665 = vst.msk [vmem:[#allocation2 + $0x8] sm:$0xff] %vm663, 0.0
        %666 = vst.msk [vmem:[#allocation2 + $0x10] sm:$0xff] %vm663, 0.0
        %667 = vst.msk [vmem:[#allocation2 + $0x18] sm:$0xff] %vm663, %v585
        %668 = vst.msk [vmem:[#allocation2 + $0x20] sm:$0xff] %vm663, %v590
        %669 = vst.msk [vmem:[#allocation2 + $0x28] sm:$0xff] %vm663, %v595
        %670 = vst.msk [vmem:[#allocation2 + $0x30] sm:$0xff] %vm663, %v600
        %671 = vst.msk [vmem:[#allocation2 + $0x38] sm:$0xff] %vm663, %v605
        %672 = vst.msk [vmem:[#allocation2 + $0x40] sm:$0xff] %vm663, %v610
        %673 = vst.msk [vmem:[#allocation2 + $0x48] sm:$0xff] %vm663, %v615
        %674 = vst.msk [vmem:[#allocation2 + $0x50] sm:$0xff] %vm663, %v620
        %675 = vst.msk [vmem:[#allocation2 + $0x58] sm:$0xff] %vm663, %v625
        %676 = vst.msk [vmem:[#allocation2 + $0x60] sm:$0xff] %vm663, %v630
        %677 = vst.msk [vmem:[#allocation2 + $0x68] sm:$0xff] %vm663, %v635
        %678 = vst.msk [vmem:[#allocation2 + $0x70] sm:$0xff] %vm663, %v640
        %679 = vst.msk [vmem:[#allocation2 + $0x78] sm:$0xff] %vm663, %v645
        %680 = vst.msk [vmem:[#allocation2 + $0x80] sm:$0xff] %vm663, %v650
        %681 = vst.msk [vmem:[#allocation2 + $0x88] sm:$0xff] %vm663, %v655
        %682 = vst.msk [vmem:[#allocation2 + $0x90] sm:$0xff] %vm663, %v660
        %v683 = vld [vmem:[%s2] sm:$0xf]
        %v684 = vld [vmem:[%s3] sm:$0x1]
        %v685 = vld [vmem:[#allocation2] sm:$0xff]
        %v686 = vld [vmem:[#allocation2 + $0x8] sm:$0xff]
        %v687 = vld [vmem:[#allocation2 + $0x10] sm:$0xff]
        %v688 = vld [vmem:[#allocation2 + $0x18] sm:$0xff]
        %v689 = vld [vmem:[#allocation2 + $0x20] sm:$0xff]
        %v690 = vld [vmem:[#allocation2 + $0x28] sm:$0xff]
        %v691 = vld [vmem:[#allocation2 + $0x30] sm:$0xff]
        %v692 = vld [vmem:[#allocation2 + $0x38] sm:$0xff]
        %v693 = vld [vmem:[#allocation2 + $0x40] sm:$0xff]
        %v694 = vld [vmem:[#allocation2 + $0x48] sm:$0xff]
        %v695 = vld [vmem:[#allocation2 + $0x50] sm:$0xff]
        %v696 = vld [vmem:[#allocation2 + $0x58] sm:$0xff]
        %v697 = vld [vmem:[#allocation2 + $0x60] sm:$0xff]
        %v698 = vld [vmem:[#allocation2 + $0x68] sm:$0xff]
        %v699 = vld [vmem:[#allocation2 + $0x70] sm:$0xff]
        %v700 = vld [vmem:[#allocation2 + $0x78] sm:$0xff]
        %v701 = vlaneseq
        %v702 = vshrl.u32 %v701, 7
        %v703 = vsub.s32 0, %v702
        %v704 = vrot.slane %v683, %v703
        %v705 = vmul.f32 %v685, %v704
        %v706 = vmul.f32 %v686, %v704
        %v707 = vmul.f32 %v687, %v704
        %v708 = vmul.f32 %v688, %v704
        %v709 = vmul.f32 %v689, %v704
        %v710 = vmul.f32 %v690, %v704
        %v711 = vmul.f32 %v691, %v704
        %v712 = vmul.f32 %v692, %v704
        %v713 = vmul.f32 %v693, %v704
        %v714 = vmul.f32 %v694, %v704
        %v715 = vmul.f32 %v695, %v704
        %v716 = vmul.f32 %v696, %v704
        %v717 = vmul.f32 %v697, %v704
        %v718 = vmul.f32 %v698, %v704
        %v719 = vmul.f32 %v699, %v704
        %v720 = vmul.f32 %v700, %v704
        %v722 = vlaneseq
        %v723 = vshrl.u32 %v722, 7
        %v724 = vsub.s32 0, %v723
        %v725 = vrot.slane %v684, %v724
        %v727 = vadd.f32 %v725, %v705
        %v728 = vadd.f32 %v725, %v706
        %v729 = vadd.f32 %v725, %v707
        %v730 = vadd.f32 %v725, %v708
        %v731 = vadd.f32 %v725, %v709
        %v732 = vadd.f32 %v725, %v710
        %v733 = vadd.f32 %v725, %v711
        %v734 = vadd.f32 %v725, %v712
        %v735 = vadd.f32 %v725, %v713
        %v736 = vadd.f32 %v725, %v714
        %v737 = vadd.f32 %v725, %v715
        %v738 = vadd.f32 %v725, %v716
        %v739 = vadd.f32 %v725, %v717
        %v740 = vadd.f32 %v725, %v718
        %v741 = vadd.f32 %v725, %v719
        %v742 = vadd.f32 %v725, %v720
        %v743 = vld [vmem:[#allocation2 + $0x80] sm:$0xff]
        %v744 = vlaneseq
        %v745 = vshrl.u32 %v744, 7
        %v746 = vsub.s32 1, %v745
        %v747 = vrot.slane %v683, %v746
        %v748 = vmul.f32 %v686, %v747
        %v749 = vmul.f32 %v687, %v747
        %v750 = vmul.f32 %v688, %v747
        %v751 = vmul.f32 %v689, %v747
        %v752 = vmul.f32 %v690, %v747
        %v753 = vmul.f32 %v691, %v747
        %v754 = vmul.f32 %v692, %v747
        %v755 = vmul.f32 %v693, %v747
        %v756 = vmul.f32 %v694, %v747
        %v757 = vmul.f32 %v695, %v747
        %v758 = vmul.f32 %v696, %v747
        %v759 = vmul.f32 %v697, %v747
        %v760 = vmul.f32 %v698, %v747
        %v761 = vmul.f32 %v699, %v747
        %v762 = vmul.f32 %v700, %v747
        %v763 = vmul.f32 %v743, %v747
        %v764 = vadd.f32 %v727, %v748
        %v765 = vadd.f32 %v728, %v749
        %v766 = vadd.f32 %v729, %v750
        %v767 = vadd.f32 %v730, %v751
        %v768 = vadd.f32 %v731, %v752
        %v769 = vadd.f32 %v732, %v753
        %v770 = vadd.f32 %v733, %v754
        %v771 = vadd.f32 %v734, %v755
        %v772 = vadd.f32 %v735, %v756
        %v773 = vadd.f32 %v736, %v757
        %v774 = vadd.f32 %v737, %v758
        %v775 = vadd.f32 %v738, %v759
        %v776 = vadd.f32 %v739, %v760
        %v777 = vadd.f32 %v740, %v761
        %v778 = vadd.f32 %v741, %v762
        %v779 = vadd.f32 %v742, %v763
        %v780 = vld [vmem:[#allocation2 + $0x88] sm:$0xff]
        %v781 = vlaneseq
        %v782 = vshrl.u32 %v781, 7
        %v783 = vsub.s32 2, %v782
        %v784 = vrot.slane %v683, %v783
        %v785 = vmul.f32 %v687, %v784
        %v786 = vmul.f32 %v688, %v784
        %v787 = vmul.f32 %v689, %v784
        %v788 = vmul.f32 %v690, %v784
        %v789 = vmul.f32 %v691, %v784
        %v790 = vmul.f32 %v692, %v784
        %v791 = vmul.f32 %v693, %v784
        %v792 = vmul.f32 %v694, %v784
        %v793 = vmul.f32 %v695, %v784
        %v794 = vmul.f32 %v696, %v784
        %v795 = vmul.f32 %v697, %v784
        %v796 = vmul.f32 %v698, %v784
        %v797 = vmul.f32 %v699, %v784
        %v798 = vmul.f32 %v700, %v784
        %v799 = vmul.f32 %v743, %v784
        %v800 = vmul.f32 %v780, %v784
        %v801 = vadd.f32 %v764, %v785
        %v802 = vadd.f32 %v765, %v786
        %v803 = vadd.f32 %v766, %v787
        %v804 = vadd.f32 %v767, %v788
        %v805 = vadd.f32 %v768, %v789
        %v806 = vadd.f32 %v769, %v790
        %v807 = vadd.f32 %v770, %v791
        %v808 = vadd.f32 %v771, %v792
        %v809 = vadd.f32 %v772, %v793
        %v810 = vadd.f32 %v773, %v794
        %v811 = vadd.f32 %v774, %v795
        %v812 = vadd.f32 %v775, %v796
        %v813 = vadd.f32 %v776, %v797
        %v814 = vadd.f32 %v777, %v798
        %v815 = vadd.f32 %v778, %v799
        %v816 = vadd.f32 %v779, %v800
        %v817 = vld [vmem:[#allocation2 + $0x90] sm:$0xff]
        %v818 = vlaneseq
        %v819 = vshrl.u32 %v818, 7
        %v820 = vsub.s32 3, %v819
        %v821 = vrot.slane %v683, %v820
        %v822 = vmul.f32 %v688, %v821
        %v823 = vmul.f32 %v689, %v821
        %v824 = vmul.f32 %v690, %v821
        %v825 = vmul.f32 %v691, %v821
        %v826 = vmul.f32 %v692, %v821
        %v827 = vmul.f32 %v693, %v821
        %v828 = vmul.f32 %v694, %v821
        %v829 = vmul.f32 %v695, %v821
        %v830 = vmul.f32 %v696, %v821
        %v831 = vmul.f32 %v697, %v821
        %v832 = vmul.f32 %v698, %v821
        %v833 = vmul.f32 %v699, %v821
        %v834 = vmul.f32 %v700, %v821
        %v835 = vmul.f32 %v743, %v821
        %v836 = vmul.f32 %v780, %v821
        %v837 = vmul.f32 %v817, %v821
        %v838 = vadd.f32 %v801, %v822
        %v839 = vadd.f32 %v802, %v823
        %v840 = vadd.f32 %v803, %v824
        %v841 = vadd.f32 %v804, %v825
        %v842 = vadd.f32 %v805, %v826
        %v843 = vadd.f32 %v806, %v827
        %v844 = vadd.f32 %v807, %v828
        %v845 = vadd.f32 %v808, %v829
        %v846 = vadd.f32 %v809, %v830
        %v847 = vadd.f32 %v810, %v831
        %v848 = vadd.f32 %v811, %v832
        %v849 = vadd.f32 %v812, %v833
        %v850 = vadd.f32 %v813, %v834
        %v851 = vadd.f32 %v814, %v835
        %v852 = vadd.f32 %v815, %v836
        %v853 = vadd.f32 %v816, %v837
        %v854 = vsub.f32 0.0, %v838
        %v855 = vsub.f32 0.0, %v839
        %v856 = vsub.f32 0.0, %v840
        %v857 = vsub.f32 0.0, %v841
        %v858 = vsub.f32 0.0, %v842
        %v859 = vsub.f32 0.0, %v843
        %v860 = vsub.f32 0.0, %v844
        %v861 = vsub.f32 0.0, %v845
        %v862 = vsub.f32 0.0, %v846
        %v863 = vsub.f32 0.0, %v847
        %v864 = vsub.f32 0.0, %v848
        %v865 = vsub.f32 0.0, %v849
        %v866 = vsub.f32 0.0, %v850
        %v867 = vsub.f32 0.0, %v851
        %v868 = vsub.f32 0.0, %v852
        %v869 = vsub.f32 0.0, %v853
        %v870 = vmul.f32 %v854, 1.442695
        %v871 = vpow.pop %v870
        %v872 = vmul.f32 %v855, 1.442695
        %v873 = vpow.pop %v872
        %v874 = vmul.f32 %v856, 1.442695
        %v875 = vpow.pop %v874
        %v876 = vmul.f32 %v857, 1.442695
        %v877 = vpow.pop %v876
        %v878 = vmul.f32 %v858, 1.442695
        %v879 = vpow.pop %v878
        %v880 = vmul.f32 %v859, 1.442695
        %v881 = vpow.pop %v880
        %v882 = vmul.f32 %v860, 1.442695
        %v883 = vpow.pop %v882
        %v884 = vmul.f32 %v861, 1.442695
        %v885 = vpow.pop %v884
        %v886 = vmul.f32 %v862, 1.442695
        %v887 = vpow.pop %v886
        %v888 = vmul.f32 %v863, 1.442695
        %v889 = vpow.pop %v888
        %v890 = vmul.f32 %v864, 1.442695
        %v891 = vpow.pop %v890
        %v892 = vmul.f32 %v865, 1.442695
        %v893 = vpow.pop %v892
        %v894 = vmul.f32 %v866, 1.442695
        %v895 = vpow.pop %v894
        %v896 = vmul.f32 %v867, 1.442695
        %v897 = vpow.pop %v896
        %v898 = vmul.f32 %v868, 1.442695
        %v899 = vpow.pop %v898
        %v900 = vmul.f32 %v869, 1.442695
        %v901 = vpow.pop %v900
        %v902 = vadd.f32 %v871, 1.0
        %v903 = vadd.f32 %v873, 1.0
        %v904 = vadd.f32 %v875, 1.0
        %v905 = vadd.f32 %v877, 1.0
        %v906 = vadd.f32 %v879, 1.0
        %v907 = vadd.f32 %v881, 1.0
        %v908 = vadd.f32 %v883, 1.0
        %v909 = vadd.f32 %v885, 1.0
        %v910 = vadd.f32 %v887, 1.0
        %v911 = vadd.f32 %v889, 1.0
        %v912 = vadd.f32 %v891, 1.0
        %v913 = vadd.f32 %v893, 1.0
        %v914 = vadd.f32 %v895, 1.0
        %v915 = vadd.f32 %v897, 1.0
        %v916 = vadd.f32 %v899, 1.0
        %v917 = vadd.f32 %v901, 1.0
        %v918 = vrcp.pop %v902
        %v919 = vmul.f32 1.0, %v918
        %v920 = vrcp.pop %v903
        %v921 = vmul.f32 1.0, %v920
        %v922 = vrcp.pop %v904
        %v923 = vmul.f32 1.0, %v922
        %v924 = vrcp.pop %v905
        %v925 = vmul.f32 1.0, %v924
        %v926 = vrcp.pop %v906
        %v927 = vmul.f32 1.0, %v926
        %v928 = vrcp.pop %v907
        %v929 = vmul.f32 1.0, %v928
        %v930 = vrcp.pop %v908
        %v931 = vmul.f32 1.0, %v930
        %v932 = vrcp.pop %v909
        %v933 = vmul.f32 1.0, %v932
        %v934 = vrcp.pop %v910
        %v935 = vmul.f32 1.0, %v934
        %v936 = vrcp.pop %v911
        %v937 = vmul.f32 1.0, %v936
        %v938 = vrcp.pop %v912
        %v939 = vmul.f32 1.0, %v938
        %v940 = vrcp.pop %v913
        %v941 = vmul.f32 1.0, %v940
        %v942 = vrcp.pop %v914
        %v943 = vmul.f32 1.0, %v942
        %v944 = vrcp.pop %v915
        %v945 = vmul.f32 1.0, %v944
        %v946 = vrcp.pop %v916
        %v947 = vmul.f32 1.0, %v946
        %v948 = vrcp.pop %v917
        %v949 = vmul.f32 1.0, %v948
        %v950 = vmul.f32 %v838, %v919
        %v951 = vmul.f32 %v839, %v921
        %v952 = vmul.f32 %v840, %v923
        %v953 = vmul.f32 %v841, %v925
        %v954 = vmul.f32 %v842, %v927
        %v955 = vmul.f32 %v843, %v929
        %v956 = vmul.f32 %v844, %v931
        %v957 = vmul.f32 %v845, %v933
        %v958 = vmul.f32 %v846, %v935
        %v959 = vmul.f32 %v847, %v937
        %v960 = vmul.f32 %v848, %v939
        %v961 = vmul.f32 %v849, %v941
        %v962 = vmul.f32 %v850, %v943
        %v963 = vmul.f32 %v851, %v945
        %v964 = vmul.f32 %v852, %v947
        %v965 = vmul.f32 %v853, %v949
        %v966 = vld [vmem:[%s4] sm:$0xff]
        %v967 = vld [vmem:[%s4 + $0x8] sm:$0xff]
        %v968 = vld [vmem:[%s4 + $0x10] sm:$0xff]
        %v969 = vld [vmem:[%s4 + $0x18] sm:$0xff]
        %v970 = vld [vmem:[%s4 + $0x20] sm:$0xff]
        %v971 = vld [vmem:[%s4 + $0x28] sm:$0xff]
        %v972 = vld [vmem:[%s4 + $0x30] sm:$0xff]
        %v973 = vld [vmem:[%s4 + $0x38] sm:$0xff]
        %v974 = vld [vmem:[%s4 + $0x40] sm:$0xff]
        %v975 = vld [vmem:[%s4 + $0x48] sm:$0xff]
        %v976 = vld [vmem:[%s4 + $0x50] sm:$0xff]
        %v977 = vld [vmem:[%s4 + $0x58] sm:$0xff]
        %v978 = vld [vmem:[%s4 + $0x60] sm:$0xff]
        %v979 = vld [vmem:[%s4 + $0x68] sm:$0xff]
        %v980 = vld [vmem:[%s4 + $0x70] sm:$0xff]
        %v981 = vld [vmem:[%s4 + $0x78] sm:$0xff]
        %v982 = vld [vmem:[%s4 + $0x80] sm:$0xff]
        %v983 = vld [vmem:[%s4 + $0x88] sm:$0xff]
        %v984 = vld [vmem:[%s4 + $0x90] sm:$0xff]
        %v985 = vld [vmem:[%s4 + $0x98] sm:$0xff]
        %v986 = vld [vmem:[%s4 + $0xa0] sm:$0xff]
        %v987 = vld [vmem:[%s4 + $0xa8] sm:$0xff]
        %v988 = vld [vmem:[%s4 + $0xb0] sm:$0xff]
        %v989 = vld [vmem:[%s4 + $0xb8] sm:$0xff]
        %v990 = vld [vmem:[%s4 + $0xc0] sm:$0xff]
        %v991 = vld [vmem:[%s4 + $0xc8] sm:$0xff]
        %v992 = vld [vmem:[%s4 + $0xd0] sm:$0xff]
        %v993 = vld [vmem:[%s4 + $0xd8] sm:$0xff]
        %v994 = vld [vmem:[%s4 + $0xe0] sm:$0xff]
        %v995 = vld [vmem:[%s4 + $0xe8] sm:$0xff]
        %v996 = vld [vmem:[%s4 + $0xf0] sm:$0xff]
        %v997 = vld [vmem:[%s4 + $0xf8] sm:$0xff]
        %v998 = vld [vmem:[%s4 + $0x100] sm:$0xff]
        %v999 = vld [vmem:[%s4 + $0x108] sm:$0xff]
        %v1000 = vld [vmem:[%s4 + $0x110] sm:$0xff]
        %v1001 = vld [vmem:[%s4 + $0x118] sm:$0xff]
        %v1002 = vld [vmem:[%s4 + $0x120] sm:$0xff]
        %v1003 = vld [vmem:[%s4 + $0x128] sm:$0xff]
        %v1004 = vld [vmem:[%s4 + $0x130] sm:$0xff]
        %v1005 = vld [vmem:[%s4 + $0x138] sm:$0xff]
        %v1006 = vld [vmem:[%s4 + $0x140] sm:$0xff]
        %v1007 = vld [vmem:[%s4 + $0x148] sm:$0xff]
        %v1008 = vld [vmem:[%s4 + $0x150] sm:$0xff]
        %v1009 = vld [vmem:[%s4 + $0x158] sm:$0xff]
        %v1010 = vld [vmem:[%s4 + $0x160] sm:$0xff]
        %v1011 = vld [vmem:[%s4 + $0x168] sm:$0xff]
        %v1012 = vld [vmem:[%s4 + $0x170] sm:$0xff]
        %v1013 = vld [vmem:[%s4 + $0x178] sm:$0xff]
        %v1014 = vld [vmem:[%s4 + $0x180] sm:$0xff]
        %v1015 = vld [vmem:[%s4 + $0x188] sm:$0xff]
        %v1016 = vld [vmem:[%s4 + $0x190] sm:$0xff]
        %v1017 = vld [vmem:[%s4 + $0x198] sm:$0xff]
        %v1018 = vld [vmem:[%s4 + $0x1a0] sm:$0xff]
        %v1019 = vld [vmem:[%s4 + $0x1a8] sm:$0xff]
        %v1020 = vld [vmem:[%s4 + $0x1b0] sm:$0xff]
        %v1021 = vld [vmem:[%s4 + $0x1b8] sm:$0xff]
        %v1022 = vld [vmem:[%s4 + $0x1c0] sm:$0xff]
        %v1023 = vld [vmem:[%s4 + $0x1c8] sm:$0xff]
        %v1024 = vld [vmem:[%s4 + $0x1d0] sm:$0xff]
        %v1025 = vld [vmem:[%s4 + $0x1d8] sm:$0xff]
        %v1026 = vld [vmem:[%s4 + $0x1e0] sm:$0xff]
        %v1027 = vld [vmem:[%s4 + $0x1e8] sm:$0xff]
        %v1028 = vld [vmem:[%s4 + $0x1f0] sm:$0xff]
        %v1029 = vld [vmem:[%s4 + $0x1f8] sm:$0xff]
        %v1030 = vld [vmem:[%s4 + $0x200] sm:$0xff]
        %v1031 = vld [vmem:[%s4 + $0x208] sm:$0xff]
        %v1032 = vld [vmem:[%s4 + $0x210] sm:$0xff]
        %v1033 = vld [vmem:[%s4 + $0x218] sm:$0xff]
        %v1034 = vld [vmem:[%s4 + $0x220] sm:$0xff]
        %v1035 = vld [vmem:[%s4 + $0x228] sm:$0xff]
        %v1036 = vld [vmem:[%s4 + $0x230] sm:$0xff]
        %v1037 = vld [vmem:[%s4 + $0x238] sm:$0xff]
        %v1038 = vld [vmem:[%s5] sm:$0xff]
        %v1039 = vld [vmem:[%s5 + $0x8] sm:$0x1]
        %v1042 = vlaneseq
        %v1043 = vshrl.u32 %v1042, 7
        %v1044 = vsub.s32 0, %v1043
        %v1045 = vrot.slane %v1038, %v1044
        %v1046 = vlaneseq
        %v1047 = vshrl.u32 %v1046, 7
        %v1048 = vsub.s32 1, %v1047
        %v1049 = vrot.slane %v1038, %v1048
        %v1050 = vlaneseq
        %v1051 = vshrl.u32 %v1050, 7
        %v1052 = vsub.s32 2, %v1051
        %v1053 = vrot.slane %v1038, %v1052
        %v1054 = vlaneseq
        %v1055 = vshrl.u32 %v1054, 7
        %v1056 = vsub.s32 3, %v1055
        %v1057 = vrot.slane %v1038, %v1056
        %v1058 = vlaneseq
        %v1059 = vshrl.u32 %v1058, 7
        %v1060 = vsub.s32 4, %v1059
        %v1061 = vrot.slane %v1038, %v1060
        %v1062 = vlaneseq
        %v1063 = vshrl.u32 %v1062, 7
        %v1064 = vsub.s32 5, %v1063
        %v1065 = vrot.slane %v1038, %v1064
        %v1066 = vlaneseq
        %v1067 = vshrl.u32 %v1066, 7
        %v1068 = vsub.s32 6, %v1067
        %v1069 = vrot.slane %v1038, %v1068
        %v1070 = vlaneseq
        %v1071 = vshrl.u32 %v1070, 7
        %v1072 = vsub.s32 7, %v1071
        %v1073 = vrot.slane %v1038, %v1072
        %v1074 = vlaneseq
        %v1075 = vshrl.u32 %v1074, 7
        %v1076 = vsub.s32 0, %v1075
        %v1077 = vrot.slane %v1039, %v1076
        %v1088 = vsel %vm663, %v950, 0
        %v1091 = vsel %vm663, %v951, 0
        %v1094 = vsel %vm663, %v952, 0
        %v1097 = vsel %vm663, %v953, 0
        %v1100 = vsel %vm663, %v954, 0
        %v1103 = vsel %vm663, %v955, 0
        %v1106 = vsel %vm663, %v956, 0
        %v1109 = vsel %vm663, %v957, 0
        %v1112 = vsel %vm663, %v958, 0
        %v1115 = vsel %vm663, %v959, 0
        %v1118 = vsel %vm663, %v960, 0
        %v1121 = vsel %vm663, %v961, 0
        %v1124 = vsel %vm663, %v962, 0
        %v1127 = vsel %vm663, %v963, 0
        %v1130 = vsel %vm663, %v964, 0
        %v1133 = vsel %vm663, %v965, 0
        %1135 = vmatprep.subr.mxu0 0.0
        %1136 = vmatpush1.msra.mxu0 0.0
        %1137 = vmatprep.subr.mxu0 0.0
        %1138 = vmatpush1.msra.mxu0 0.0
        %1139 = vmatprep.subr.mxu0 0.0
        %1140 = vmatpush1.msra.mxu0 0.0
        %1141 = vmatprep.subr.mxu0 0.0
        %1142 = vmatpush1.msra.mxu0 0.0
        %1143 = vmatprep.subr.mxu0 0.0
        %1144 = vmatpush1.msra.mxu0 0.0
        %1145 = vmatprep.subr.mxu0 0.0
        %1146 = vmatpush1.msra.mxu0 0.0
        %1147 = vmatprep.subr.mxu0 0.0
        %1148 = vmatpush1.msra.mxu0 0.0
        %1149 = vmatprep.subr.mxu0 0.0
        %1150 = vmatpush1.msra.mxu0 0.0
        %1151 = vmatprep.subr.mxu0 %v1030
        %1152 = vmatpush1.msra.mxu0 %v1029
        %1153 = vmatprep.subr.mxu0 %v1021
        %1154 = vmatpush1.msra.mxu0 %v1020
        %1155 = vmatprep.subr.mxu0 %v1012
        %1156 = vmatpush1.msra.mxu0 %v1011
        %1157 = vmatprep.subr.mxu0 %v1003
        %1158 = vmatpush1.msra.mxu0 %v1002
        %1159 = vmatprep.subr.mxu0 %v994
        %1160 = vmatpush1.msra.mxu0 %v993
        %1161 = vmatprep.subr.mxu0 %v985
        %1162 = vmatpush1.msra.mxu0 %v984
        %1163 = vmatprep.subr.mxu0 %v976
        %1164 = vmatpush1.msra.mxu0 %v975
        %1165 = vmatprep.subr.mxu0 %v967
        %1166 = vmatpush1.msra.mxu0 %v966
        %1167 = vmatprep.subr.mxu0 0.0
        %1168 = vmatpush2.msra.mxu0 0.0
        %1169 = vmatprep.subr.mxu0 0.0
        %1170 = vmatpush2.msra.mxu0 0.0
        %1171 = vmatprep.subr.mxu0 0.0
        %1172 = vmatpush2.msra.mxu0 0.0
        %1173 = vmatprep.subr.mxu0 0.0
        %1174 = vmatpush2.msra.mxu0 0.0
        %1175 = vmatprep.subr.mxu0 0.0
        %1176 = vmatpush2.msra.mxu0 0.0
        %1177 = vmatprep.subr.mxu0 0.0
        %1178 = vmatpush2.msra.mxu0 0.0
        %1179 = vmatprep.subr.mxu0 0.0
        %1180 = vmatpush2.msra.mxu0 0.0
        %1181 = vmatprep.subr.mxu0 0.0
        %1182 = vmatpush2.msra.mxu0 0.0
        %1183 = vmatprep.subr.mxu0 0.0
        %1184 = vmatpush2.msra.mxu0 0.0
        %1185 = vmatprep.subr.mxu0 0.0
        %1186 = vmatpush2.msra.mxu0 0.0
        %1187 = vmatprep.subr.mxu0 0.0
        %1188 = vmatpush2.msra.mxu0 0.0
        %1189 = vmatprep.subr.mxu0 0.0
        %1190 = vmatpush2.msra.mxu0 0.0
        %1191 = vmatprep.subr.mxu0 0.0
        %1192 = vmatpush2.msra.mxu0 0.0
        %1193 = vmatprep.subr.mxu0 0.0
        %1194 = vmatpush2.msra.mxu0 0.0
        %1195 = vmatprep.subr.mxu0 0.0
        %1196 = vmatpush2.msra.mxu0 0.0
        %1197 = vmatprep.subr.mxu0 0.0
        %1198 = vmatpush2.msra.mxu0 0.0
        %1199 = vmatprep.mubr.f32.mxu0 0.0
        %1200 = vmatmul.mubr.f32.gmra.mxu0 %v1088
        %v1201 = vpop.f32.mrf.mxu0
        %v1202 = vadd.f32 %v1045, %v1201
        %v1203 = vpop.f32.mrf.mxu0
        %v1204 = vadd.f32 %v1049, %v1203
        %1205 = vmatprep.mubr.f32.mxu0 0.0
        %1206 = vmatmul.mubr.f32.gmra.mxu0 %v1091
        %v1207 = vpop.f32.mrf.mxu0
        %v1208 = vadd.f32 %v1045, %v1207
        %v1209 = vpop.f32.mrf.mxu0
        %v1210 = vadd.f32 %v1049, %v1209
        %1211 = vmatprep.mubr.f32.mxu0 0.0
        %1212 = vmatmul.mubr.f32.gmra.mxu0 %v1094
        %v1213 = vpop.f32.mrf.mxu0
        %v1214 = vadd.f32 %v1045, %v1213
        %v1215 = vpop.f32.mrf.mxu0
        %v1216 = vadd.f32 %v1049, %v1215
        %1217 = vmatprep.mubr.f32.mxu0 0.0
        %1218 = vmatmul.mubr.f32.gmra.mxu0 %v1097
        %v1219 = vpop.f32.mrf.mxu0
        %v1220 = vadd.f32 %v1045, %v1219
        %v1221 = vpop.f32.mrf.mxu0
        %v1222 = vadd.f32 %v1049, %v1221
        %1223 = vmatprep.mubr.f32.mxu0 0.0
        %1224 = vmatmul.mubr.f32.gmra.mxu0 %v1100
        %v1225 = vpop.f32.mrf.mxu0
        %v1226 = vadd.f32 %v1045, %v1225
        %v1227 = vpop.f32.mrf.mxu0
        %v1228 = vadd.f32 %v1049, %v1227
        %1229 = vmatprep.mubr.f32.mxu0 0.0
        %1230 = vmatmul.mubr.f32.gmra.mxu0 %v1103
        %v1231 = vpop.f32.mrf.mxu0
        %v1232 = vadd.f32 %v1045, %v1231
        %v1233 = vpop.f32.mrf.mxu0
        %v1234 = vadd.f32 %v1049, %v1233
        %1235 = vmatprep.mubr.f32.mxu0 0.0
        %1236 = vmatmul.mubr.f32.gmra.mxu0 %v1106
        %v1237 = vpop.f32.mrf.mxu0
        %v1238 = vadd.f32 %v1045, %v1237
        %v1239 = vpop.f32.mrf.mxu0
        %v1240 = vadd.f32 %v1049, %v1239
        %1241 = vmatprep.mubr.f32.mxu0 0.0
        %1242 = vmatmul.mubr.f32.gmra.mxu0 %v1109
        %v1243 = vpop.f32.mrf.mxu0
        %v1244 = vadd.f32 %v1045, %v1243
        %v1245 = vpop.f32.mrf.mxu0
        %v1246 = vadd.f32 %v1049, %v1245
        %1247 = vmatprep.mubr.f32.mxu0 0.0
        %1248 = vmatmul.mubr.f32.gmra.mxu0 %v1112
        %v1249 = vpop.f32.mrf.mxu0
        %v1250 = vadd.f32 %v1045, %v1249
        %v1251 = vpop.f32.mrf.mxu0
        %v1252 = vadd.f32 %v1049, %v1251
        %1253 = vmatprep.mubr.f32.mxu0 0.0
        %1254 = vmatmul.mubr.f32.gmra.mxu0 %v1115
        %v1255 = vpop.f32.mrf.mxu0
        %v1256 = vadd.f32 %v1045, %v1255
        %v1257 = vpop.f32.mrf.mxu0
        %v1258 = vadd.f32 %v1049, %v1257
        %1259 = vmatprep.mubr.f32.mxu0 0.0
        %1260 = vmatmul.mubr.f32.gmra.mxu0 %v1118
        %v1261 = vpop.f32.mrf.mxu0
        %v1262 = vadd.f32 %v1045, %v1261
        %v1263 = vpop.f32.mrf.mxu0
        %v1264 = vadd.f32 %v1049, %v1263
        %1265 = vmatprep.mubr.f32.mxu0 0.0
        %1266 = vmatmul.mubr.f32.gmra.mxu0 %v1121
        %v1267 = vpop.f32.mrf.mxu0
        %v1268 = vadd.f32 %v1045, %v1267
        %v1269 = vpop.f32.mrf.mxu0
        %v1270 = vadd.f32 %v1049, %v1269
        %1271 = vmatprep.mubr.f32.mxu0 0.0
        %1272 = vmatmul.mubr.f32.gmra.mxu0 %v1124
        %v1273 = vpop.f32.mrf.mxu0
        %v1274 = vadd.f32 %v1045, %v1273
        %v1275 = vpop.f32.mrf.mxu0
        %v1276 = vadd.f32 %v1049, %v1275
        %1277 = vmatprep.mubr.f32.mxu0 0.0
        %1278 = vmatmul.mubr.f32.gmra.mxu0 %v1127
        %v1279 = vpop.f32.mrf.mxu0
        %v1280 = vadd.f32 %v1045, %v1279
        %v1281 = vpop.f32.mrf.mxu0
        %v1282 = vadd.f32 %v1049, %v1281
        %1283 = vmatprep.mubr.f32.mxu0 0.0
        %1284 = vmatmul.mubr.f32.gmra.mxu0 %v1130
        %v1285 = vpop.f32.mrf.mxu0
        %v1286 = vadd.f32 %v1045, %v1285
        %v1287 = vpop.f32.mrf.mxu0
        %v1288 = vadd.f32 %v1049, %v1287
        %1289 = vmatprep.mubr.f32.mxu0 0.0
        %1290 = vmatmul.mubr.f32.gmra.mxu0 %v1133
        %v1291 = vpop.f32.mrf.mxu0
        %v1292 = vadd.f32 %v1045, %v1291
        %v1293 = vpop.f32.mrf.mxu0
        %v1294 = vadd.f32 %v1049, %v1293
        %1295 = vdwg.mxu0
        %1296 = vmatprep.subr.mxu0 0.0
        %1297 = vmatpush1.msra.mxu0 0.0
        %1298 = vmatprep.subr.mxu0 0.0
        %1299 = vmatpush1.msra.mxu0 0.0
        %1300 = vmatprep.subr.mxu0 0.0
        %1301 = vmatpush1.msra.mxu0 0.0
        %1302 = vmatprep.subr.mxu0 0.0
        %1303 = vmatpush1.msra.mxu0 0.0
        %1304 = vmatprep.subr.mxu0 0.0
        %1305 = vmatpush1.msra.mxu0 0.0
        %1306 = vmatprep.subr.mxu0 0.0
        %1307 = vmatpush1.msra.mxu0 0.0
        %1308 = vmatprep.subr.mxu0 0.0
        %1309 = vmatpush1.msra.mxu0 0.0
        %1310 = vmatprep.subr.mxu0 0.0
        %1311 = vmatpush1.msra.mxu0 0.0
        %1312 = vmatprep.subr.mxu0 %v1032
        %1313 = vmatpush1.msra.mxu0 %v1031
        %1314 = vmatprep.subr.mxu0 %v1023
        %1315 = vmatpush1.msra.mxu0 %v1022
        %1316 = vmatprep.subr.mxu0 %v1014
        %1317 = vmatpush1.msra.mxu0 %v1013
        %1318 = vmatprep.subr.mxu0 %v1005
        %1319 = vmatpush1.msra.mxu0 %v1004
        %1320 = vmatprep.subr.mxu0 %v996
        %1321 = vmatpush1.msra.mxu0 %v995
        %1322 = vmatprep.subr.mxu0 %v987
        %1323 = vmatpush1.msra.mxu0 %v986
        %1324 = vmatprep.subr.mxu0 %v978
        %1325 = vmatpush1.msra.mxu0 %v977
        %1326 = vmatprep.subr.mxu0 %v969
        %1327 = vmatpush1.msra.mxu0 %v968
        %1328 = vmatprep.subr.mxu0 0.0
        %1329 = vmatpush2.msra.mxu0 0.0
        %1330 = vmatprep.subr.mxu0 0.0
        %1331 = vmatpush2.msra.mxu0 0.0
        %1332 = vmatprep.subr.mxu0 0.0
        %1333 = vmatpush2.msra.mxu0 0.0
        %1334 = vmatprep.subr.mxu0 0.0
        %1335 = vmatpush2.msra.mxu0 0.0
        %1336 = vmatprep.subr.mxu0 0.0
        %1337 = vmatpush2.msra.mxu0 0.0
        %1338 = vmatprep.subr.mxu0 0.0
        %1339 = vmatpush2.msra.mxu0 0.0
        %1340 = vmatprep.subr.mxu0 0.0
        %1341 = vmatpush2.msra.mxu0 0.0
        %1342 = vmatprep.subr.mxu0 0.0
        %1343 = vmatpush2.msra.mxu0 0.0
        %1344 = vmatprep.subr.mxu0 0.0
        %1345 = vmatpush2.msra.mxu0 0.0
        %1346 = vmatprep.subr.mxu0 0.0
        %1347 = vmatpush2.msra.mxu0 0.0
        %1348 = vmatprep.subr.mxu0 0.0
        %1349 = vmatpush2.msra.mxu0 0.0
        %1350 = vmatprep.subr.mxu0 0.0
        %1351 = vmatpush2.msra.mxu0 0.0
        %1352 = vmatprep.subr.mxu0 0.0
        %1353 = vmatpush2.msra.mxu0 0.0
        %1354 = vmatprep.subr.mxu0 0.0
        %1355 = vmatpush2.msra.mxu0 0.0
        %1356 = vmatprep.subr.mxu0 0.0
        %1357 = vmatpush2.msra.mxu0 0.0
        %1358 = vmatprep.subr.mxu0 0.0
        %1359 = vmatpush2.msra.mxu0 0.0
        %1360 = vmatprep.mubr.f32.mxu0 0.0
        %1361 = vmatmul.mubr.f32.gmra.mxu0 %v1088
        %v1362 = vpop.f32.mrf.mxu0
        %v1363 = vadd.f32 %v1053, %v1362
        %v1364 = vpop.f32.mrf.mxu0
        %v1365 = vadd.f32 %v1057, %v1364
        %1366 = vmatprep.mubr.f32.mxu0 0.0
        %1367 = vmatmul.mubr.f32.gmra.mxu0 %v1091
        %v1368 = vpop.f32.mrf.mxu0
        %v1369 = vadd.f32 %v1053, %v1368
        %v1370 = vpop.f32.mrf.mxu0
        %v1371 = vadd.f32 %v1057, %v1370
        %1372 = vmatprep.mubr.f32.mxu0 0.0
        %1373 = vmatmul.mubr.f32.gmra.mxu0 %v1094
        %v1374 = vpop.f32.mrf.mxu0
        %v1375 = vadd.f32 %v1053, %v1374
        %v1376 = vpop.f32.mrf.mxu0
        %v1377 = vadd.f32 %v1057, %v1376
        %1378 = vmatprep.mubr.f32.mxu0 0.0
        %1379 = vmatmul.mubr.f32.gmra.mxu0 %v1097
        %v1380 = vpop.f32.mrf.mxu0
        %v1381 = vadd.f32 %v1053, %v1380
        %v1382 = vpop.f32.mrf.mxu0
        %v1383 = vadd.f32 %v1057, %v1382
        %1384 = vmatprep.mubr.f32.mxu0 0.0
        %1385 = vmatmul.mubr.f32.gmra.mxu0 %v1100
        %v1386 = vpop.f32.mrf.mxu0
        %v1387 = vadd.f32 %v1053, %v1386
        %v1388 = vpop.f32.mrf.mxu0
        %v1389 = vadd.f32 %v1057, %v1388
        %1390 = vmatprep.mubr.f32.mxu0 0.0
        %1391 = vmatmul.mubr.f32.gmra.mxu0 %v1103
        %v1392 = vpop.f32.mrf.mxu0
        %v1393 = vadd.f32 %v1053, %v1392
        %v1394 = vpop.f32.mrf.mxu0
        %v1395 = vadd.f32 %v1057, %v1394
        %1396 = vmatprep.mubr.f32.mxu0 0.0
        %1397 = vmatmul.mubr.f32.gmra.mxu0 %v1106
        %v1398 = vpop.f32.mrf.mxu0
        %v1399 = vadd.f32 %v1053, %v1398
        %v1400 = vpop.f32.mrf.mxu0
        %v1401 = vadd.f32 %v1057, %v1400
        %1402 = vmatprep.mubr.f32.mxu0 0.0
        %1403 = vmatmul.mubr.f32.gmra.mxu0 %v1109
        %v1404 = vpop.f32.mrf.mxu0
        %v1405 = vadd.f32 %v1053, %v1404
        %v1406 = vpop.f32.mrf.mxu0
        %v1407 = vadd.f32 %v1057, %v1406
        %1408 = vmatprep.mubr.f32.mxu0 0.0
        %1409 = vmatmul.mubr.f32.gmra.mxu0 %v1112
        %v1410 = vpop.f32.mrf.mxu0
        %v1411 = vadd.f32 %v1053, %v1410
        %v1412 = vpop.f32.mrf.mxu0
        %v1413 = vadd.f32 %v1057, %v1412
        %1414 = vmatprep.mubr.f32.mxu0 0.0
        %1415 = vmatmul.mubr.f32.gmra.mxu0 %v1115
        %v1416 = vpop.f32.mrf.mxu0
        %v1417 = vadd.f32 %v1053, %v1416
        %v1418 = vpop.f32.mrf.mxu0
        %v1419 = vadd.f32 %v1057, %v1418
        %1420 = vmatprep.mubr.f32.mxu0 0.0
        %1421 = vmatmul.mubr.f32.gmra.mxu0 %v1118
        %v1422 = vpop.f32.mrf.mxu0
        %v1423 = vadd.f32 %v1053, %v1422
        %v1424 = vpop.f32.mrf.mxu0
        %v1425 = vadd.f32 %v1057, %v1424
        %1426 = vmatprep.mubr.f32.mxu0 0.0
        %1427 = vmatmul.mubr.f32.gmra.mxu0 %v1121
        %v1428 = vpop.f32.mrf.mxu0
        %v1429 = vadd.f32 %v1053, %v1428
        %v1430 = vpop.f32.mrf.mxu0
        %v1431 = vadd.f32 %v1057, %v1430
        %1432 = vmatprep.mubr.f32.mxu0 0.0
        %1433 = vmatmul.mubr.f32.gmra.mxu0 %v1124
        %v1434 = vpop.f32.mrf.mxu0
        %v1435 = vadd.f32 %v1053, %v1434
        %v1436 = vpop.f32.mrf.mxu0
        %v1437 = vadd.f32 %v1057, %v1436
        %1438 = vmatprep.mubr.f32.mxu0 0.0
        %1439 = vmatmul.mubr.f32.gmra.mxu0 %v1127
        %v1440 = vpop.f32.mrf.mxu0
        %v1441 = vadd.f32 %v1053, %v1440
        %v1442 = vpop.f32.mrf.mxu0
        %v1443 = vadd.f32 %v1057, %v1442
        %1444 = vmatprep.mubr.f32.mxu0 0.0
        %1445 = vmatmul.mubr.f32.gmra.mxu0 %v1130
        %v1446 = vpop.f32.mrf.mxu0
        %v1447 = vadd.f32 %v1053, %v1446
        %v1448 = vpop.f32.mrf.mxu0
        %v1449 = vadd.f32 %v1057, %v1448
        %1450 = vmatprep.mubr.f32.mxu0 0.0
        %1451 = vmatmul.mubr.f32.gmra.mxu0 %v1133
        %v1452 = vpop.f32.mrf.mxu0
        %v1453 = vadd.f32 %v1053, %v1452
        %v1454 = vpop.f32.mrf.mxu0
        %v1455 = vadd.f32 %v1057, %v1454
        %1456 = vdwg.mxu0
        %1457 = vmatprep.subr.mxu0 0.0
        %1458 = vmatpush1.msra.mxu0 0.0
        %1459 = vmatprep.subr.mxu0 0.0
        %1460 = vmatpush1.msra.mxu0 0.0
        %1461 = vmatprep.subr.mxu0 0.0
        %1462 = vmatpush1.msra.mxu0 0.0
        %1463 = vmatprep.subr.mxu0 0.0
        %1464 = vmatpush1.msra.mxu0 0.0
        %1465 = vmatprep.subr.mxu0 0.0
        %1466 = vmatpush1.msra.mxu0 0.0
        %1467 = vmatprep.subr.mxu0 0.0
        %1468 = vmatpush1.msra.mxu0 0.0
        %1469 = vmatprep.subr.mxu0 0.0
        %1470 = vmatpush1.msra.mxu0 0.0
        %1471 = vmatprep.subr.mxu0 0.0
        %1472 = vmatpush1.msra.mxu0 0.0
        %1473 = vmatprep.subr.mxu0 %v1034
        %1474 = vmatpush1.msra.mxu0 %v1033
        %1475 = vmatprep.subr.mxu0 %v1025
        %1476 = vmatpush1.msra.mxu0 %v1024
        %1477 = vmatprep.subr.mxu0 %v1016
        %1478 = vmatpush1.msra.mxu0 %v1015
        %1479 = vmatprep.subr.mxu0 %v1007
        %1480 = vmatpush1.msra.mxu0 %v1006
        %1481 = vmatprep.subr.mxu0 %v998
        %1482 = vmatpush1.msra.mxu0 %v997
        %1483 = vmatprep.subr.mxu0 %v989
        %1484 = vmatpush1.msra.mxu0 %v988
        %1485 = vmatprep.subr.mxu0 %v980
        %1486 = vmatpush1.msra.mxu0 %v979
        %1487 = vmatprep.subr.mxu0 %v971
        %1488 = vmatpush1.msra.mxu0 %v970
        %1489 = vmatprep.subr.mxu0 0.0
        %1490 = vmatpush2.msra.mxu0 0.0
        %1491 = vmatprep.subr.mxu0 0.0
        %1492 = vmatpush2.msra.mxu0 0.0
        %1493 = vmatprep.subr.mxu0 0.0
        %1494 = vmatpush2.msra.mxu0 0.0
        %1495 = vmatprep.subr.mxu0 0.0
        %1496 = vmatpush2.msra.mxu0 0.0
        %1497 = vmatprep.subr.mxu0 0.0
        %1498 = vmatpush2.msra.mxu0 0.0
        %1499 = vmatprep.subr.mxu0 0.0
        %1500 = vmatpush2.msra.mxu0 0.0
        %1501 = vmatprep.subr.mxu0 0.0
        %1502 = vmatpush2.msra.mxu0 0.0
        %1503 = vmatprep.subr.mxu0 0.0
        %1504 = vmatpush2.msra.mxu0 0.0
        %1505 = vmatprep.subr.mxu0 0.0
        %1506 = vmatpush2.msra.mxu0 0.0
        %1507 = vmatprep.subr.mxu0 0.0
        %1508 = vmatpush2.msra.mxu0 0.0
        %1509 = vmatprep.subr.mxu0 0.0
        %1510 = vmatpush2.msra.mxu0 0.0
        %1511 = vmatprep.subr.mxu0 0.0
        %1512 = vmatpush2.msra.mxu0 0.0
        %1513 = vmatprep.subr.mxu0 0.0
        %1514 = vmatpush2.msra.mxu0 0.0
        %1515 = vmatprep.subr.mxu0 0.0
        %1516 = vmatpush2.msra.mxu0 0.0
        %1517 = vmatprep.subr.mxu0 0.0
        %1518 = vmatpush2.msra.mxu0 0.0
        %1519 = vmatprep.subr.mxu0 0.0
        %1520 = vmatpush2.msra.mxu0 0.0
        %1521 = vmatprep.mubr.f32.mxu0 0.0
        %1522 = vmatmul.mubr.f32.gmra.mxu0 %v1088
        %v1523 = vpop.f32.mrf.mxu0
        %v1524 = vadd.f32 %v1061, %v1523
        %v1525 = vpop.f32.mrf.mxu0
        %v1526 = vadd.f32 %v1065, %v1525
        %1527 = vmatprep.mubr.f32.mxu0 0.0
        %1528 = vmatmul.mubr.f32.gmra.mxu0 %v1091
        %v1529 = vpop.f32.mrf.mxu0
        %v1530 = vadd.f32 %v1061, %v1529
        %v1531 = vpop.f32.mrf.mxu0
        %v1532 = vadd.f32 %v1065, %v1531
        %1533 = vmatprep.mubr.f32.mxu0 0.0
        %1534 = vmatmul.mubr.f32.gmra.mxu0 %v1094
        %v1535 = vpop.f32.mrf.mxu0
        %v1536 = vadd.f32 %v1061, %v1535
        %v1537 = vpop.f32.mrf.mxu0
        %v1538 = vadd.f32 %v1065, %v1537
        %1539 = vmatprep.mubr.f32.mxu0 0.0
        %1540 = vmatmul.mubr.f32.gmra.mxu0 %v1097
        %v1541 = vpop.f32.mrf.mxu0
        %v1542 = vadd.f32 %v1061, %v1541
        %v1543 = vpop.f32.mrf.mxu0
        %v1544 = vadd.f32 %v1065, %v1543
        %1545 = vmatprep.mubr.f32.mxu0 0.0
        %1546 = vmatmul.mubr.f32.gmra.mxu0 %v1100
        %v1547 = vpop.f32.mrf.mxu0
        %v1548 = vadd.f32 %v1061, %v1547
        %v1549 = vpop.f32.mrf.mxu0
        %v1550 = vadd.f32 %v1065, %v1549
        %1551 = vmatprep.mubr.f32.mxu0 0.0
        %1552 = vmatmul.mubr.f32.gmra.mxu0 %v1103
        %v1553 = vpop.f32.mrf.mxu0
        %v1554 = vadd.f32 %v1061, %v1553
        %v1555 = vpop.f32.mrf.mxu0
        %v1556 = vadd.f32 %v1065, %v1555
        %1557 = vmatprep.mubr.f32.mxu0 0.0
        %1558 = vmatmul.mubr.f32.gmra.mxu0 %v1106
        %v1559 = vpop.f32.mrf.mxu0
        %v1560 = vadd.f32 %v1061, %v1559
        %v1561 = vpop.f32.mrf.mxu0
        %v1562 = vadd.f32 %v1065, %v1561
        %1563 = vmatprep.mubr.f32.mxu0 0.0
        %1564 = vmatmul.mubr.f32.gmra.mxu0 %v1109
        %v1565 = vpop.f32.mrf.mxu0
        %v1566 = vadd.f32 %v1061, %v1565
        %v1567 = vpop.f32.mrf.mxu0
        %v1568 = vadd.f32 %v1065, %v1567
        %1569 = vmatprep.mubr.f32.mxu0 0.0
        %1570 = vmatmul.mubr.f32.gmra.mxu0 %v1112
        %v1571 = vpop.f32.mrf.mxu0
        %v1572 = vadd.f32 %v1061, %v1571
        %v1573 = vpop.f32.mrf.mxu0
        %v1574 = vadd.f32 %v1065, %v1573
        %1575 = vmatprep.mubr.f32.mxu0 0.0
        %1576 = vmatmul.mubr.f32.gmra.mxu0 %v1115
        %v1577 = vpop.f32.mrf.mxu0
        %v1578 = vadd.f32 %v1061, %v1577
        %v1579 = vpop.f32.mrf.mxu0
        %v1580 = vadd.f32 %v1065, %v1579
        %1581 = vmatprep.mubr.f32.mxu0 0.0
        %1582 = vmatmul.mubr.f32.gmra.mxu0 %v1118
        %v1583 = vpop.f32.mrf.mxu0
        %v1584 = vadd.f32 %v1061, %v1583
        %v1585 = vpop.f32.mrf.mxu0
        %v1586 = vadd.f32 %v1065, %v1585
        %1587 = vmatprep.mubr.f32.mxu0 0.0
        %1588 = vmatmul.mubr.f32.gmra.mxu0 %v1121
        %v1589 = vpop.f32.mrf.mxu0
        %v1590 = vadd.f32 %v1061, %v1589
        %v1591 = vpop.f32.mrf.mxu0
        %v1592 = vadd.f32 %v1065, %v1591
        %1593 = vmatprep.mubr.f32.mxu0 0.0
        %1594 = vmatmul.mubr.f32.gmra.mxu0 %v1124
        %v1595 = vpop.f32.mrf.mxu0
        %v1596 = vadd.f32 %v1061, %v1595
        %v1597 = vpop.f32.mrf.mxu0
        %v1598 = vadd.f32 %v1065, %v1597
        %1599 = vmatprep.mubr.f32.mxu0 0.0
        %1600 = vmatmul.mubr.f32.gmra.mxu0 %v1127
        %v1601 = vpop.f32.mrf.mxu0
        %v1602 = vadd.f32 %v1061, %v1601
        %v1603 = vpop.f32.mrf.mxu0
        %v1604 = vadd.f32 %v1065, %v1603
        %1605 = vmatprep.mubr.f32.mxu0 0.0
        %1606 = vmatmul.mubr.f32.gmra.mxu0 %v1130
        %v1607 = vpop.f32.mrf.mxu0
        %v1608 = vadd.f32 %v1061, %v1607
        %v1609 = vpop.f32.mrf.mxu0
        %v1610 = vadd.f32 %v1065, %v1609
        %1611 = vmatprep.mubr.f32.mxu0 0.0
        %1612 = vmatmul.mubr.f32.gmra.mxu0 %v1133
        %v1613 = vpop.f32.mrf.mxu0
        %v1614 = vadd.f32 %v1061, %v1613
        %v1615 = vpop.f32.mrf.mxu0
        %v1616 = vadd.f32 %v1065, %v1615
        %1617 = vdwg.mxu0
        %1618 = vmatprep.subr.mxu0 0.0
        %1619 = vmatpush1.msra.mxu0 0.0
        %1620 = vmatprep.subr.mxu0 0.0
        %1621 = vmatpush1.msra.mxu0 0.0
        %1622 = vmatprep.subr.mxu0 0.0
        %1623 = vmatpush1.msra.mxu0 0.0
        %1624 = vmatprep.subr.mxu0 0.0
        %1625 = vmatpush1.msra.mxu0 0.0
        %1626 = vmatprep.subr.mxu0 0.0
        %1627 = vmatpush1.msra.mxu0 0.0
        %1628 = vmatprep.subr.mxu0 0.0
        %1629 = vmatpush1.msra.mxu0 0.0
        %1630 = vmatprep.subr.mxu0 0.0
        %1631 = vmatpush1.msra.mxu0 0.0
        %1632 = vmatprep.subr.mxu0 0.0
        %1633 = vmatpush1.msra.mxu0 0.0
        %1634 = vmatprep.subr.mxu0 %v1036
        %1635 = vmatpush1.msra.mxu0 %v1035
        %1636 = vmatprep.subr.mxu0 %v1027
        %1637 = vmatpush1.msra.mxu0 %v1026
        %1638 = vmatprep.subr.mxu0 %v1018
        %1639 = vmatpush1.msra.mxu0 %v1017
        %1640 = vmatprep.subr.mxu0 %v1009
        %1641 = vmatpush1.msra.mxu0 %v1008
        %1642 = vmatprep.subr.mxu0 %v1000
        %1643 = vmatpush1.msra.mxu0 %v999
        %1644 = vmatprep.subr.mxu0 %v991
        %1645 = vmatpush1.msra.mxu0 %v990
        %1646 = vmatprep.subr.mxu0 %v982
        %1647 = vmatpush1.msra.mxu0 %v981
        %1648 = vmatprep.subr.mxu0 %v973
        %1649 = vmatpush1.msra.mxu0 %v972
        %1650 = vmatprep.subr.mxu0 0.0
        %1651 = vmatpush2.msra.mxu0 0.0
        %1652 = vmatprep.subr.mxu0 0.0
        %1653 = vmatpush2.msra.mxu0 0.0
        %1654 = vmatprep.subr.mxu0 0.0
        %1655 = vmatpush2.msra.mxu0 0.0
        %1656 = vmatprep.subr.mxu0 0.0
        %1657 = vmatpush2.msra.mxu0 0.0
        %1658 = vmatprep.subr.mxu0 0.0
        %1659 = vmatpush2.msra.mxu0 0.0
        %1660 = vmatprep.subr.mxu0 0.0
        %1661 = vmatpush2.msra.mxu0 0.0
        %1662 = vmatprep.subr.mxu0 0.0
        %1663 = vmatpush2.msra.mxu0 0.0
        %1664 = vmatprep.subr.mxu0 0.0
        %1665 = vmatpush2.msra.mxu0 0.0
        %1666 = vmatprep.subr.mxu0 0.0
        %1667 = vmatpush2.msra.mxu0 0.0
        %1668 = vmatprep.subr.mxu0 0.0
        %1669 = vmatpush2.msra.mxu0 0.0
        %1670 = vmatprep.subr.mxu0 0.0
        %1671 = vmatpush2.msra.mxu0 0.0
        %1672 = vmatprep.subr.mxu0 0.0
        %1673 = vmatpush2.msra.mxu0 0.0
        %1674 = vmatprep.subr.mxu0 0.0
        %1675 = vmatpush2.msra.mxu0 0.0
        %1676 = vmatprep.subr.mxu0 0.0
        %1677 = vmatpush2.msra.mxu0 0.0
        %1678 = vmatprep.subr.mxu0 0.0
        %1679 = vmatpush2.msra.mxu0 0.0
        %1680 = vmatprep.subr.mxu0 0.0
        %1681 = vmatpush2.msra.mxu0 0.0
        %1682 = vmatprep.mubr.f32.mxu0 0.0
        %1683 = vmatmul.mubr.f32.gmra.mxu0 %v1088
        %v1684 = vpop.f32.mrf.mxu0
        %v1685 = vadd.f32 %v1069, %v1684
        %v1686 = vpop.f32.mrf.mxu0
        %v1687 = vadd.f32 %v1073, %v1686
        %1688 = vmatprep.mubr.f32.mxu0 0.0
        %1689 = vmatmul.mubr.f32.gmra.mxu0 %v1091
        %v1690 = vpop.f32.mrf.mxu0
        %v1691 = vadd.f32 %v1069, %v1690
        %v1692 = vpop.f32.mrf.mxu0
        %v1693 = vadd.f32 %v1073, %v1692
        %1694 = vmatprep.mubr.f32.mxu0 0.0
        %1695 = vmatmul.mubr.f32.gmra.mxu0 %v1094
        %v1696 = vpop.f32.mrf.mxu0
        %v1697 = vadd.f32 %v1069, %v1696
        %v1698 = vpop.f32.mrf.mxu0
        %v1699 = vadd.f32 %v1073, %v1698
        %1700 = vmatprep.mubr.f32.mxu0 0.0
        %1701 = vmatmul.mubr.f32.gmra.mxu0 %v1097
        %v1702 = vpop.f32.mrf.mxu0
        %v1703 = vadd.f32 %v1069, %v1702
        %v1704 = vpop.f32.mrf.mxu0
        %v1705 = vadd.f32 %v1073, %v1704
        %1706 = vmatprep.mubr.f32.mxu0 0.0
        %1707 = vmatmul.mubr.f32.gmra.mxu0 %v1100
        %v1708 = vpop.f32.mrf.mxu0
        %v1709 = vadd.f32 %v1069, %v1708
        %v1710 = vpop.f32.mrf.mxu0
        %v1711 = vadd.f32 %v1073, %v1710
        %1712 = vmatprep.mubr.f32.mxu0 0.0
        %1713 = vmatmul.mubr.f32.gmra.mxu0 %v1103
        %v1714 = vpop.f32.mrf.mxu0
        %v1715 = vadd.f32 %v1069, %v1714
        %v1716 = vpop.f32.mrf.mxu0
        %v1717 = vadd.f32 %v1073, %v1716
        %1718 = vmatprep.mubr.f32.mxu0 0.0
        %1719 = vmatmul.mubr.f32.gmra.mxu0 %v1106
        %v1720 = vpop.f32.mrf.mxu0
        %v1721 = vadd.f32 %v1069, %v1720
        %v1722 = vpop.f32.mrf.mxu0
        %v1723 = vadd.f32 %v1073, %v1722
        %1724 = vmatprep.mubr.f32.mxu0 0.0
        %1725 = vmatmul.mubr.f32.gmra.mxu0 %v1109
        %v1726 = vpop.f32.mrf.mxu0
        %v1727 = vadd.f32 %v1069, %v1726
        %v1728 = vpop.f32.mrf.mxu0
        %v1729 = vadd.f32 %v1073, %v1728
        %1730 = vmatprep.mubr.f32.mxu0 0.0
        %1731 = vmatmul.mubr.f32.gmra.mxu0 %v1112
        %v1732 = vpop.f32.mrf.mxu0
        %v1733 = vadd.f32 %v1069, %v1732
        %v1734 = vpop.f32.mrf.mxu0
        %v1735 = vadd.f32 %v1073, %v1734
        %1736 = vmatprep.mubr.f32.mxu0 0.0
        %1737 = vmatmul.mubr.f32.gmra.mxu0 %v1115
        %v1738 = vpop.f32.mrf.mxu0
        %v1739 = vadd.f32 %v1069, %v1738
        %v1740 = vpop.f32.mrf.mxu0
        %v1741 = vadd.f32 %v1073, %v1740
        %1742 = vmatprep.mubr.f32.mxu0 0.0
        %1743 = vmatmul.mubr.f32.gmra.mxu0 %v1118
        %v1744 = vpop.f32.mrf.mxu0
        %v1745 = vadd.f32 %v1069, %v1744
        %v1746 = vpop.f32.mrf.mxu0
        %v1747 = vadd.f32 %v1073, %v1746
        %1748 = vmatprep.mubr.f32.mxu0 0.0
        %1749 = vmatmul.mubr.f32.gmra.mxu0 %v1121
        %v1750 = vpop.f32.mrf.mxu0
        %v1751 = vadd.f32 %v1069, %v1750
        %v1752 = vpop.f32.mrf.mxu0
        %v1753 = vadd.f32 %v1073, %v1752
        %1754 = vmatprep.mubr.f32.mxu0 0.0
        %1755 = vmatmul.mubr.f32.gmra.mxu0 %v1124
        %v1756 = vpop.f32.mrf.mxu0
        %v1757 = vadd.f32 %v1069, %v1756
        %v1758 = vpop.f32.mrf.mxu0
        %v1759 = vadd.f32 %v1073, %v1758
        %1760 = vmatprep.mubr.f32.mxu0 0.0
        %1761 = vmatmul.mubr.f32.gmra.mxu0 %v1127
        %v1762 = vpop.f32.mrf.mxu0
        %v1763 = vadd.f32 %v1069, %v1762
        %v1764 = vpop.f32.mrf.mxu0
        %v1765 = vadd.f32 %v1073, %v1764
        %1766 = vmatprep.mubr.f32.mxu0 0.0
        %1767 = vmatmul.mubr.f32.gmra.mxu0 %v1130
        %v1768 = vpop.f32.mrf.mxu0
        %v1769 = vadd.f32 %v1069, %v1768
        %v1770 = vpop.f32.mrf.mxu0
        %v1771 = vadd.f32 %v1073, %v1770
        %1772 = vmatprep.mubr.f32.mxu0 0.0
        %1773 = vmatmul.mubr.f32.gmra.mxu0 %v1133
        %v1774 = vpop.f32.mrf.mxu0
        %v1775 = vadd.f32 %v1069, %v1774
        %v1776 = vpop.f32.mrf.mxu0
        %v1777 = vadd.f32 %v1073, %v1776
        %1778 = vdwg.mxu0
        %1779 = vmatprep.subr.mxu0 0.0
        %1780 = vmatpush1.msra.mxu0 0.0
        %1781 = vmatprep.subr.mxu0 0.0
        %1782 = vmatpush1.msra.mxu0 0.0
        %1783 = vmatprep.subr.mxu0 0.0
        %1784 = vmatpush1.msra.mxu0 0.0
        %1785 = vmatprep.subr.mxu0 0.0
        %1786 = vmatpush1.msra.mxu0 0.0
        %1787 = vmatprep.subr.mxu0 0.0
        %1788 = vmatpush1.msra.mxu0 0.0
        %1789 = vmatprep.subr.mxu0 0.0
        %1790 = vmatpush1.msra.mxu0 0.0
        %1791 = vmatprep.subr.mxu0 0.0
        %1792 = vmatpush1.msra.mxu0 0.0
        %1793 = vmatprep.subr.mxu0 0.0
        %1794 = vmatpush1.msra.mxu0 0.0
        %1795 = vmatprep.subr.mxu0 0.0
        %1796 = vmatpush1.msra.mxu0 %v1037
        %1797 = vmatprep.subr.mxu0 0.0
        %1798 = vmatpush1.msra.mxu0 %v1028
        %1799 = vmatprep.subr.mxu0 0.0
        %1800 = vmatpush1.msra.mxu0 %v1019
        %1801 = vmatprep.subr.mxu0 0.0
        %1802 = vmatpush1.msra.mxu0 %v1010
        %1803 = vmatprep.subr.mxu0 0.0
        %1804 = vmatpush1.msra.mxu0 %v1001
        %1805 = vmatprep.subr.mxu0 0.0
        %1806 = vmatpush1.msra.mxu0 %v992
        %1807 = vmatprep.subr.mxu0 0.0
        %1808 = vmatpush1.msra.mxu0 %v983
        %1809 = vmatprep.subr.mxu0 0.0
        %1810 = vmatpush1.msra.mxu0 %v974
        %1811 = vmatprep.subr.mxu0 0.0
        %1812 = vmatpush2.msra.mxu0 0.0
        %1813 = vmatprep.subr.mxu0 0.0
        %1814 = vmatpush2.msra.mxu0 0.0
        %1815 = vmatprep.subr.mxu0 0.0
        %1816 = vmatpush2.msra.mxu0 0.0
        %1817 = vmatprep.subr.mxu0 0.0
        %1818 = vmatpush2.msra.mxu0 0.0
        %1819 = vmatprep.subr.mxu0 0.0
        %1820 = vmatpush2.msra.mxu0 0.0
        %1821 = vmatprep.subr.mxu0 0.0
        %1822 = vmatpush2.msra.mxu0 0.0
        %1823 = vmatprep.subr.mxu0 0.0
        %1824 = vmatpush2.msra.mxu0 0.0
        %1825 = vmatprep.subr.mxu0 0.0
        %1826 = vmatpush2.msra.mxu0 0.0
        %1827 = vmatprep.subr.mxu0 0.0
        %1828 = vmatpush2.msra.mxu0 0.0
        %1829 = vmatprep.subr.mxu0 0.0
        %1830 = vmatpush2.msra.mxu0 0.0
        %1831 = vmatprep.subr.mxu0 0.0
        %1832 = vmatpush2.msra.mxu0 0.0
        %1833 = vmatprep.subr.mxu0 0.0
        %1834 = vmatpush2.msra.mxu0 0.0
        %1835 = vmatprep.subr.mxu0 0.0
        %1836 = vmatpush2.msra.mxu0 0.0
        %1837 = vmatprep.subr.mxu0 0.0
        %1838 = vmatpush2.msra.mxu0 0.0
        %1839 = vmatprep.subr.mxu0 0.0
        %1840 = vmatpush2.msra.mxu0 0.0
        %1841 = vmatprep.subr.mxu0 0.0
        %1842 = vmatpush2.msra.mxu0 0.0
        %1843 = vmatprep.mubr.f32.mxu0 0.0
        %1844 = vmatmul.mubr.f32.gmra.mxu0 %v1088
        %v1845 = vpop.f32.mrf.mxu0
        %v1846 = vadd.f32 %v1077, %v1845
        %v1847 = vpop.f32.mrf.mxu0
        %1848 = vmatprep.mubr.f32.mxu0 0.0
        %1849 = vmatmul.mubr.f32.gmra.mxu0 %v1091
        %v1850 = vpop.f32.mrf.mxu0
        %v1851 = vadd.f32 %v1077, %v1850
        %v1852 = vpop.f32.mrf.mxu0
        %1853 = vmatprep.mubr.f32.mxu0 0.0
        %1854 = vmatmul.mubr.f32.gmra.mxu0 %v1094
        %v1855 = vpop.f32.mrf.mxu0
        %v1856 = vadd.f32 %v1077, %v1855
        %v1857 = vpop.f32.mrf.mxu0
        %1858 = vmatprep.mubr.f32.mxu0 0.0
        %1859 = vmatmul.mubr.f32.gmra.mxu0 %v1097
        %v1860 = vpop.f32.mrf.mxu0
        %v1861 = vadd.f32 %v1077, %v1860
        %v1862 = vpop.f32.mrf.mxu0
        %1863 = vmatprep.mubr.f32.mxu0 0.0
        %1864 = vmatmul.mubr.f32.gmra.mxu0 %v1100
        %v1865 = vpop.f32.mrf.mxu0
        %v1866 = vadd.f32 %v1077, %v1865
        %v1867 = vpop.f32.mrf.mxu0
        %1868 = vmatprep.mubr.f32.mxu0 0.0
        %1869 = vmatmul.mubr.f32.gmra.mxu0 %v1103
        %v1870 = vpop.f32.mrf.mxu0
        %v1871 = vadd.f32 %v1077, %v1870
        %v1872 = vpop.f32.mrf.mxu0
        %1873 = vmatprep.mubr.f32.mxu0 0.0
        %1874 = vmatmul.mubr.f32.gmra.mxu0 %v1106
        %v1875 = vpop.f32.mrf.mxu0
        %v1876 = vadd.f32 %v1077, %v1875
        %v1877 = vpop.f32.mrf.mxu0
        %1878 = vmatprep.mubr.f32.mxu0 0.0
        %1879 = vmatmul.mubr.f32.gmra.mxu0 %v1109
        %v1880 = vpop.f32.mrf.mxu0
        %v1881 = vadd.f32 %v1077, %v1880
        %v1882 = vpop.f32.mrf.mxu0
        %1883 = vmatprep.mubr.f32.mxu0 0.0
        %1884 = vmatmul.mubr.f32.gmra.mxu0 %v1112
        %v1885 = vpop.f32.mrf.mxu0
        %v1886 = vadd.f32 %v1077, %v1885
        %v1887 = vpop.f32.mrf.mxu0
        %1888 = vmatprep.mubr.f32.mxu0 0.0
        %1889 = vmatmul.mubr.f32.gmra.mxu0 %v1115
        %v1890 = vpop.f32.mrf.mxu0
        %v1891 = vadd.f32 %v1077, %v1890
        %v1892 = vpop.f32.mrf.mxu0
        %1893 = vmatprep.mubr.f32.mxu0 0.0
        %1894 = vmatmul.mubr.f32.gmra.mxu0 %v1118
        %v1895 = vpop.f32.mrf.mxu0
        %v1896 = vadd.f32 %v1077, %v1895
        %v1897 = vpop.f32.mrf.mxu0
        %1898 = vmatprep.mubr.f32.mxu0 0.0
        %1899 = vmatmul.mubr.f32.gmra.mxu0 %v1121
        %v1900 = vpop.f32.mrf.mxu0
        %v1901 = vadd.f32 %v1077, %v1900
        %v1902 = vpop.f32.mrf.mxu0
        %1903 = vmatprep.mubr.f32.mxu0 0.0
        %1904 = vmatmul.mubr.f32.gmra.mxu0 %v1124
        %v1905 = vpop.f32.mrf.mxu0
        %v1906 = vadd.f32 %v1077, %v1905
        %v1907 = vpop.f32.mrf.mxu0
        %1908 = vmatprep.mubr.f32.mxu0 0.0
        %1909 = vmatmul.mubr.f32.gmra.mxu0 %v1127
        %v1910 = vpop.f32.mrf.mxu0
        %v1911 = vadd.f32 %v1077, %v1910
        %v1912 = vpop.f32.mrf.mxu0
        %1913 = vmatprep.mubr.f32.mxu0 0.0
        %1914 = vmatmul.mubr.f32.gmra.mxu0 %v1130
        %v1915 = vpop.f32.mrf.mxu0
        %v1916 = vadd.f32 %v1077, %v1915
        %v1917 = vpop.f32.mrf.mxu0
        %1918 = vmatprep.mubr.f32.mxu0 0.0
        %1919 = vmatmul.mubr.f32.gmra.mxu0 %v1133
        %v1920 = vpop.f32.mrf.mxu0
        %v1921 = vadd.f32 %v1077, %v1920
        %v1922 = vpop.f32.mrf.mxu0
        %1923 = vdwg.mxu0
        %1924 = vst [vmem:[#allocation3] sm:$0xff] %v1202
        %1925 = vst [vmem:[#allocation3 + $0x8] sm:$0xff] %v1204
        %1926 = vst [vmem:[#allocation3 + $0x10] sm:$0xff] %v1363
        %1927 = vst [vmem:[#allocation3 + $0x18] sm:$0xff] %v1365
        %1928 = vst [vmem:[#allocation3 + $0x20] sm:$0xff] %v1524
        %1929 = vst [vmem:[#allocation3 + $0x28] sm:$0xff] %v1526
        %1930 = vst [vmem:[#allocation3 + $0x30] sm:$0xff] %v1685
        %1931 = vst [vmem:[#allocation3 + $0x38] sm:$0xff] %v1687
        %1932 = vst.msk [vmem:[#allocation3 + $0x40] sm:$0xff] %vm663, %v1846
        %1933 = vst [vmem:[#allocation3 + $0x48] sm:$0xff] %v1208
        %1934 = vst [vmem:[#allocation3 + $0x50] sm:$0xff] %v1210
        %1935 = vst [vmem:[#allocation3 + $0x58] sm:$0xff] %v1369
        %1936 = vst [vmem:[#allocation3 + $0x60] sm:$0xff] %v1371
        %1937 = vst [vmem:[#allocation3 + $0x68] sm:$0xff] %v1530
        %1938 = vst [vmem:[#allocation3 + $0x70] sm:$0xff] %v1532
        %1939 = vst [vmem:[#allocation3 + $0x78] sm:$0xff] %v1691
        %1940 = vst [vmem:[#allocation3 + $0x80] sm:$0xff] %v1693
        %1941 = vst.msk [vmem:[#allocation3 + $0x88] sm:$0xff] %vm663, %v1851
        %1942 = vst [vmem:[#allocation3 + $0x90] sm:$0xff] %v1214
        %1943 = vst [vmem:[#allocation3 + $0x98] sm:$0xff] %v1216
        %1944 = vst [vmem:[#allocation3 + $0xa0] sm:$0xff] %v1375
        %1945 = vst [vmem:[#allocation3 + $0xa8] sm:$0xff] %v1377
        %1946 = vst [vmem:[#allocation3 + $0xb0] sm:$0xff] %v1536
        %1947 = vst [vmem:[#allocation3 + $0xb8] sm:$0xff] %v1538
        %1948 = vst [vmem:[#allocation3 + $0xc0] sm:$0xff] %v1697
        %1949 = vst [vmem:[#allocation3 + $0xc8] sm:$0xff] %v1699
        %1950 = vst.msk [vmem:[#allocation3 + $0xd0] sm:$0xff] %vm663, %v1856
        %1951 = vst [vmem:[#allocation3 + $0xd8] sm:$0xff] %v1220
        %1952 = vst [vmem:[#allocation3 + $0xe0] sm:$0xff] %v1222
        %1953 = vst [vmem:[#allocation3 + $0xe8] sm:$0xff] %v1381
        %1954 = vst [vmem:[#allocation3 + $0xf0] sm:$0xff] %v1383
        %1955 = vst [vmem:[#allocation3 + $0xf8] sm:$0xff] %v1542
        %1956 = vst [vmem:[#allocation3 + $0x100] sm:$0xff] %v1544
        %1957 = vst [vmem:[#allocation3 + $0x108] sm:$0xff] %v1703
        %1958 = vst [vmem:[#allocation3 + $0x110] sm:$0xff] %v1705
        %1959 = vst.msk [vmem:[#allocation3 + $0x118] sm:$0xff] %vm663, %v1861
        %1960 = vst [vmem:[#allocation3 + $0x120] sm:$0xff] %v1226
        %1961 = vst [vmem:[#allocation3 + $0x128] sm:$0xff] %v1228
        %1962 = vst [vmem:[#allocation3 + $0x130] sm:$0xff] %v1387
        %1963 = vst [vmem:[#allocation3 + $0x138] sm:$0xff] %v1389
        %1964 = vst [vmem:[#allocation3 + $0x140] sm:$0xff] %v1548
        %1965 = vst [vmem:[#allocation3 + $0x148] sm:$0xff] %v1550
        %1966 = vst [vmem:[#allocation3 + $0x150] sm:$0xff] %v1709
        %1967 = vst [vmem:[#allocation3 + $0x158] sm:$0xff] %v1711
        %1968 = vst.msk [vmem:[#allocation3 + $0x160] sm:$0xff] %vm663, %v1866
        %1969 = vst [vmem:[#allocation3 + $0x168] sm:$0xff] %v1232
        %1970 = vst [vmem:[#allocation3 + $0x170] sm:$0xff] %v1234
        %1971 = vst [vmem:[#allocation3 + $0x178] sm:$0xff] %v1393
        %1972 = vst [vmem:[#allocation3 + $0x180] sm:$0xff] %v1395
        %1973 = vst [vmem:[#allocation3 + $0x188] sm:$0xff] %v1554
        %1974 = vst [vmem:[#allocation3 + $0x190] sm:$0xff] %v1556
        %1975 = vst [vmem:[#allocation3 + $0x198] sm:$0xff] %v1715
        %1976 = vst [vmem:[#allocation3 + $0x1a0] sm:$0xff] %v1717
        %1977 = vst.msk [vmem:[#allocation3 + $0x1a8] sm:$0xff] %vm663, %v1871
        %1978 = vst [vmem:[#allocation3 + $0x1b0] sm:$0xff] %v1238
        %1979 = vst [vmem:[#allocation3 + $0x1b8] sm:$0xff] %v1240
        %1980 = vst [vmem:[#allocation3 + $0x1c0] sm:$0xff] %v1399
        %1981 = vst [vmem:[#allocation3 + $0x1c8] sm:$0xff] %v1401
        %1982 = vst [vmem:[#allocation3 + $0x1d0] sm:$0xff] %v1560
        %1983 = vst [vmem:[#allocation3 + $0x1d8] sm:$0xff] %v1562
        %1984 = vst [vmem:[#allocation3 + $0x1e0] sm:$0xff] %v1721
        %1985 = vst [vmem:[#allocation3 + $0x1e8] sm:$0xff] %v1723
        %1986 = vst.msk [vmem:[#allocation3 + $0x1f0] sm:$0xff] %vm663, %v1876
        %1987 = vst [vmem:[#allocation3 + $0x1f8] sm:$0xff] %v1244
        %1988 = vst [vmem:[#allocation3 + $0x200] sm:$0xff] %v1246
        %1989 = vst [vmem:[#allocation3 + $0x208] sm:$0xff] %v1405
        %1990 = vst [vmem:[#allocation3 + $0x210] sm:$0xff] %v1407
        %1991 = vst [vmem:[#allocation3 + $0x218] sm:$0xff] %v1566
        %1992 = vst [vmem:[#allocation3 + $0x220] sm:$0xff] %v1568
        %1993 = vst [vmem:[#allocation3 + $0x228] sm:$0xff] %v1727
        %1994 = vst [vmem:[#allocation3 + $0x230] sm:$0xff] %v1729
        %1995 = vst.msk [vmem:[#allocation3 + $0x238] sm:$0xff] %vm663, %v1881
        %1996 = vst [vmem:[#allocation3 + $0x240] sm:$0xff] %v1250
        %1997 = vst [vmem:[#allocation3 + $0x248] sm:$0xff] %v1252
        %1998 = vst [vmem:[#allocation3 + $0x250] sm:$0xff] %v1411
        %1999 = vst [vmem:[#allocation3 + $0x258] sm:$0xff] %v1413
        %2000 = vst [vmem:[#allocation3 + $0x260] sm:$0xff] %v1572
        %2001 = vst [vmem:[#allocation3 + $0x268] sm:$0xff] %v1574
        %2002 = vst [vmem:[#allocation3 + $0x270] sm:$0xff] %v1733
        %2003 = vst [vmem:[#allocation3 + $0x278] sm:$0xff] %v1735
        %2004 = vst.msk [vmem:[#allocation3 + $0x280] sm:$0xff] %vm663, %v1886
        %2005 = vst [vmem:[#allocation3 + $0x288] sm:$0xff] %v1256
        %2006 = vst [vmem:[#allocation3 + $0x290] sm:$0xff] %v1258
        %2007 = vst [vmem:[#allocation3 + $0x298] sm:$0xff] %v1417
        %2008 = vst [vmem:[#allocation3 + $0x2a0] sm:$0xff] %v1419
        %2009 = vst [vmem:[#allocation3 + $0x2a8] sm:$0xff] %v1578
        %2010 = vst [vmem:[#allocation3 + $0x2b0] sm:$0xff] %v1580
        %2011 = vst [vmem:[#allocation3 + $0x2b8] sm:$0xff] %v1739
        %2012 = vst [vmem:[#allocation3 + $0x2c0] sm:$0xff] %v1741
        %2013 = vst.msk [vmem:[#allocation3 + $0x2c8] sm:$0xff] %vm663, %v1891
        %2014 = vst [vmem:[#allocation3 + $0x2d0] sm:$0xff] %v1262
        %2015 = vst [vmem:[#allocation3 + $0x2d8] sm:$0xff] %v1264
        %2016 = vst [vmem:[#allocation3 + $0x2e0] sm:$0xff] %v1423
        %2017 = vst [vmem:[#allocation3 + $0x2e8] sm:$0xff] %v1425
        %2018 = vst [vmem:[#allocation3 + $0x2f0] sm:$0xff] %v1584
        %2019 = vst [vmem:[#allocation3 + $0x2f8] sm:$0xff] %v1586
        %2020 = vst [vmem:[#allocation3 + $0x300] sm:$0xff] %v1745
        %2021 = vst [vmem:[#allocation3 + $0x308] sm:$0xff] %v1747
        %2022 = vst.msk [vmem:[#allocation3 + $0x310] sm:$0xff] %vm663, %v1896
        %2023 = vst [vmem:[#allocation3 + $0x318] sm:$0xff] %v1268
        %2024 = vst [vmem:[#allocation3 + $0x320] sm:$0xff] %v1270
        %2025 = vst [vmem:[#allocation3 + $0x328] sm:$0xff] %v1429
        %2026 = vst [vmem:[#allocation3 + $0x330] sm:$0xff] %v1431
        %2027 = vst [vmem:[#allocation3 + $0x338] sm:$0xff] %v1590
        %2028 = vst [vmem:[#allocation3 + $0x340] sm:$0xff] %v1592
        %2029 = vst [vmem:[#allocation3 + $0x348] sm:$0xff] %v1751
        %2030 = vst [vmem:[#allocation3 + $0x350] sm:$0xff] %v1753
        %2031 = vst.msk [vmem:[#allocation3 + $0x358] sm:$0xff] %vm663, %v1901
        %2032 = vst [vmem:[#allocation3 + $0x360] sm:$0xff] %v1274
        %2033 = vst [vmem:[#allocation3 + $0x368] sm:$0xff] %v1276
        %2034 = vst [vmem:[#allocation3 + $0x370] sm:$0xff] %v1435
        %2035 = vst [vmem:[#allocation3 + $0x378] sm:$0xff] %v1437
        %2036 = vst [vmem:[#allocation3 + $0x380] sm:$0xff] %v1596
        %2037 = vst [vmem:[#allocation3 + $0x388] sm:$0xff] %v1598
        %2038 = vst [vmem:[#allocation3 + $0x390] sm:$0xff] %v1757
        %2039 = vst [vmem:[#allocation3 + $0x398] sm:$0xff] %v1759
        %2040 = vst.msk [vmem:[#allocation3 + $0x3a0] sm:$0xff] %vm663, %v1906
        %2041 = vst [vmem:[#allocation3 + $0x3a8] sm:$0xff] %v1280
        %2042 = vst [vmem:[#allocation3 + $0x3b0] sm:$0xff] %v1282
        %2043 = vst [vmem:[#allocation3 + $0x3b8] sm:$0xff] %v1441
        %2044 = vst [vmem:[#allocation3 + $0x3c0] sm:$0xff] %v1443
        %2045 = vst [vmem:[#allocation3 + $0x3c8] sm:$0xff] %v1602
        %2046 = vst [vmem:[#allocation3 + $0x3d0] sm:$0xff] %v1604
        %2047 = vst [vmem:[#allocation3 + $0x3d8] sm:$0xff] %v1763
        %2048 = vst [vmem:[#allocation3 + $0x3e0] sm:$0xff] %v1765
        %2049 = vst.msk [vmem:[#allocation3 + $0x3e8] sm:$0xff] %vm663, %v1911
        %2050 = vst [vmem:[#allocation3 + $0x3f0] sm:$0xff] %v1286
        %2051 = vst [vmem:[#allocation3 + $0x3f8] sm:$0xff] %v1288
        %2052 = vst [vmem:[#allocation3 + $0x400] sm:$0xff] %v1447
        %2053 = vst [vmem:[#allocation3 + $0x408] sm:$0xff] %v1449
        %2054 = vst [vmem:[#allocation3 + $0x410] sm:$0xff] %v1608
        %2055 = vst [vmem:[#allocation3 + $0x418] sm:$0xff] %v1610
        %2056 = vst [vmem:[#allocation3 + $0x420] sm:$0xff] %v1769
        %2057 = vst [vmem:[#allocation3 + $0x428] sm:$0xff] %v1771
        %2058 = vst.msk [vmem:[#allocation3 + $0x430] sm:$0xff] %vm663, %v1916
        %2059 = vst [vmem:[#allocation3 + $0x438] sm:$0xff] %v1292
        %2060 = vst [vmem:[#allocation3 + $0x440] sm:$0xff] %v1294
        %2061 = vst [vmem:[#allocation3 + $0x448] sm:$0xff] %v1453
        %2062 = vst [vmem:[#allocation3 + $0x450] sm:$0xff] %v1455
        %2063 = vst [vmem:[#allocation3 + $0x458] sm:$0xff] %v1614
        %2064 = vst [vmem:[#allocation3 + $0x460] sm:$0xff] %v1616
        %2065 = vst [vmem:[#allocation3 + $0x468] sm:$0xff] %v1775
        %2066 = vst [vmem:[#allocation3 + $0x470] sm:$0xff] %v1777
        %2067 = vst.msk [vmem:[#allocation3 + $0x478] sm:$0xff] %vm663, %v1921
        %v2068 = vld [vmem:[#allocation3 + $0x40] sm:$0xff]
        %v2069 = vld [vmem:[#allocation3 + $0x88] sm:$0xff]
        %v2070 = vld [vmem:[#allocation3 + $0xd0] sm:$0xff]
        %v2071 = vld [vmem:[#allocation3 + $0x118] sm:$0xff]
        %v2072 = vld [vmem:[#allocation3 + $0x160] sm:$0xff]
        %v2073 = vld [vmem:[#allocation3 + $0x1a8] sm:$0xff]
        %v2074 = vld [vmem:[#allocation3 + $0x1f0] sm:$0xff]
        %v2075 = vld [vmem:[#allocation3 + $0x238] sm:$0xff]
        %v2076 = vld [vmem:[#allocation3 + $0x280] sm:$0xff]
        %v2077 = vld [vmem:[#allocation3 + $0x2c8] sm:$0xff]
        %v2078 = vld [vmem:[#allocation3 + $0x310] sm:$0xff]
        %v2079 = vld [vmem:[#allocation3 + $0x358] sm:$0xff]
        %v2080 = vld [vmem:[#allocation3 + $0x3a0] sm:$0xff]
        %v2081 = vld [vmem:[#allocation3 + $0x3e8] sm:$0xff]
        %v2082 = vld [vmem:[#allocation3 + $0x430] sm:$0xff]
        %v2083 = vld [vmem:[#allocation3 + $0x478] sm:$0xff]
        %v2084 = vmax.f32 %v2068, 0.0
        %v2085 = vmax.f32 %v2069, 0.0
        %v2086 = vmax.f32 %v2070, 0.0
        %v2087 = vmax.f32 %v2071, 0.0
        %v2088 = vmax.f32 %v2072, 0.0
        %v2089 = vmax.f32 %v2073, 0.0
        %v2090 = vmax.f32 %v2074, 0.0
        %v2091 = vmax.f32 %v2075, 0.0
        %v2092 = vmax.f32 %v2076, 0.0
        %v2093 = vmax.f32 %v2077, 0.0
        %v2094 = vmax.f32 %v2078, 0.0
        %v2095 = vmax.f32 %v2079, 0.0
        %v2096 = vmax.f32 %v2080, 0.0
        %v2097 = vmax.f32 %v2081, 0.0
        %v2098 = vmax.f32 %v2082, 0.0
        %v2099 = vmax.f32 %v2083, 0.0
        %v2100 = vand.u32 2147483647, %v2068
        %v2101 = vand.u32 2147483647, %v2069
        %v2102 = vand.u32 2147483647, %v2070
        %v2103 = vand.u32 2147483647, %v2071
        %v2104 = vand.u32 2147483647, %v2072
        %v2105 = vand.u32 2147483647, %v2073
        %v2106 = vand.u32 2147483647, %v2074
        %v2107 = vand.u32 2147483647, %v2075
        %v2108 = vand.u32 2147483647, %v2076
        %v2109 = vand.u32 2147483647, %v2077
        %v2110 = vand.u32 2147483647, %v2078
        %v2111 = vand.u32 2147483647, %v2079
        %v2112 = vand.u32 2147483647, %v2080
        %v2113 = vand.u32 2147483647, %v2081
        %v2114 = vand.u32 2147483647, %v2082
        %v2115 = vand.u32 2147483647, %v2083
        %v2116 = vsub.f32 0.0, %v2100
        %v2117 = vsub.f32 0.0, %v2101
        %v2118 = vsub.f32 0.0, %v2102
        %v2119 = vsub.f32 0.0, %v2103
        %v2120 = vsub.f32 0.0, %v2104
        %v2121 = vsub.f32 0.0, %v2105
        %v2122 = vsub.f32 0.0, %v2106
        %v2123 = vsub.f32 0.0, %v2107
        %v2124 = vsub.f32 0.0, %v2108
        %v2125 = vsub.f32 0.0, %v2109
        %v2126 = vsub.f32 0.0, %v2110
        %v2127 = vsub.f32 0.0, %v2111
        %v2128 = vsub.f32 0.0, %v2112
        %v2129 = vsub.f32 0.0, %v2113
        %v2130 = vsub.f32 0.0, %v2114
        %v2131 = vsub.f32 0.0, %v2115
        %v2132 = vmul.f32 %v2116, 1.442695
        %v2133 = vpow.pop %v2132
        %v2134 = vmul.f32 %v2117, 1.442695
        %v2135 = vpow.pop %v2134
        %v2136 = vmul.f32 %v2118, 1.442695
        %v2137 = vpow.pop %v2136
        %v2138 = vmul.f32 %v2119, 1.442695
        %v2139 = vpow.pop %v2138
        %v2140 = vmul.f32 %v2120, 1.442695
        %v2141 = vpow.pop %v2140
        %v2142 = vmul.f32 %v2121, 1.442695
        %v2143 = vpow.pop %v2142
        %v2144 = vmul.f32 %v2122, 1.442695
        %v2145 = vpow.pop %v2144
        %v2146 = vmul.f32 %v2123, 1.442695
        %v2147 = vpow.pop %v2146
        %v2148 = vmul.f32 %v2124, 1.442695
        %v2149 = vpow.pop %v2148
        %v2150 = vmul.f32 %v2125, 1.442695
        %v2151 = vpow.pop %v2150
        %v2152 = vmul.f32 %v2126, 1.442695
        %v2153 = vpow.pop %v2152
        %v2154 = vmul.f32 %v2127, 1.442695
        %v2155 = vpow.pop %v2154
        %v2156 = vmul.f32 %v2128, 1.442695
        %v2157 = vpow.pop %v2156
        %v2158 = vmul.f32 %v2129, 1.442695
        %v2159 = vpow.pop %v2158
        %v2160 = vmul.f32 %v2130, 1.442695
        %v2161 = vpow.pop %v2160
        %v2162 = vmul.f32 %v2131, 1.442695
        %v2163 = vpow.pop %v2162
        %v2164 = vadd.f32 %v2133, 1.0
        %v2165 = vadd.f32 %v2135, 1.0
        %v2166 = vadd.f32 %v2137, 1.0
        %v2167 = vadd.f32 %v2139, 1.0
        %v2168 = vadd.f32 %v2141, 1.0
        %v2169 = vadd.f32 %v2143, 1.0
        %v2170 = vadd.f32 %v2145, 1.0
        %v2171 = vadd.f32 %v2147, 1.0
        %v2172 = vadd.f32 %v2149, 1.0
        %v2173 = vadd.f32 %v2151, 1.0
        %v2174 = vadd.f32 %v2153, 1.0
        %v2175 = vadd.f32 %v2155, 1.0
        %v2176 = vadd.f32 %v2157, 1.0
        %v2177 = vadd.f32 %v2159, 1.0
        %v2178 = vadd.f32 %v2161, 1.0
        %v2179 = vadd.f32 %v2163, 1.0
        %v2180 = vlog2.pop %v2164
        %v2181 = vmul.f32 %v2180, 0.6931472
        %v2182 = vlog2.pop %v2165
        %v2183 = vmul.f32 %v2182, 0.6931472
        %v2184 = vlog2.pop %v2166
        %v2185 = vmul.f32 %v2184, 0.6931472
        %v2186 = vlog2.pop %v2167
        %v2187 = vmul.f32 %v2186, 0.6931472
        %v2188 = vlog2.pop %v2168
        %v2189 = vmul.f32 %v2188, 0.6931472
        %v2190 = vlog2.pop %v2169
        %v2191 = vmul.f32 %v2190, 0.6931472
        %v2192 = vlog2.pop %v2170
        %v2193 = vmul.f32 %v2192, 0.6931472
        %v2194 = vlog2.pop %v2171
        %v2195 = vmul.f32 %v2194, 0.6931472
        %v2196 = vlog2.pop %v2172
        %v2197 = vmul.f32 %v2196, 0.6931472
        %v2198 = vlog2.pop %v2173
        %v2199 = vmul.f32 %v2198, 0.6931472
        %v2200 = vlog2.pop %v2174
        %v2201 = vmul.f32 %v2200, 0.6931472
        %v2202 = vlog2.pop %v2175
        %v2203 = vmul.f32 %v2202, 0.6931472
        %v2204 = vlog2.pop %v2176
        %v2205 = vmul.f32 %v2204, 0.6931472
        %v2206 = vlog2.pop %v2177
        %v2207 = vmul.f32 %v2206, 0.6931472
        %v2208 = vlog2.pop %v2178
        %v2209 = vmul.f32 %v2208, 0.6931472
        %v2210 = vlog2.pop %v2179
        %v2211 = vmul.f32 %v2210, 0.6931472
        %v2212 = vadd.f32 %v2084, %v2181
        %v2213 = vadd.f32 %v2085, %v2183
        %v2214 = vadd.f32 %v2086, %v2185
        %v2215 = vadd.f32 %v2087, %v2187
        %v2216 = vadd.f32 %v2088, %v2189
        %v2217 = vadd.f32 %v2089, %v2191
        %v2218 = vadd.f32 %v2090, %v2193
        %v2219 = vadd.f32 %v2091, %v2195
        %v2220 = vadd.f32 %v2092, %v2197
        %v2221 = vadd.f32 %v2093, %v2199
        %v2222 = vadd.f32 %v2094, %v2201
        %v2223 = vadd.f32 %v2095, %v2203
        %v2224 = vadd.f32 %v2096, %v2205
        %v2225 = vadd.f32 %v2097, %v2207
        %v2226 = vadd.f32 %v2098, %v2209
        %v2227 = vadd.f32 %v2099, %v2211
        %2244 = vrot.lane.b32.xlu0 %v2212, 64
        %v2245 = vpop.permute.xlu0 %2244
        %2246 = vrot.lane.b32.xlu0 %v2213, 64
        %v2247 = vpop.permute.xlu0 %2246
        %2248 = vrot.lane.b32.xlu0 %v2214, 64
        %v2249 = vpop.permute.xlu0 %2248
        %2250 = vrot.lane.b32.xlu0 %v2215, 64
        %v2251 = vpop.permute.xlu0 %2250
        %2252 = vrot.lane.b32.xlu0 %v2216, 64
        %v2253 = vpop.permute.xlu0 %2252
        %2254 = vrot.lane.b32.xlu0 %v2217, 64
        %v2255 = vpop.permute.xlu0 %2254
        %2256 = vrot.lane.b32.xlu0 %v2218, 64
        %v2257 = vpop.permute.xlu0 %2256
        %2258 = vrot.lane.b32.xlu0 %v2219, 64
        %v2259 = vpop.permute.xlu0 %2258
        %2260 = vrot.lane.b32.xlu0 %v2220, 64
        %v2261 = vpop.permute.xlu0 %2260
        %2262 = vrot.lane.b32.xlu0 %v2221, 64
        %v2263 = vpop.permute.xlu0 %2262
        %2264 = vrot.lane.b32.xlu0 %v2222, 64
        %v2265 = vpop.permute.xlu0 %2264
        %2266 = vrot.lane.b32.xlu0 %v2223, 64
        %v2267 = vpop.permute.xlu0 %2266
        %2268 = vrot.lane.b32.xlu0 %v2224, 64
        %v2269 = vpop.permute.xlu0 %2268
        %2270 = vrot.lane.b32.xlu0 %v2225, 64
        %v2271 = vpop.permute.xlu0 %2270
        %2272 = vrot.lane.b32.xlu0 %v2226, 64
        %v2273 = vpop.permute.xlu0 %2272
        %2274 = vrot.lane.b32.xlu0 %v2227, 64
        %v2275 = vpop.permute.xlu0 %2274
        %v2292 = vsel %vm663, %v2212, %v2245
        %v2293 = vsel %vm663, %v2213, %v2247
        %v2294 = vsel %vm663, %v2214, %v2249
        %v2295 = vsel %vm663, %v2215, %v2251
        %v2296 = vsel %vm663, %v2216, %v2253
        %v2297 = vsel %vm663, %v2217, %v2255
        %v2298 = vsel %vm663, %v2218, %v2257
        %v2299 = vsel %vm663, %v2219, %v2259
        %v2300 = vsel %vm663, %v2220, %v2261
        %v2301 = vsel %vm663, %v2221, %v2263
        %v2302 = vsel %vm663, %v2222, %v2265
        %v2303 = vsel %vm663, %v2223, %v2267
        %v2304 = vsel %vm663, %v2224, %v2269
        %v2305 = vsel %vm663, %v2225, %v2271
        %v2306 = vsel %vm663, %v2226, %v2273
        %v2307 = vsel %vm663, %v2227, %v2275
        %v2308 = vld [vmem:[%s6] sm:$0xf]
        %v2310 = vlaneseq
        %v2311 = vshrl.u32 %v2310, 7
        %v2312 = vsub.s32 0, %v2311
        %v2313 = vrot.slane %v2308, %v2312
        %v2314 = vlaneseq
        %v2315 = vshrl.u32 %v2314, 7
        %v2316 = vsub.s32 1, %v2315
        %v2317 = vrot.slane %v2308, %v2316
        %v2318 = vlaneseq
        %v2319 = vshrl.u32 %v2318, 7
        %v2320 = vsub.s32 2, %v2319
        %v2321 = vrot.slane %v2308, %v2320
        %v2322 = vlaneseq
        %v2323 = vshrl.u32 %v2322, 7
        %v2324 = vsub.s32 3, %v2323
        %v2325 = vrot.slane %v2308, %v2324
        %v2330 = vmul.f32 %v2292, %v2313
        %v2331 = vmul.f32 %v2292, %v2317
        %v2332 = vmul.f32 %v2292, %v2321
        %v2333 = vmul.f32 %v2292, %v2325
        %v2334 = vmul.f32 %v2293, %v2313
        %v2335 = vmul.f32 %v2293, %v2317
        %v2336 = vmul.f32 %v2293, %v2321
        %v2337 = vmul.f32 %v2293, %v2325
        %v2338 = vmul.f32 %v2294, %v2313
        %v2339 = vmul.f32 %v2294, %v2317
        %v2340 = vmul.f32 %v2294, %v2321
        %v2341 = vmul.f32 %v2294, %v2325
        %v2342 = vmul.f32 %v2295, %v2313
        %v2343 = vmul.f32 %v2295, %v2317
        %v2344 = vmul.f32 %v2295, %v2321
        %v2345 = vmul.f32 %v2295, %v2325
        %v2346 = vmul.f32 %v2296, %v2313
        %v2347 = vmul.f32 %v2296, %v2317
        %v2348 = vmul.f32 %v2296, %v2321
        %v2349 = vmul.f32 %v2296, %v2325
        %v2350 = vmul.f32 %v2297, %v2313
        %v2351 = vmul.f32 %v2297, %v2317
        %v2352 = vmul.f32 %v2297, %v2321
        %v2353 = vmul.f32 %v2297, %v2325
        %v2354 = vmul.f32 %v2298, %v2313
        %v2355 = vmul.f32 %v2298, %v2317
        %v2356 = vmul.f32 %v2298, %v2321
        %v2357 = vmul.f32 %v2298, %v2325
        %v2358 = vmul.f32 %v2299, %v2313
        %v2359 = vmul.f32 %v2299, %v2317
        %v2360 = vmul.f32 %v2299, %v2321
        %v2361 = vmul.f32 %v2299, %v2325
        %v2362 = vmul.f32 %v2300, %v2313
        %v2363 = vmul.f32 %v2300, %v2317
        %v2364 = vmul.f32 %v2300, %v2321
        %v2365 = vmul.f32 %v2300, %v2325
        %v2366 = vmul.f32 %v2301, %v2313
        %v2367 = vmul.f32 %v2301, %v2317
        %v2368 = vmul.f32 %v2301, %v2321
        %v2369 = vmul.f32 %v2301, %v2325
        %v2370 = vmul.f32 %v2302, %v2313
        %v2371 = vmul.f32 %v2302, %v2317
        %v2372 = vmul.f32 %v2302, %v2321
        %v2373 = vmul.f32 %v2302, %v2325
        %v2374 = vmul.f32 %v2303, %v2313
        %v2375 = vmul.f32 %v2303, %v2317
        %v2376 = vmul.f32 %v2303, %v2321
        %v2377 = vmul.f32 %v2303, %v2325
        %v2378 = vmul.f32 %v2304, %v2313
        %v2379 = vmul.f32 %v2304, %v2317
        %v2380 = vmul.f32 %v2304, %v2321
        %v2381 = vmul.f32 %v2304, %v2325
        %v2382 = vmul.f32 %v2305, %v2313
        %v2383 = vmul.f32 %v2305, %v2317
        %v2384 = vmul.f32 %v2305, %v2321
        %v2385 = vmul.f32 %v2305, %v2325
        %v2386 = vmul.f32 %v2306, %v2313
        %v2387 = vmul.f32 %v2306, %v2317
        %v2388 = vmul.f32 %v2306, %v2321
        %v2389 = vmul.f32 %v2306, %v2325
        %v2390 = vmul.f32 %v2307, %v2313
        %v2391 = vmul.f32 %v2307, %v2317
        %v2392 = vmul.f32 %v2307, %v2321
        %v2393 = vmul.f32 %v2307, %v2325
        %v2394 = vmul.f32 %v2330, 1.442695
        %v2395 = vpow.pop %v2394
        %v2396 = vmul.f32 %v2331, 1.442695
        %v2397 = vpow.pop %v2396
        %v2398 = vmul.f32 %v2332, 1.442695
        %v2399 = vpow.pop %v2398
        %v2400 = vmul.f32 %v2333, 1.442695
        %v2401 = vpow.pop %v2400
        %v2402 = vmul.f32 %v2334, 1.442695
        %v2403 = vpow.pop %v2402
        %v2404 = vmul.f32 %v2335, 1.442695
        %v2405 = vpow.pop %v2404
        %v2406 = vmul.f32 %v2336, 1.442695
        %v2407 = vpow.pop %v2406
        %v2408 = vmul.f32 %v2337, 1.442695
        %v2409 = vpow.pop %v2408
        %v2410 = vmul.f32 %v2338, 1.442695
        %v2411 = vpow.pop %v2410
        %v2412 = vmul.f32 %v2339, 1.442695
        %v2413 = vpow.pop %v2412
        %v2414 = vmul.f32 %v2340, 1.442695
        %v2415 = vpow.pop %v2414
        %v2416 = vmul.f32 %v2341, 1.442695
        %v2417 = vpow.pop %v2416
        %v2418 = vmul.f32 %v2342, 1.442695
        %v2419 = vpow.pop %v2418
        %v2420 = vmul.f32 %v2343, 1.442695
        %v2421 = vpow.pop %v2420
        %v2422 = vmul.f32 %v2344, 1.442695
        %v2423 = vpow.pop %v2422
        %v2424 = vmul.f32 %v2345, 1.442695
        %v2425 = vpow.pop %v2424
        %v2426 = vmul.f32 %v2346, 1.442695
        %v2427 = vpow.pop %v2426
        %v2428 = vmul.f32 %v2347, 1.442695
        %v2429 = vpow.pop %v2428
        %v2430 = vmul.f32 %v2348, 1.442695
        %v2431 = vpow.pop %v2430
        %v2432 = vmul.f32 %v2349, 1.442695
        %v2433 = vpow.pop %v2432
        %v2434 = vmul.f32 %v2350, 1.442695
        %v2435 = vpow.pop %v2434
        %v2436 = vmul.f32 %v2351, 1.442695
        %v2437 = vpow.pop %v2436
        %v2438 = vmul.f32 %v2352, 1.442695
        %v2439 = vpow.pop %v2438
        %v2440 = vmul.f32 %v2353, 1.442695
        %v2441 = vpow.pop %v2440
        %v2442 = vmul.f32 %v2354, 1.442695
        %v2443 = vpow.pop %v2442
        %v2444 = vmul.f32 %v2355, 1.442695
        %v2445 = vpow.pop %v2444
        %v2446 = vmul.f32 %v2356, 1.442695
        %v2447 = vpow.pop %v2446
        %v2448 = vmul.f32 %v2357, 1.442695
        %v2449 = vpow.pop %v2448
        %v2450 = vmul.f32 %v2358, 1.442695
        %v2451 = vpow.pop %v2450
        %v2452 = vmul.f32 %v2359, 1.442695
        %v2453 = vpow.pop %v2452
        %v2454 = vmul.f32 %v2360, 1.442695
        %v2455 = vpow.pop %v2454
        %v2456 = vmul.f32 %v2361, 1.442695
        %v2457 = vpow.pop %v2456
        %v2458 = vmul.f32 %v2362, 1.442695
        %v2459 = vpow.pop %v2458
        %v2460 = vmul.f32 %v2363, 1.442695
        %v2461 = vpow.pop %v2460
        %v2462 = vmul.f32 %v2364, 1.442695
        %v2463 = vpow.pop %v2462
        %v2464 = vmul.f32 %v2365, 1.442695
        %v2465 = vpow.pop %v2464
        %v2466 = vmul.f32 %v2366, 1.442695
        %v2467 = vpow.pop %v2466
        %v2468 = vmul.f32 %v2367, 1.442695
        %v2469 = vpow.pop %v2468
        %v2470 = vmul.f32 %v2368, 1.442695
        %v2471 = vpow.pop %v2470
        %v2472 = vmul.f32 %v2369, 1.442695
        %v2473 = vpow.pop %v2472
        %v2474 = vmul.f32 %v2370, 1.442695
        %v2475 = vpow.pop %v2474
        %v2476 = vmul.f32 %v2371, 1.442695
        %v2477 = vpow.pop %v2476
        %v2478 = vmul.f32 %v2372, 1.442695
        %v2479 = vpow.pop %v2478
        %v2480 = vmul.f32 %v2373, 1.442695
        %v2481 = vpow.pop %v2480
        %v2482 = vmul.f32 %v2374, 1.442695
        %v2483 = vpow.pop %v2482
        %v2484 = vmul.f32 %v2375, 1.442695
        %v2485 = vpow.pop %v2484
        %v2486 = vmul.f32 %v2376, 1.442695
        %v2487 = vpow.pop %v2486
        %v2488 = vmul.f32 %v2377, 1.442695
        %v2489 = vpow.pop %v2488
        %v2490 = vmul.f32 %v2378, 1.442695
        %v2491 = vpow.pop %v2490
        %v2492 = vmul.f32 %v2379, 1.442695
        %v2493 = vpow.pop %v2492
        %v2494 = vmul.f32 %v2380, 1.442695
        %v2495 = vpow.pop %v2494
        %v2496 = vmul.f32 %v2381, 1.442695
        %v2497 = vpow.pop %v2496
        %v2498 = vmul.f32 %v2382, 1.442695
        %v2499 = vpow.pop %v2498
        %v2500 = vmul.f32 %v2383, 1.442695
        %v2501 = vpow.pop %v2500
        %v2502 = vmul.f32 %v2384, 1.442695
        %v2503 = vpow.pop %v2502
        %v2504 = vmul.f32 %v2385, 1.442695
        %v2505 = vpow.pop %v2504
        %v2506 = vmul.f32 %v2386, 1.442695
        %v2507 = vpow.pop %v2506
        %v2508 = vmul.f32 %v2387, 1.442695
        %v2509 = vpow.pop %v2508
        %v2510 = vmul.f32 %v2388, 1.442695
        %v2511 = vpow.pop %v2510
        %v2512 = vmul.f32 %v2389, 1.442695
        %v2513 = vpow.pop %v2512
        %v2514 = vmul.f32 %v2390, 1.442695
        %v2515 = vpow.pop %v2514
        %v2516 = vmul.f32 %v2391, 1.442695
        %v2517 = vpow.pop %v2516
        %v2518 = vmul.f32 %v2392, 1.442695
        %v2519 = vpow.pop %v2518
        %v2520 = vmul.f32 %v2393, 1.442695
        %v2521 = vpow.pop %v2520
        %2522 = vst [vmem:[#allocation4] sm:$0xff] %v2395
        %2523 = vst [vmem:[#allocation4 + $0x8] sm:$0xff] %v2397
        %2524 = vst [vmem:[#allocation4 + $0x10] sm:$0xff] %v2399
        %2525 = vst [vmem:[#allocation4 + $0x18] sm:$0xff] %v2401
        %2526 = vst [vmem:[#allocation4 + $0x20] sm:$0xff] %v2403
        %2527 = vst [vmem:[#allocation4 + $0x28] sm:$0xff] %v2405
        %2528 = vst [vmem:[#allocation4 + $0x30] sm:$0xff] %v2407
        %2529 = vst [vmem:[#allocation4 + $0x38] sm:$0xff] %v2409
        %2530 = vst [vmem:[#allocation4 + $0x40] sm:$0xff] %v2411
        %2531 = vst [vmem:[#allocation4 + $0x48] sm:$0xff] %v2413
        %2532 = vst [vmem:[#allocation4 + $0x50] sm:$0xff] %v2415
        %2533 = vst [vmem:[#allocation4 + $0x58] sm:$0xff] %v2417
        %2534 = vst [vmem:[#allocation4 + $0x60] sm:$0xff] %v2419
        %2535 = vst [vmem:[#allocation4 + $0x68] sm:$0xff] %v2421
        %2536 = vst [vmem:[#allocation4 + $0x70] sm:$0xff] %v2423
        %2537 = vst [vmem:[#allocation4 + $0x78] sm:$0xff] %v2425
        %2538 = vst [vmem:[#allocation4 + $0x80] sm:$0xff] %v2427
        %2539 = vst [vmem:[#allocation4 + $0x88] sm:$0xff] %v2429
        %2540 = vst [vmem:[#allocation4 + $0x90] sm:$0xff] %v2431
        %2541 = vst [vmem:[#allocation4 + $0x98] sm:$0xff] %v2433
        %2542 = vst [vmem:[#allocation4 + $0xa0] sm:$0xff] %v2435
        %2543 = vst [vmem:[#allocation4 + $0xa8] sm:$0xff] %v2437
        %2544 = vst [vmem:[#allocation4 + $0xb0] sm:$0xff] %v2439
        %2545 = vst [vmem:[#allocation4 + $0xb8] sm:$0xff] %v2441
        %2546 = vst [vmem:[#allocation4 + $0xc0] sm:$0xff] %v2443
        %2547 = vst [vmem:[#allocation4 + $0xc8] sm:$0xff] %v2445
        %2548 = vst [vmem:[#allocation4 + $0xd0] sm:$0xff] %v2447
        %2549 = vst [vmem:[#allocation4 + $0xd8] sm:$0xff] %v2449
        %2550 = vst [vmem:[#allocation4 + $0xe0] sm:$0xff] %v2451
        %2551 = vst [vmem:[#allocation4 + $0xe8] sm:$0xff] %v2453
        %2552 = vst [vmem:[#allocation4 + $0xf0] sm:$0xff] %v2455
        %2553 = vst [vmem:[#allocation4 + $0xf8] sm:$0xff] %v2457
        %2554 = vst [vmem:[#allocation4 + $0x100] sm:$0xff] %v2459
        %2555 = vst [vmem:[#allocation4 + $0x108] sm:$0xff] %v2461
        %2556 = vst [vmem:[#allocation4 + $0x110] sm:$0xff] %v2463
        %2557 = vst [vmem:[#allocation4 + $0x118] sm:$0xff] %v2465
        %2558 = vst [vmem:[#allocation4 + $0x120] sm:$0xff] %v2467
        %2559 = vst [vmem:[#allocation4 + $0x128] sm:$0xff] %v2469
        %2560 = vst [vmem:[#allocation4 + $0x130] sm:$0xff] %v2471
        %2561 = vst [vmem:[#allocation4 + $0x138] sm:$0xff] %v2473
        %2562 = vst [vmem:[#allocation4 + $0x140] sm:$0xff] %v2475
        %2563 = vst [vmem:[#allocation4 + $0x148] sm:$0xff] %v2477
        %2564 = vst [vmem:[#allocation4 + $0x150] sm:$0xff] %v2479
        %2565 = vst [vmem:[#allocation4 + $0x158] sm:$0xff] %v2481
        %2566 = vst [vmem:[#allocation4 + $0x160] sm:$0xff] %v2483
        %2567 = vst [vmem:[#allocation4 + $0x168] sm:$0xff] %v2485
        %2568 = vst [vmem:[#allocation4 + $0x170] sm:$0xff] %v2487
        %2569 = vst [vmem:[#allocation4 + $0x178] sm:$0xff] %v2489
        %2570 = vst [vmem:[#allocation4 + $0x180] sm:$0xff] %v2491
        %2571 = vst [vmem:[#allocation4 + $0x188] sm:$0xff] %v2493
        %2572 = vst [vmem:[#allocation4 + $0x190] sm:$0xff] %v2495
        %2573 = vst [vmem:[#allocation4 + $0x198] sm:$0xff] %v2497
        %2574 = vst [vmem:[#allocation4 + $0x1a0] sm:$0xff] %v2499
        %2575 = vst [vmem:[#allocation4 + $0x1a8] sm:$0xff] %v2501
        %2576 = vst [vmem:[#allocation4 + $0x1b0] sm:$0xff] %v2503
        %2577 = vst [vmem:[#allocation4 + $0x1b8] sm:$0xff] %v2505
        %2578 = vst [vmem:[#allocation4 + $0x1c0] sm:$0xff] %v2507
        %2579 = vst [vmem:[#allocation4 + $0x1c8] sm:$0xff] %v2509
        %2580 = vst [vmem:[#allocation4 + $0x1d0] sm:$0xff] %v2511
        %2581 = vst [vmem:[#allocation4 + $0x1d8] sm:$0xff] %v2513
        %2582 = vst [vmem:[#allocation4 + $0x1e0] sm:$0xff] %v2515
        %2583 = vst [vmem:[#allocation4 + $0x1e8] sm:$0xff] %v2517
        %2584 = vst [vmem:[#allocation4 + $0x1f0] sm:$0xff] %v2519
        %2585 = vst [vmem:[#allocation4 + $0x1f8] sm:$0xff] %v2521
        %v2586 = vmul.f32 %v2212, %v950
        %v2587 = vmul.f32 %v2213, %v951
        %v2588 = vmul.f32 %v2214, %v952
        %v2589 = vmul.f32 %v2215, %v953
        %v2590 = vmul.f32 %v2216, %v954
        %v2591 = vmul.f32 %v2217, %v955
        %v2592 = vmul.f32 %v2218, %v956
        %v2593 = vmul.f32 %v2219, %v957
        %v2594 = vmul.f32 %v2220, %v958
        %v2595 = vmul.f32 %v2221, %v959
        %v2596 = vmul.f32 %v2222, %v960
        %v2597 = vmul.f32 %v2223, %v961
        %v2598 = vmul.f32 %v2224, %v962
        %v2599 = vmul.f32 %v2225, %v963
        %v2600 = vmul.f32 %v2226, %v964
        %v2601 = vmul.f32 %v2227, %v965
        %2618 = vrot.lane.b32.xlu0 %v2586, 64
        %v2619 = vpop.permute.xlu0 %2618
        %2620 = vrot.lane.b32.xlu0 %v2587, 64
        %v2621 = vpop.permute.xlu0 %2620
        %2622 = vrot.lane.b32.xlu0 %v2588, 64
        %v2623 = vpop.permute.xlu0 %2622
        %2624 = vrot.lane.b32.xlu0 %v2589, 64
        %v2625 = vpop.permute.xlu0 %2624
        %2626 = vrot.lane.b32.xlu0 %v2590, 64
        %v2627 = vpop.permute.xlu0 %2626
        %2628 = vrot.lane.b32.xlu0 %v2591, 64
        %v2629 = vpop.permute.xlu0 %2628
        %2630 = vrot.lane.b32.xlu0 %v2592, 64
        %v2631 = vpop.permute.xlu0 %2630
        %2632 = vrot.lane.b32.xlu0 %v2593, 64
        %v2633 = vpop.permute.xlu0 %2632
        %2634 = vrot.lane.b32.xlu0 %v2594, 64
        %v2635 = vpop.permute.xlu0 %2634
        %2636 = vrot.lane.b32.xlu0 %v2595, 64
        %v2637 = vpop.permute.xlu0 %2636
        %2638 = vrot.lane.b32.xlu0 %v2596, 64
        %v2639 = vpop.permute.xlu0 %2638
        %2640 = vrot.lane.b32.xlu0 %v2597, 64
        %v2641 = vpop.permute.xlu0 %2640
        %2642 = vrot.lane.b32.xlu0 %v2598, 64
        %v2643 = vpop.permute.xlu0 %2642
        %2644 = vrot.lane.b32.xlu0 %v2599, 64
        %v2645 = vpop.permute.xlu0 %2644
        %2646 = vrot.lane.b32.xlu0 %v2600, 64
        %v2647 = vpop.permute.xlu0 %2646
        %2648 = vrot.lane.b32.xlu0 %v2601, 64
        %v2649 = vpop.permute.xlu0 %2648
        %v2666 = vsel %vm663, %v2586, %v2619
        %v2667 = vsel %vm663, %v2587, %v2621
        %v2668 = vsel %vm663, %v2588, %v2623
        %v2669 = vsel %vm663, %v2589, %v2625
        %v2670 = vsel %vm663, %v2590, %v2627
        %v2671 = vsel %vm663, %v2591, %v2629
        %v2672 = vsel %vm663, %v2592, %v2631
        %v2673 = vsel %vm663, %v2593, %v2633
        %v2674 = vsel %vm663, %v2594, %v2635
        %v2675 = vsel %vm663, %v2595, %v2637
        %v2676 = vsel %vm663, %v2596, %v2639
        %v2677 = vsel %vm663, %v2597, %v2641
        %v2678 = vsel %vm663, %v2598, %v2643
        %v2679 = vsel %vm663, %v2599, %v2645
        %v2680 = vsel %vm663, %v2600, %v2647
        %v2681 = vsel %vm663, %v2601, %v2649
        %v2682 = vld [vmem:[#allocation3] sm:$0xff]
        %v2683 = vld [vmem:[#allocation3 + $0x8] sm:$0xff]
        %v2684 = vld [vmem:[#allocation3 + $0x10] sm:$0xff]
        %v2685 = vld [vmem:[#allocation3 + $0x18] sm:$0xff]
        %v2686 = vld [vmem:[#allocation3 + $0x48] sm:$0xff]
        %v2687 = vld [vmem:[#allocation3 + $0x50] sm:$0xff]
        %v2688 = vld [vmem:[#allocation3 + $0x58] sm:$0xff]
        %v2689 = vld [vmem:[#allocation3 + $0x60] sm:$0xff]
        %v2690 = vld [vmem:[#allocation3 + $0x90] sm:$0xff]
        %v2691 = vld [vmem:[#allocation3 + $0x98] sm:$0xff]
        %v2692 = vld [vmem:[#allocation3 + $0xa0] sm:$0xff]
        %v2693 = vld [vmem:[#allocation3 + $0xa8] sm:$0xff]
        %v2694 = vld [vmem:[#allocation3 + $0xd8] sm:$0xff]
        %v2695 = vld [vmem:[#allocation3 + $0xe0] sm:$0xff]
        %v2696 = vld [vmem:[#allocation3 + $0xe8] sm:$0xff]
        %v2697 = vld [vmem:[#allocation3 + $0xf0] sm:$0xff]
        %v2698 = vld [vmem:[#allocation3 + $0x120] sm:$0xff]
        %v2699 = vld [vmem:[#allocation3 + $0x128] sm:$0xff]
        %v2700 = vld [vmem:[#allocation3 + $0x130] sm:$0xff]
        %v2701 = vld [vmem:[#allocation3 + $0x138] sm:$0xff]
        %v2702 = vld [vmem:[#allocation3 + $0x168] sm:$0xff]
        %v2703 = vld [vmem:[#allocation3 + $0x170] sm:$0xff]
        %v2704 = vld [vmem:[#allocation3 + $0x178] sm:$0xff]
        %v2705 = vld [vmem:[#allocation3 + $0x180] sm:$0xff]
        %v2706 = vld [vmem:[#allocation3 + $0x1b0] sm:$0xff]
        %v2707 = vld [vmem:[#allocation3 + $0x1b8] sm:$0xff]
        %v2708 = vld [vmem:[#allocation3 + $0x1c0] sm:$0xff]
        %v2709 = vld [vmem:[#allocation3 + $0x1c8] sm:$0xff]
        %v2710 = vld [vmem:[#allocation3 + $0x1f8] sm:$0xff]
        %v2711 = vld [vmem:[#allocation3 + $0x200] sm:$0xff]
        %v2712 = vld [vmem:[#allocation3 + $0x208] sm:$0xff]
        %v2713 = vld [vmem:[#allocation3 + $0x210] sm:$0xff]
        %v2714 = vld [vmem:[#allocation3 + $0x240] sm:$0xff]
        %v2715 = vld [vmem:[#allocation3 + $0x248] sm:$0xff]
        %v2716 = vld [vmem:[#allocation3 + $0x250] sm:$0xff]
        %v2717 = vld [vmem:[#allocation3 + $0x258] sm:$0xff]
        %v2718 = vld [vmem:[#allocation3 + $0x288] sm:$0xff]
        %v2719 = vld [vmem:[#allocation3 + $0x290] sm:$0xff]
        %v2720 = vld [vmem:[#allocation3 + $0x298] sm:$0xff]
        %v2721 = vld [vmem:[#allocation3 + $0x2a0] sm:$0xff]
        %v2722 = vld [vmem:[#allocation3 + $0x2d0] sm:$0xff]
        %v2723 = vld [vmem:[#allocation3 + $0x2d8] sm:$0xff]
        %v2724 = vld [vmem:[#allocation3 + $0x2e0] sm:$0xff]
        %v2725 = vld [vmem:[#allocation3 + $0x2e8] sm:$0xff]
        %v2726 = vld [vmem:[#allocation3 + $0x318] sm:$0xff]
        %v2727 = vld [vmem:[#allocation3 + $0x320] sm:$0xff]
        %v2728 = vld [vmem:[#allocation3 + $0x328] sm:$0xff]
        %v2729 = vld [vmem:[#allocation3 + $0x330] sm:$0xff]
        %v2730 = vld [vmem:[#allocation3 + $0x360] sm:$0xff]
        %v2731 = vld [vmem:[#allocation3 + $0x368] sm:$0xff]
        %v2732 = vld [vmem:[#allocation3 + $0x370] sm:$0xff]
        %v2733 = vld [vmem:[#allocation3 + $0x378] sm:$0xff]
        %v2734 = vld [vmem:[#allocation3 + $0x3a8] sm:$0xff]
        %v2735 = vld [vmem:[#allocation3 + $0x3b0] sm:$0xff]
        %v2736 = vld [vmem:[#allocation3 + $0x3b8] sm:$0xff]
        %v2737 = vld [vmem:[#allocation3 + $0x3c0] sm:$0xff]
        %v2738 = vld [vmem:[#allocation3 + $0x3f0] sm:$0xff]
        %v2739 = vld [vmem:[#allocation3 + $0x3f8] sm:$0xff]
        %v2740 = vld [vmem:[#allocation3 + $0x400] sm:$0xff]
        %v2741 = vld [vmem:[#allocation3 + $0x408] sm:$0xff]
        %v2742 = vld [vmem:[#allocation3 + $0x438] sm:$0xff]
        %v2743 = vld [vmem:[#allocation3 + $0x440] sm:$0xff]
        %v2744 = vld [vmem:[#allocation3 + $0x448] sm:$0xff]
        %v2745 = vld [vmem:[#allocation3 + $0x450] sm:$0xff]
        %v2746 = vmul.f32 %v2666, %v2682
        %v2747 = vmul.f32 %v2666, %v2683
        %v2748 = vmul.f32 %v2666, %v2684
        %v2749 = vmul.f32 %v2666, %v2685
        %v2750 = vmul.f32 %v2667, %v2686
        %v2751 = vmul.f32 %v2667, %v2687
        %v2752 = vmul.f32 %v2667, %v2688
        %v2753 = vmul.f32 %v2667, %v2689
        %v2754 = vmul.f32 %v2668, %v2690
        %v2755 = vmul.f32 %v2668, %v2691
        %v2756 = vmul.f32 %v2668, %v2692
        %v2757 = vmul.f32 %v2668, %v2693
        %v2758 = vmul.f32 %v2669, %v2694
        %v2759 = vmul.f32 %v2669, %v2695
        %v2760 = vmul.f32 %v2669, %v2696
        %v2761 = vmul.f32 %v2669, %v2697
        %v2762 = vmul.f32 %v2670, %v2698
        %v2763 = vmul.f32 %v2670, %v2699
        %v2764 = vmul.f32 %v2670, %v2700
        %v2765 = vmul.f32 %v2670, %v2701
        %v2766 = vmul.f32 %v2671, %v2702
        %v2767 = vmul.f32 %v2671, %v2703
        %v2768 = vmul.f32 %v2671, %v2704
        %v2769 = vmul.f32 %v2671, %v2705
        %v2770 = vmul.f32 %v2672, %v2706
        %v2771 = vmul.f32 %v2672, %v2707
        %v2772 = vmul.f32 %v2672, %v2708
        %v2773 = vmul.f32 %v2672, %v2709
        %v2774 = vmul.f32 %v2673, %v2710
        %v2775 = vmul.f32 %v2673, %v2711
        %v2776 = vmul.f32 %v2673, %v2712
        %v2777 = vmul.f32 %v2673, %v2713
        %v2778 = vmul.f32 %v2674, %v2714
        %v2779 = vmul.f32 %v2674, %v2715
        %v2780 = vmul.f32 %v2674, %v2716
        %v2781 = vmul.f32 %v2674, %v2717
        %v2782 = vmul.f32 %v2675, %v2718
        %v2783 = vmul.f32 %v2675, %v2719
        %v2784 = vmul.f32 %v2675, %v2720
        %v2785 = vmul.f32 %v2675, %v2721
        %v2786 = vmul.f32 %v2676, %v2722
        %v2787 = vmul.f32 %v2676, %v2723
        %v2788 = vmul.f32 %v2676, %v2724
        %v2789 = vmul.f32 %v2676, %v2725
        %v2790 = vmul.f32 %v2677, %v2726
        %v2791 = vmul.f32 %v2677, %v2727
        %v2792 = vmul.f32 %v2677, %v2728
        %v2793 = vmul.f32 %v2677, %v2729
        %v2794 = vmul.f32 %v2678, %v2730
        %v2795 = vmul.f32 %v2678, %v2731
        %v2796 = vmul.f32 %v2678, %v2732
        %v2797 = vmul.f32 %v2678, %v2733
        %v2798 = vmul.f32 %v2679, %v2734
        %v2799 = vmul.f32 %v2679, %v2735
        %v2800 = vmul.f32 %v2679, %v2736
        %v2801 = vmul.f32 %v2679, %v2737
        %v2802 = vmul.f32 %v2680, %v2738
        %v2803 = vmul.f32 %v2680, %v2739
        %v2804 = vmul.f32 %v2680, %v2740
        %v2805 = vmul.f32 %v2680, %v2741
        %v2806 = vmul.f32 %v2681, %v2742
        %v2807 = vmul.f32 %v2681, %v2743
        %v2808 = vmul.f32 %v2681, %v2744
        %v2809 = vmul.f32 %v2681, %v2745
        %2810 = vst [vmem:[#allocation5] sm:$0xff] %v2746
        %2811 = vst [vmem:[#allocation5 + $0x8] sm:$0xff] %v2747
        %2812 = vst [vmem:[#allocation5 + $0x10] sm:$0xff] %v2748
        %2813 = vst [vmem:[#allocation5 + $0x18] sm:$0xff] %v2749
        %2814 = vst [vmem:[#allocation5 + $0x20] sm:$0xff] %v2750
        %2815 = vst [vmem:[#allocation5 + $0x28] sm:$0xff] %v2751
        %2816 = vst [vmem:[#allocation5 + $0x30] sm:$0xff] %v2752
        %2817 = vst [vmem:[#allocation5 + $0x38] sm:$0xff] %v2753
        %2818 = vst [vmem:[#allocation5 + $0x40] sm:$0xff] %v2754
        %2819 = vst [vmem:[#allocation5 + $0x48] sm:$0xff] %v2755
        %2820 = vst [vmem:[#allocation5 + $0x50] sm:$0xff] %v2756
        %2821 = vst [vmem:[#allocation5 + $0x58] sm:$0xff] %v2757
        %2822 = vst [vmem:[#allocation5 + $0x60] sm:$0xff] %v2758
        %2823 = vst [vmem:[#allocation5 + $0x68] sm:$0xff] %v2759
        %2824 = vst [vmem:[#allocation5 + $0x70] sm:$0xff] %v2760
        %2825 = vst [vmem:[#allocation5 + $0x78] sm:$0xff] %v2761
        %2826 = vst [vmem:[#allocation5 + $0x80] sm:$0xff] %v2762
        %2827 = vst [vmem:[#allocation5 + $0x88] sm:$0xff] %v2763
        %2828 = vst [vmem:[#allocation5 + $0x90] sm:$0xff] %v2764
        %2829 = vst [vmem:[#allocation5 + $0x98] sm:$0xff] %v2765
        %2830 = vst [vmem:[#allocation5 + $0xa0] sm:$0xff] %v2766
        %2831 = vst [vmem:[#allocation5 + $0xa8] sm:$0xff] %v2767
        %2832 = vst [vmem:[#allocation5 + $0xb0] sm:$0xff] %v2768
        %2833 = vst [vmem:[#allocation5 + $0xb8] sm:$0xff] %v2769
        %2834 = vst [vmem:[#allocation5 + $0xc0] sm:$0xff] %v2770
        %2835 = vst [vmem:[#allocation5 + $0xc8] sm:$0xff] %v2771
        %2836 = vst [vmem:[#allocation5 + $0xd0] sm:$0xff] %v2772
        %2837 = vst [vmem:[#allocation5 + $0xd8] sm:$0xff] %v2773
        %2838 = vst [vmem:[#allocation5 + $0xe0] sm:$0xff] %v2774
        %2839 = vst [vmem:[#allocation5 + $0xe8] sm:$0xff] %v2775
        %2840 = vst [vmem:[#allocation5 + $0xf0] sm:$0xff] %v2776
        %2841 = vst [vmem:[#allocation5 + $0xf8] sm:$0xff] %v2777
        %2842 = vst [vmem:[#allocation5 + $0x100] sm:$0xff] %v2778
        %2843 = vst [vmem:[#allocation5 + $0x108] sm:$0xff] %v2779
        %2844 = vst [vmem:[#allocation5 + $0x110] sm:$0xff] %v2780
        %2845 = vst [vmem:[#allocation5 + $0x118] sm:$0xff] %v2781
        %2846 = vst [vmem:[#allocation5 + $0x120] sm:$0xff] %v2782
        %2847 = vst [vmem:[#allocation5 + $0x128] sm:$0xff] %v2783
        %2848 = vst [vmem:[#allocation5 + $0x130] sm:$0xff] %v2784
        %2849 = vst [vmem:[#allocation5 + $0x138] sm:$0xff] %v2785
        %2850 = vst [vmem:[#allocation5 + $0x140] sm:$0xff] %v2786
        %2851 = vst [vmem:[#allocation5 + $0x148] sm:$0xff] %v2787
        %2852 = vst [vmem:[#allocation5 + $0x150] sm:$0xff] %v2788
        %2853 = vst [vmem:[#allocation5 + $0x158] sm:$0xff] %v2789
        %2854 = vst [vmem:[#allocation5 + $0x160] sm:$0xff] %v2790
        %2855 = vst [vmem:[#allocation5 + $0x168] sm:$0xff] %v2791
        %2856 = vst [vmem:[#allocation5 + $0x170] sm:$0xff] %v2792
        %2857 = vst [vmem:[#allocation5 + $0x178] sm:$0xff] %v2793
        %2858 = vst [vmem:[#allocation5 + $0x180] sm:$0xff] %v2794
        %2859 = vst [vmem:[#allocation5 + $0x188] sm:$0xff] %v2795
        %2860 = vst [vmem:[#allocation5 + $0x190] sm:$0xff] %v2796
        %2861 = vst [vmem:[#allocation5 + $0x198] sm:$0xff] %v2797
        %2862 = vst [vmem:[#allocation5 + $0x1a0] sm:$0xff] %v2798
        %2863 = vst [vmem:[#allocation5 + $0x1a8] sm:$0xff] %v2799
        %2864 = vst [vmem:[#allocation5 + $0x1b0] sm:$0xff] %v2800
        %2865 = vst [vmem:[#allocation5 + $0x1b8] sm:$0xff] %v2801
        %2866 = vst [vmem:[#allocation5 + $0x1c0] sm:$0xff] %v2802
        %2867 = vst [vmem:[#allocation5 + $0x1c8] sm:$0xff] %v2803
        %2868 = vst [vmem:[#allocation5 + $0x1d0] sm:$0xff] %v2804
        %2869 = vst [vmem:[#allocation5 + $0x1d8] sm:$0xff] %v2805
        %2870 = vst [vmem:[#allocation5 + $0x1e0] sm:$0xff] %v2806
        %2871 = vst [vmem:[#allocation5 + $0x1e8] sm:$0xff] %v2807
        %2872 = vst [vmem:[#allocation5 + $0x1f0] sm:$0xff] %v2808
        %2873 = vst [vmem:[#allocation5 + $0x1f8] sm:$0xff] %v2809
        %v2874 = vsub.f32 0.0, %v585
        %v2875 = vsub.f32 0.0, %v590
        %v2876 = vsub.f32 0.0, %v595
        %v2877 = vsub.f32 0.0, %v600
        %v2878 = vsub.f32 0.0, %v605
        %v2879 = vsub.f32 0.0, %v610
        %v2880 = vsub.f32 0.0, %v615
        %v2881 = vsub.f32 0.0, %v620
        %v2882 = vsub.f32 0.0, %v625
        %v2883 = vsub.f32 0.0, %v630
        %v2884 = vsub.f32 0.0, %v635
        %v2885 = vsub.f32 0.0, %v640
        %v2886 = vsub.f32 0.0, %v645
        %v2887 = vsub.f32 0.0, %v650
        %v2888 = vsub.f32 0.0, %v655
        %v2889 = vsub.f32 0.0, %v660
        %v2890 = vmul.f32 %v2874, 1.442695
        %v2891 = vpow.pop %v2890
        %v2892 = vmul.f32 %v2875, 1.442695
        %v2893 = vpow.pop %v2892
        %v2894 = vmul.f32 %v2876, 1.442695
        %v2895 = vpow.pop %v2894
        %v2896 = vmul.f32 %v2877, 1.442695
        %v2897 = vpow.pop %v2896
        %v2898 = vmul.f32 %v2878, 1.442695
        %v2899 = vpow.pop %v2898
        %v2900 = vmul.f32 %v2879, 1.442695
        %v2901 = vpow.pop %v2900
        %v2902 = vmul.f32 %v2880, 1.442695
        %v2903 = vpow.pop %v2902
        %v2904 = vmul.f32 %v2881, 1.442695
        %v2905 = vpow.pop %v2904
        %v2906 = vmul.f32 %v2882, 1.442695
        %v2907 = vpow.pop %v2906
        %v2908 = vmul.f32 %v2883, 1.442695
        %v2909 = vpow.pop %v2908
        %v2910 = vmul.f32 %v2884, 1.442695
        %v2911 = vpow.pop %v2910
        %v2912 = vmul.f32 %v2885, 1.442695
        %v2913 = vpow.pop %v2912
        %v2914 = vmul.f32 %v2886, 1.442695
        %v2915 = vpow.pop %v2914
        %v2916 = vmul.f32 %v2887, 1.442695
        %v2917 = vpow.pop %v2916
        %v2918 = vmul.f32 %v2888, 1.442695
        %v2919 = vpow.pop %v2918
        %v2920 = vmul.f32 %v2889, 1.442695
        %v2921 = vpow.pop %v2920
        %v2922 = vadd.f32 %v2891, 1.0
        %v2923 = vadd.f32 %v2893, 1.0
        %v2924 = vadd.f32 %v2895, 1.0
        %v2925 = vadd.f32 %v2897, 1.0
        %v2926 = vadd.f32 %v2899, 1.0
        %v2927 = vadd.f32 %v2901, 1.0
        %v2928 = vadd.f32 %v2903, 1.0
        %v2929 = vadd.f32 %v2905, 1.0
        %v2930 = vadd.f32 %v2907, 1.0
        %v2931 = vadd.f32 %v2909, 1.0
        %v2932 = vadd.f32 %v2911, 1.0
        %v2933 = vadd.f32 %v2913, 1.0
        %v2934 = vadd.f32 %v2915, 1.0
        %v2935 = vadd.f32 %v2917, 1.0
        %v2936 = vadd.f32 %v2919, 1.0
        %v2937 = vadd.f32 %v2921, 1.0
        %v2938 = vrcp.pop %v2922
        %v2939 = vmul.f32 1.0, %v2938
        %v2940 = vrcp.pop %v2923
        %v2941 = vmul.f32 1.0, %v2940
        %v2942 = vrcp.pop %v2924
        %v2943 = vmul.f32 1.0, %v2942
        %v2944 = vrcp.pop %v2925
        %v2945 = vmul.f32 1.0, %v2944
        %v2946 = vrcp.pop %v2926
        %v2947 = vmul.f32 1.0, %v2946
        %v2948 = vrcp.pop %v2927
        %v2949 = vmul.f32 1.0, %v2948
        %v2950 = vrcp.pop %v2928
        %v2951 = vmul.f32 1.0, %v2950
        %v2952 = vrcp.pop %v2929
        %v2953 = vmul.f32 1.0, %v2952
        %v2954 = vrcp.pop %v2930
        %v2955 = vmul.f32 1.0, %v2954
        %v2956 = vrcp.pop %v2931
        %v2957 = vmul.f32 1.0, %v2956
        %v2958 = vrcp.pop %v2932
        %v2959 = vmul.f32 1.0, %v2958
        %v2960 = vrcp.pop %v2933
        %v2961 = vmul.f32 1.0, %v2960
        %v2962 = vrcp.pop %v2934
        %v2963 = vmul.f32 1.0, %v2962
        %v2964 = vrcp.pop %v2935
        %v2965 = vmul.f32 1.0, %v2964
        %v2966 = vrcp.pop %v2936
        %v2967 = vmul.f32 1.0, %v2966
        %v2968 = vrcp.pop %v2937
        %v2969 = vmul.f32 1.0, %v2968
        %v2970 = vmul.f32 %v585, %v2939
        %v2971 = vmul.f32 %v590, %v2941
        %v2972 = vmul.f32 %v595, %v2943
        %v2973 = vmul.f32 %v600, %v2945
        %v2974 = vmul.f32 %v605, %v2947
        %v2975 = vmul.f32 %v610, %v2949
        %v2976 = vmul.f32 %v615, %v2951
        %v2977 = vmul.f32 %v620, %v2953
        %v2978 = vmul.f32 %v625, %v2955
        %v2979 = vmul.f32 %v630, %v2957
        %v2980 = vmul.f32 %v635, %v2959
        %v2981 = vmul.f32 %v640, %v2961
        %v2982 = vmul.f32 %v645, %v2963
        %v2983 = vmul.f32 %v650, %v2965
        %v2984 = vmul.f32 %v655, %v2967
        %v2985 = vmul.f32 %v660, %v2969
        %v2986 = vld [vmem:[%s7] sm:$0x1]
        %v2988 = vlaneseq
        %v2989 = vshrl.u32 %v2988, 7
        %v2990 = vsub.s32 0, %v2989
        %v2991 = vrot.slane %v2986, %v2990
        %v2993 = vmul.f32 %v2991, %v950
        %v2994 = vmul.f32 %v2991, %v951
        %v2995 = vmul.f32 %v2991, %v952
        %v2996 = vmul.f32 %v2991, %v953
        %v2997 = vmul.f32 %v2991, %v954
        %v2998 = vmul.f32 %v2991, %v955
        %v2999 = vmul.f32 %v2991, %v956
        %v3000 = vmul.f32 %v2991, %v957
        %v3001 = vmul.f32 %v2991, %v958
        %v3002 = vmul.f32 %v2991, %v959
        %v3003 = vmul.f32 %v2991, %v960
        %v3004 = vmul.f32 %v2991, %v961
        %v3005 = vmul.f32 %v2991, %v962
        %v3006 = vmul.f32 %v2991, %v963
        %v3007 = vmul.f32 %v2991, %v964
        %v3008 = vmul.f32 %v2991, %v965
        %3025 = vrot.lane.b32.xlu0 %v2970, 64
        %v3026 = vpop.permute.xlu0 %3025
        %3027 = vrot.lane.b32.xlu0 %v2971, 64
        %v3028 = vpop.permute.xlu0 %3027
        %3029 = vrot.lane.b32.xlu0 %v2972, 64
        %v3030 = vpop.permute.xlu0 %3029
        %3031 = vrot.lane.b32.xlu0 %v2973, 64
        %v3032 = vpop.permute.xlu0 %3031
        %3033 = vrot.lane.b32.xlu0 %v2974, 64
        %v3034 = vpop.permute.xlu0 %3033
        %3035 = vrot.lane.b32.xlu0 %v2975, 64
        %v3036 = vpop.permute.xlu0 %3035
        %3037 = vrot.lane.b32.xlu0 %v2976, 64
        %v3038 = vpop.permute.xlu0 %3037
        %3039 = vrot.lane.b32.xlu0 %v2977, 64
        %v3040 = vpop.permute.xlu0 %3039
        %3041 = vrot.lane.b32.xlu0 %v2978, 64
        %v3042 = vpop.permute.xlu0 %3041
        %3043 = vrot.lane.b32.xlu0 %v2979, 64
        %v3044 = vpop.permute.xlu0 %3043
        %3045 = vrot.lane.b32.xlu0 %v2980, 64
        %v3046 = vpop.permute.xlu0 %3045
        %3047 = vrot.lane.b32.xlu0 %v2981, 64
        %v3048 = vpop.permute.xlu0 %3047
        %3049 = vrot.lane.b32.xlu0 %v2982, 64
        %v3050 = vpop.permute.xlu0 %3049
        %3051 = vrot.lane.b32.xlu0 %v2983, 64
        %v3052 = vpop.permute.xlu0 %3051
        %3053 = vrot.lane.b32.xlu0 %v2984, 64
        %v3054 = vpop.permute.xlu0 %3053
        %3055 = vrot.lane.b32.xlu0 %v2985, 64
        %v3056 = vpop.permute.xlu0 %3055
        %v3073 = vmul.f32 %v2993, %v3026
        %v3074 = vmul.f32 %v2994, %v3028
        %v3075 = vmul.f32 %v2995, %v3030
        %v3076 = vmul.f32 %v2996, %v3032
        %v3077 = vmul.f32 %v2997, %v3034
        %v3078 = vmul.f32 %v2998, %v3036
        %v3079 = vmul.f32 %v2999, %v3038
        %v3080 = vmul.f32 %v3000, %v3040
        %v3081 = vmul.f32 %v3001, %v3042
        %v3082 = vmul.f32 %v3002, %v3044
        %v3083 = vmul.f32 %v3003, %v3046
        %v3084 = vmul.f32 %v3004, %v3048
        %v3085 = vmul.f32 %v3005, %v3050
        %v3086 = vmul.f32 %v3006, %v3052
        %v3087 = vmul.f32 %v3007, %v3054
        %v3088 = vmul.f32 %v3008, %v3056
        %v3089 = vld [vmem:[%s9] sm:$0xff]
        %v3090 = vld [vmem:[%s9 + $0x8] sm:$0xff]
        %v3091 = vld [vmem:[%s9 + $0x10] sm:$0xff]
        %v3092 = vld [vmem:[%s9 + $0x18] sm:$0xff]
        %v3093 = vld [vmem:[%s9 + $0x20] sm:$0xff]
        %v3094 = vld [vmem:[%s9 + $0x28] sm:$0xff]
        %v3095 = vld [vmem:[%s9 + $0x30] sm:$0xff]
        %v3096 = vld [vmem:[%s9 + $0x38] sm:$0xff]
        %v3098 = vsel %vm663, %v3073, 0
        %v3101 = vsel %vm663, %v3074, 0
        %v3104 = vsel %vm663, %v3075, 0
        %v3107 = vsel %vm663, %v3076, 0
        %v3110 = vsel %vm663, %v3077, 0
        %v3113 = vsel %vm663, %v3078, 0
        %v3116 = vsel %vm663, %v3079, 0
        %v3119 = vsel %vm663, %v3080, 0
        %v3122 = vsel %vm663, %v3081, 0
        %v3125 = vsel %vm663, %v3082, 0
        %v3128 = vsel %vm663, %v3083, 0
        %v3131 = vsel %vm663, %v3084, 0
        %v3134 = vsel %vm663, %v3085, 0
        %v3137 = vsel %vm663, %v3086, 0
        %v3140 = vsel %vm663, %v3087, 0
        %v3143 = vsel %vm663, %v3088, 0
        %3145 = vmatprep.subr.mxu0 0.0
        %3146 = vmatpush1.msra.mxu0 0.0
        %3147 = vmatprep.subr.mxu0 0.0
        %3148 = vmatpush1.msra.mxu0 0.0
        %3149 = vmatprep.subr.mxu0 0.0
        %3150 = vmatpush1.msra.mxu0 0.0
        %3151 = vmatprep.subr.mxu0 0.0
        %3152 = vmatpush1.msra.mxu0 0.0
        %3153 = vmatprep.subr.mxu0 0.0
        %3154 = vmatpush1.msra.mxu0 0.0
        %3155 = vmatprep.subr.mxu0 0.0
        %3156 = vmatpush1.msra.mxu0 0.0
        %3157 = vmatprep.subr.mxu0 0.0
        %3158 = vmatpush1.msra.mxu0 0.0
        %3159 = vmatprep.subr.mxu0 0.0
        %3160 = vmatpush1.msra.mxu0 0.0
        %3161 = vmatprep.subr.mxu0 0.0
        %3162 = vmatpush1.msra.mxu0 %v3096
        %3163 = vmatprep.subr.mxu0 0.0
        %3164 = vmatpush1.msra.mxu0 %v3095
        %3165 = vmatprep.subr.mxu0 0.0
        %3166 = vmatpush1.msra.mxu0 %v3094
        %3167 = vmatprep.subr.mxu0 0.0
        %3168 = vmatpush1.msra.mxu0 %v3093
        %3169 = vmatprep.subr.mxu0 0.0
        %3170 = vmatpush1.msra.mxu0 %v3092
        %3171 = vmatprep.subr.mxu0 0.0
        %3172 = vmatpush1.msra.mxu0 %v3091
        %3173 = vmatprep.subr.mxu0 0.0
        %3174 = vmatpush1.msra.mxu0 %v3090
        %3175 = vmatprep.subr.mxu0 0.0
        %3176 = vmatpush1.msra.mxu0 %v3089
        %3177 = vmatprep.subr.mxu0 0.0
        %3178 = vmatpush2.msra.mxu0 0.0
        %3179 = vmatprep.subr.mxu0 0.0
        %3180 = vmatpush2.msra.mxu0 0.0
        %3181 = vmatprep.subr.mxu0 0.0
        %3182 = vmatpush2.msra.mxu0 0.0
        %3183 = vmatprep.subr.mxu0 0.0
        %3184 = vmatpush2.msra.mxu0 0.0
        %3185 = vmatprep.subr.mxu0 0.0
        %3186 = vmatpush2.msra.mxu0 0.0
        %3187 = vmatprep.subr.mxu0 0.0
        %3188 = vmatpush2.msra.mxu0 0.0
        %3189 = vmatprep.subr.mxu0 0.0
        %3190 = vmatpush2.msra.mxu0 0.0
        %3191 = vmatprep.subr.mxu0 0.0
        %3192 = vmatpush2.msra.mxu0 0.0
        %3193 = vmatprep.subr.mxu0 0.0
        %3194 = vmatpush2.msra.mxu0 0.0
        %3195 = vmatprep.subr.mxu0 0.0
        %3196 = vmatpush2.msra.mxu0 0.0
        %3197 = vmatprep.subr.mxu0 0.0
        %3198 = vmatpush2.msra.mxu0 0.0
        %3199 = vmatprep.subr.mxu0 0.0
        %3200 = vmatpush2.msra.mxu0 0.0
        %3201 = vmatprep.subr.mxu0 0.0
        %3202 = vmatpush2.msra.mxu0 0.0
        %3203 = vmatprep.subr.mxu0 0.0
        %3204 = vmatpush2.msra.mxu0 0.0
        %3205 = vmatprep.subr.mxu0 0.0
        %3206 = vmatpush2.msra.mxu0 0.0
        %3207 = vmatprep.subr.mxu0 0.0
        %3208 = vmatpush2.msra.mxu0 0.0
        %3209 = vmatprep.mubr.f32.mxu0 0.0
        %3210 = vmatmul.mubr.f32.gmra.mxu0 %v3098
        %v3211 = vpop.f32.mrf.mxu0
        %v3212 = vadd.f32 0.0, %v3211
        %v3213 = vpop.f32.mrf.mxu0
        %3214 = vmatprep.mubr.f32.mxu0 0.0
        %3215 = vmatmul.mubr.f32.gmra.mxu0 %v3101
        %v3216 = vpop.f32.mrf.mxu0
        %v3217 = vadd.f32 0.0, %v3216
        %v3218 = vpop.f32.mrf.mxu0
        %3219 = vmatprep.mubr.f32.mxu0 0.0
        %3220 = vmatmul.mubr.f32.gmra.mxu0 %v3104
        %v3221 = vpop.f32.mrf.mxu0
        %v3222 = vadd.f32 0.0, %v3221
        %v3223 = vpop.f32.mrf.mxu0
        %3224 = vmatprep.mubr.f32.mxu0 0.0
        %3225 = vmatmul.mubr.f32.gmra.mxu0 %v3107
        %v3226 = vpop.f32.mrf.mxu0
        %v3227 = vadd.f32 0.0, %v3226
        %v3228 = vpop.f32.mrf.mxu0
        %3229 = vmatprep.mubr.f32.mxu0 0.0
        %3230 = vmatmul.mubr.f32.gmra.mxu0 %v3110
        %v3231 = vpop.f32.mrf.mxu0
        %v3232 = vadd.f32 0.0, %v3231
        %v3233 = vpop.f32.mrf.mxu0
        %3234 = vmatprep.mubr.f32.mxu0 0.0
        %3235 = vmatmul.mubr.f32.gmra.mxu0 %v3113
        %v3236 = vpop.f32.mrf.mxu0
        %v3237 = vadd.f32 0.0, %v3236
        %v3238 = vpop.f32.mrf.mxu0
        %3239 = vmatprep.mubr.f32.mxu0 0.0
        %3240 = vmatmul.mubr.f32.gmra.mxu0 %v3116
        %v3241 = vpop.f32.mrf.mxu0
        %v3242 = vadd.f32 0.0, %v3241
        %v3243 = vpop.f32.mrf.mxu0
        %3244 = vmatprep.mubr.f32.mxu0 0.0
        %3245 = vmatmul.mubr.f32.gmra.mxu0 %v3119
        %v3246 = vpop.f32.mrf.mxu0
        %v3247 = vadd.f32 0.0, %v3246
        %v3248 = vpop.f32.mrf.mxu0
        %3249 = vmatprep.mubr.f32.mxu0 0.0
        %3250 = vmatmul.mubr.f32.gmra.mxu0 %v3122
        %v3251 = vpop.f32.mrf.mxu0
        %v3252 = vadd.f32 0.0, %v3251
        %v3253 = vpop.f32.mrf.mxu0
        %3254 = vmatprep.mubr.f32.mxu0 0.0
        %3255 = vmatmul.mubr.f32.gmra.mxu0 %v3125
        %v3256 = vpop.f32.mrf.mxu0
        %v3257 = vadd.f32 0.0, %v3256
        %v3258 = vpop.f32.mrf.mxu0
        %3259 = vmatprep.mubr.f32.mxu0 0.0
        %3260 = vmatmul.mubr.f32.gmra.mxu0 %v3128
        %v3261 = vpop.f32.mrf.mxu0
        %v3262 = vadd.f32 0.0, %v3261
        %v3263 = vpop.f32.mrf.mxu0
        %3264 = vmatprep.mubr.f32.mxu0 0.0
        %3265 = vmatmul.mubr.f32.gmra.mxu0 %v3131
        %v3266 = vpop.f32.mrf.mxu0
        %v3267 = vadd.f32 0.0, %v3266
        %v3268 = vpop.f32.mrf.mxu0
        %3269 = vmatprep.mubr.f32.mxu0 0.0
        %3270 = vmatmul.mubr.f32.gmra.mxu0 %v3134
        %v3271 = vpop.f32.mrf.mxu0
        %v3272 = vadd.f32 0.0, %v3271
        %v3273 = vpop.f32.mrf.mxu0
        %3274 = vmatprep.mubr.f32.mxu0 0.0
        %3275 = vmatmul.mubr.f32.gmra.mxu0 %v3137
        %v3276 = vpop.f32.mrf.mxu0
        %v3277 = vadd.f32 0.0, %v3276
        %v3278 = vpop.f32.mrf.mxu0
        %3279 = vmatprep.mubr.f32.mxu0 0.0
        %3280 = vmatmul.mubr.f32.gmra.mxu0 %v3140
        %v3281 = vpop.f32.mrf.mxu0
        %v3282 = vadd.f32 0.0, %v3281
        %v3283 = vpop.f32.mrf.mxu0
        %3284 = vmatprep.mubr.f32.mxu0 0.0
        %3285 = vmatmul.mubr.f32.gmra.mxu0 %v3143
        %v3286 = vpop.f32.mrf.mxu0
        %v3287 = vadd.f32 0.0, %v3286
        %v3288 = vpop.f32.mrf.mxu0
        %3289 = vdwg.mxu0
        %s3290 = smul.u32 0, 4
        %s3291 = smul.addr %s3290, 8
        %s3292 = scalar_lea.vmem [#allocation4], %s3291
        %v3293 = vld [vmem:[%s3292] sm:$0xff]
        %v3294 = vld [vmem:[%s3292 + $0x8] sm:$0xff]
        %v3295 = vld [vmem:[%s3292 + $0x10] sm:$0xff]
        %v3296 = vld [vmem:[%s3292 + $0x18] sm:$0xff]
        %v3297 = vmul.f32 %v3293, 0.0
        %v3298 = vmul.f32 %v3294, 0.0
        %v3299 = vmul.f32 %v3295, 0.0
        %v3300 = vmul.f32 %v3296, 0.0
        %s3301 = smul.addr %s3290, 8
        %s3302 = scalar_lea.vmem [#allocation5], %s3301
        %v3303 = vld [vmem:[%s3302] sm:$0xff]
        %v3304 = vld [vmem:[%s3302 + $0x8] sm:$0xff]
        %v3305 = vld [vmem:[%s3302 + $0x10] sm:$0xff]
        %v3306 = vld [vmem:[%s3302 + $0x18] sm:$0xff]
        %v3307 = vadd.f32 %v3297, %v3303
        %v3308 = vadd.f32 %v3298, %v3304
        %v3309 = vadd.f32 %v3299, %v3305
        %v3310 = vadd.f32 %v3300, %v3306
        %s3311 = smul.addr %s3290, 8
        %s3312 = scalar_lea.vmem [#allocation6], %s3311
        %3313 = vst [vmem:[%s3312] sm:$0xff] %v3307
        %3314 = vst [vmem:[%s3312 + $0x8] sm:$0xff] %v3308
        %3315 = vst [vmem:[%s3312 + $0x10] sm:$0xff] %v3309
        %3316 = vst [vmem:[%s3312 + $0x18] sm:$0xff] %v3310
        %s3317 = smul.u32 1, 4
        %s3318 = smul.addr %s3317, 8
        %s3319 = scalar_lea.vmem [#allocation4], %s3318
        %v3320 = vld [vmem:[%s3319] sm:$0xff]
        %v3321 = vld [vmem:[%s3319 + $0x8] sm:$0xff]
        %v3322 = vld [vmem:[%s3319 + $0x10] sm:$0xff]
        %v3323 = vld [vmem:[%s3319 + $0x18] sm:$0xff]
        %v3324 = vmul.f32 %v3320, %v3307
        %v3325 = vmul.f32 %v3321, %v3308
        %v3326 = vmul.f32 %v3322, %v3309
        %v3327 = vmul.f32 %v3323, %v3310
        %s3328 = smul.addr %s3317, 8
        %s3329 = scalar_lea.vmem [#allocation5], %s3328
        %v3330 = vld [vmem:[%s3329] sm:$0xff]
        %v3331 = vld [vmem:[%s3329 + $0x8] sm:$0xff]
        %v3332 = vld [vmem:[%s3329 + $0x10] sm:$0xff]
        %v3333 = vld [vmem:[%s3329 + $0x18] sm:$0xff]
        %v3334 = vadd.f32 %v3324, %v3330
        %v3335 = vadd.f32 %v3325, %v3331
        %v3336 = vadd.f32 %v3326, %v3332
        %v3337 = vadd.f32 %v3327, %v3333
        %s3338 = smul.addr %s3317, 8
        %s3339 = scalar_lea.vmem [#allocation6], %s3338
        %3340 = vst [vmem:[%s3339] sm:$0xff] %v3334
        %3341 = vst [vmem:[%s3339 + $0x8] sm:$0xff] %v3335
        %3342 = vst [vmem:[%s3339 + $0x10] sm:$0xff] %v3336
        %3343 = vst [vmem:[%s3339 + $0x18] sm:$0xff] %v3337
        %s3344 = smul.u32 2, 4
        %s3345 = smul.addr %s3344, 8
        %s3346 = scalar_lea.vmem [#allocation4], %s3345
        %v3347 = vld [vmem:[%s3346] sm:$0xff]
        %v3348 = vld [vmem:[%s3346 + $0x8] sm:$0xff]
        %v3349 = vld [vmem:[%s3346 + $0x10] sm:$0xff]
        %v3350 = vld [vmem:[%s3346 + $0x18] sm:$0xff]
        %v3351 = vmul.f32 %v3347, %v3334
        %v3352 = vmul.f32 %v3348, %v3335
        %v3353 = vmul.f32 %v3349, %v3336
        %v3354 = vmul.f32 %v3350, %v3337
        %s3355 = smul.addr %s3344, 8
        %s3356 = scalar_lea.vmem [#allocation5], %s3355
        %v3357 = vld [vmem:[%s3356] sm:$0xff]
        %v3358 = vld [vmem:[%s3356 + $0x8] sm:$0xff]
        %v3359 = vld [vmem:[%s3356 + $0x10] sm:$0xff]
        %v3360 = vld [vmem:[%s3356 + $0x18] sm:$0xff]
        %v3361 = vadd.f32 %v3351, %v3357
        %v3362 = vadd.f32 %v3352, %v3358
        %v3363 = vadd.f32 %v3353, %v3359
        %v3364 = vadd.f32 %v3354, %v3360
        %s3365 = smul.addr %s3344, 8
        %s3366 = scalar_lea.vmem [#allocation6], %s3365
        %3367 = vst [vmem:[%s3366] sm:$0xff] %v3361
        %3368 = vst [vmem:[%s3366 + $0x8] sm:$0xff] %v3362
        %3369 = vst [vmem:[%s3366 + $0x10] sm:$0xff] %v3363
        %3370 = vst [vmem:[%s3366 + $0x18] sm:$0xff] %v3364
        %s3371 = smul.u32 3, 4
        %s3372 = smul.addr %s3371, 8
        %s3373 = scalar_lea.vmem [#allocation4], %s3372
        %v3374 = vld [vmem:[%s3373] sm:$0xff]
        %v3375 = vld [vmem:[%s3373 + $0x8] sm:$0xff]
        %v3376 = vld [vmem:[%s3373 + $0x10] sm:$0xff]
        %v3377 = vld [vmem:[%s3373 + $0x18] sm:$0xff]
        %v3378 = vmul.f32 %v3374, %v3361
        %v3379 = vmul.f32 %v3375, %v3362
        %v3380 = vmul.f32 %v3376, %v3363
        %v3381 = vmul.f32 %v3377, %v3364
        %s3382 = smul.addr %s3371, 8
        %s3383 = scalar_lea.vmem [#allocation5], %s3382
        %v3384 = vld [vmem:[%s3383] sm:$0xff]
        %v3385 = vld [vmem:[%s3383 + $0x8] sm:$0xff]
        %v3386 = vld [vmem:[%s3383 + $0x10] sm:$0xff]
        %v3387 = vld [vmem:[%s3383 + $0x18] sm:$0xff]
        %v3388 = vadd.f32 %v3378, %v3384
        %v3389 = vadd.f32 %v3379, %v3385
        %v3390 = vadd.f32 %v3380, %v3386
        %v3391 = vadd.f32 %v3381, %v3387
        %s3392 = smul.addr %s3371, 8
        %s3393 = scalar_lea.vmem [#allocation6], %s3392
        %3394 = vst [vmem:[%s3393] sm:$0xff] %v3388
        %3395 = vst [vmem:[%s3393 + $0x8] sm:$0xff] %v3389
        %3396 = vst [vmem:[%s3393 + $0x10] sm:$0xff] %v3390
        %3397 = vst [vmem:[%s3393 + $0x18] sm:$0xff] %v3391
        %s3398 = smul.u32 4, 4
        %s3399 = smul.addr %s3398, 8
        %s3400 = scalar_lea.vmem [#allocation4], %s3399
        %v3401 = vld [vmem:[%s3400] sm:$0xff]
        %v3402 = vld [vmem:[%s3400 + $0x8] sm:$0xff]
        %v3403 = vld [vmem:[%s3400 + $0x10] sm:$0xff]
        %v3404 = vld [vmem:[%s3400 + $0x18] sm:$0xff]
        %v3405 = vmul.f32 %v3401, %v3388
        %v3406 = vmul.f32 %v3402, %v3389
        %v3407 = vmul.f32 %v3403, %v3390
        %v3408 = vmul.f32 %v3404, %v3391
        %s3409 = smul.addr %s3398, 8
        %s3410 = scalar_lea.vmem [#allocation5], %s3409
        %v3411 = vld [vmem:[%s3410] sm:$0xff]
        %v3412 = vld [vmem:[%s3410 + $0x8] sm:$0xff]
        %v3413 = vld [vmem:[%s3410 + $0x10] sm:$0xff]
        %v3414 = vld [vmem:[%s3410 + $0x18] sm:$0xff]
        %v3415 = vadd.f32 %v3405, %v3411
        %v3416 = vadd.f32 %v3406, %v3412
        %v3417 = vadd.f32 %v3407, %v3413
        %v3418 = vadd.f32 %v3408, %v3414
        %s3419 = smul.addr %s3398, 8
        %s3420 = scalar_lea.vmem [#allocation6], %s3419
        %3421 = vst [vmem:[%s3420] sm:$0xff] %v3415
        %3422 = vst [vmem:[%s3420 + $0x8] sm:$0xff] %v3416
        %3423 = vst [vmem:[%s3420 + $0x10] sm:$0xff] %v3417
        %3424 = vst [vmem:[%s3420 + $0x18] sm:$0xff] %v3418
        %s3425 = smul.u32 5, 4
        %s3426 = smul.addr %s3425, 8
        %s3427 = scalar_lea.vmem [#allocation4], %s3426
        %v3428 = vld [vmem:[%s3427] sm:$0xff]
        %v3429 = vld [vmem:[%s3427 + $0x8] sm:$0xff]
        %v3430 = vld [vmem:[%s3427 + $0x10] sm:$0xff]
        %v3431 = vld [vmem:[%s3427 + $0x18] sm:$0xff]
        %v3432 = vmul.f32 %v3428, %v3415
        %v3433 = vmul.f32 %v3429, %v3416
        %v3434 = vmul.f32 %v3430, %v3417
        %v3435 = vmul.f32 %v3431, %v3418
        %s3436 = smul.addr %s3425, 8
        %s3437 = scalar_lea.vmem [#allocation5], %s3436
        %v3438 = vld [vmem:[%s3437] sm:$0xff]
        %v3439 = vld [vmem:[%s3437 + $0x8] sm:$0xff]
        %v3440 = vld [vmem:[%s3437 + $0x10] sm:$0xff]
        %v3441 = vld [vmem:[%s3437 + $0x18] sm:$0xff]
        %v3442 = vadd.f32 %v3432, %v3438
        %v3443 = vadd.f32 %v3433, %v3439
        %v3444 = vadd.f32 %v3434, %v3440
        %v3445 = vadd.f32 %v3435, %v3441
        %s3446 = smul.addr %s3425, 8
        %s3447 = scalar_lea.vmem [#allocation6], %s3446
        %3448 = vst [vmem:[%s3447] sm:$0xff] %v3442
        %3449 = vst [vmem:[%s3447 + $0x8] sm:$0xff] %v3443
        %3450 = vst [vmem:[%s3447 + $0x10] sm:$0xff] %v3444
        %3451 = vst [vmem:[%s3447 + $0x18] sm:$0xff] %v3445
        %s3452 = smul.u32 6, 4
        %s3453 = smul.addr %s3452, 8
        %s3454 = scalar_lea.vmem [#allocation4], %s3453
        %v3455 = vld [vmem:[%s3454] sm:$0xff]
        %v3456 = vld [vmem:[%s3454 + $0x8] sm:$0xff]
        %v3457 = vld [vmem:[%s3454 + $0x10] sm:$0xff]
        %v3458 = vld [vmem:[%s3454 + $0x18] sm:$0xff]
        %v3459 = vmul.f32 %v3455, %v3442
        %v3460 = vmul.f32 %v3456, %v3443
        %v3461 = vmul.f32 %v3457, %v3444
        %v3462 = vmul.f32 %v3458, %v3445
        %s3463 = smul.addr %s3452, 8
        %s3464 = scalar_lea.vmem [#allocation5], %s3463
        %v3465 = vld [vmem:[%s3464] sm:$0xff]
        %v3466 = vld [vmem:[%s3464 + $0x8] sm:$0xff]
        %v3467 = vld [vmem:[%s3464 + $0x10] sm:$0xff]
        %v3468 = vld [vmem:[%s3464 + $0x18] sm:$0xff]
        %v3469 = vadd.f32 %v3459, %v3465
        %v3470 = vadd.f32 %v3460, %v3466
        %v3471 = vadd.f32 %v3461, %v3467
        %v3472 = vadd.f32 %v3462, %v3468
        %s3473 = smul.addr %s3452, 8
        %s3474 = scalar_lea.vmem [#allocation6], %s3473
        %3475 = vst [vmem:[%s3474] sm:$0xff] %v3469
        %3476 = vst [vmem:[%s3474 + $0x8] sm:$0xff] %v3470
        %3477 = vst [vmem:[%s3474 + $0x10] sm:$0xff] %v3471
        %3478 = vst [vmem:[%s3474 + $0x18] sm:$0xff] %v3472
        %s3479 = smul.u32 7, 4
        %s3480 = smul.addr %s3479, 8
        %s3481 = scalar_lea.vmem [#allocation4], %s3480
        %v3482 = vld [vmem:[%s3481] sm:$0xff]
        %v3483 = vld [vmem:[%s3481 + $0x8] sm:$0xff]
        %v3484 = vld [vmem:[%s3481 + $0x10] sm:$0xff]
        %v3485 = vld [vmem:[%s3481 + $0x18] sm:$0xff]
        %v3486 = vmul.f32 %v3482, %v3469
        %v3487 = vmul.f32 %v3483, %v3470
        %v3488 = vmul.f32 %v3484, %v3471
        %v3489 = vmul.f32 %v3485, %v3472
        %s3490 = smul.addr %s3479, 8
        %s3491 = scalar_lea.vmem [#allocation5], %s3490
        %v3492 = vld [vmem:[%s3491] sm:$0xff]
        %v3493 = vld [vmem:[%s3491 + $0x8] sm:$0xff]
        %v3494 = vld [vmem:[%s3491 + $0x10] sm:$0xff]
        %v3495 = vld [vmem:[%s3491 + $0x18] sm:$0xff]
        %v3496 = vadd.f32 %v3486, %v3492
        %v3497 = vadd.f32 %v3487, %v3493
        %v3498 = vadd.f32 %v3488, %v3494
        %v3499 = vadd.f32 %v3489, %v3495
        %s3500 = smul.addr %s3479, 8
        %s3501 = scalar_lea.vmem [#allocation6], %s3500
        %3502 = vst [vmem:[%s3501] sm:$0xff] %v3496
        %3503 = vst [vmem:[%s3501 + $0x8] sm:$0xff] %v3497
        %3504 = vst [vmem:[%s3501 + $0x10] sm:$0xff] %v3498
        %3505 = vst [vmem:[%s3501 + $0x18] sm:$0xff] %v3499
        %s3506 = smul.u32 8, 4
        %s3507 = smul.addr %s3506, 8
        %s3508 = scalar_lea.vmem [#allocation4], %s3507
        %v3509 = vld [vmem:[%s3508] sm:$0xff]
        %v3510 = vld [vmem:[%s3508 + $0x8] sm:$0xff]
        %v3511 = vld [vmem:[%s3508 + $0x10] sm:$0xff]
        %v3512 = vld [vmem:[%s3508 + $0x18] sm:$0xff]
        %v3513 = vmul.f32 %v3509, %v3496
        %v3514 = vmul.f32 %v3510, %v3497
        %v3515 = vmul.f32 %v3511, %v3498
        %v3516 = vmul.f32 %v3512, %v3499
        %s3517 = smul.addr %s3506, 8
        %s3518 = scalar_lea.vmem [#allocation5], %s3517
        %v3519 = vld [vmem:[%s3518] sm:$0xff]
        %v3520 = vld [vmem:[%s3518 + $0x8] sm:$0xff]
        %v3521 = vld [vmem:[%s3518 + $0x10] sm:$0xff]
        %v3522 = vld [vmem:[%s3518 + $0x18] sm:$0xff]
        %v3523 = vadd.f32 %v3513, %v3519
        %v3524 = vadd.f32 %v3514, %v3520
        %v3525 = vadd.f32 %v3515, %v3521
        %v3526 = vadd.f32 %v3516, %v3522
        %s3527 = smul.addr %s3506, 8
        %s3528 = scalar_lea.vmem [#allocation6], %s3527
        %3529 = vst [vmem:[%s3528] sm:$0xff] %v3523
        %3530 = vst [vmem:[%s3528 + $0x8] sm:$0xff] %v3524
        %3531 = vst [vmem:[%s3528 + $0x10] sm:$0xff] %v3525
        %3532 = vst [vmem:[%s3528 + $0x18] sm:$0xff] %v3526
        %s3533 = smul.u32 9, 4
        %s3534 = smul.addr %s3533, 8
        %s3535 = scalar_lea.vmem [#allocation4], %s3534
        %v3536 = vld [vmem:[%s3535] sm:$0xff]
        %v3537 = vld [vmem:[%s3535 + $0x8] sm:$0xff]
        %v3538 = vld [vmem:[%s3535 + $0x10] sm:$0xff]
        %v3539 = vld [vmem:[%s3535 + $0x18] sm:$0xff]
        %v3540 = vmul.f32 %v3536, %v3523
        %v3541 = vmul.f32 %v3537, %v3524
        %v3542 = vmul.f32 %v3538, %v3525
        %v3543 = vmul.f32 %v3539, %v3526
        %s3544 = smul.addr %s3533, 8
        %s3545 = scalar_lea.vmem [#allocation5], %s3544
        %v3546 = vld [vmem:[%s3545] sm:$0xff]
        %v3547 = vld [vmem:[%s3545 + $0x8] sm:$0xff]
        %v3548 = vld [vmem:[%s3545 + $0x10] sm:$0xff]
        %v3549 = vld [vmem:[%s3545 + $0x18] sm:$0xff]
        %v3550 = vadd.f32 %v3540, %v3546
        %v3551 = vadd.f32 %v3541, %v3547
        %v3552 = vadd.f32 %v3542, %v3548
        %v3553 = vadd.f32 %v3543, %v3549
        %s3554 = smul.addr %s3533, 8
        %s3555 = scalar_lea.vmem [#allocation6], %s3554
        %3556 = vst [vmem:[%s3555] sm:$0xff] %v3550
        %3557 = vst [vmem:[%s3555 + $0x8] sm:$0xff] %v3551
        %3558 = vst [vmem:[%s3555 + $0x10] sm:$0xff] %v3552
        %3559 = vst [vmem:[%s3555 + $0x18] sm:$0xff] %v3553
        %s3560 = smul.u32 10, 4
        %s3561 = smul.addr %s3560, 8
        %s3562 = scalar_lea.vmem [#allocation4], %s3561
        %v3563 = vld [vmem:[%s3562] sm:$0xff]
        %v3564 = vld [vmem:[%s3562 + $0x8] sm:$0xff]
        %v3565 = vld [vmem:[%s3562 + $0x10] sm:$0xff]
        %v3566 = vld [vmem:[%s3562 + $0x18] sm:$0xff]
        %v3567 = vmul.f32 %v3563, %v3550
        %v3568 = vmul.f32 %v3564, %v3551
        %v3569 = vmul.f32 %v3565, %v3552
        %v3570 = vmul.f32 %v3566, %v3553
        %s3571 = smul.addr %s3560, 8
        %s3572 = scalar_lea.vmem [#allocation5], %s3571
        %v3573 = vld [vmem:[%s3572] sm:$0xff]
        %v3574 = vld [vmem:[%s3572 + $0x8] sm:$0xff]
        %v3575 = vld [vmem:[%s3572 + $0x10] sm:$0xff]
        %v3576 = vld [vmem:[%s3572 + $0x18] sm:$0xff]
        %v3577 = vadd.f32 %v3567, %v3573
        %v3578 = vadd.f32 %v3568, %v3574
        %v3579 = vadd.f32 %v3569, %v3575
        %v3580 = vadd.f32 %v3570, %v3576
        %s3581 = smul.addr %s3560, 8
        %s3582 = scalar_lea.vmem [#allocation6], %s3581
        %3583 = vst [vmem:[%s3582] sm:$0xff] %v3577
        %3584 = vst [vmem:[%s3582 + $0x8] sm:$0xff] %v3578
        %3585 = vst [vmem:[%s3582 + $0x10] sm:$0xff] %v3579
        %3586 = vst [vmem:[%s3582 + $0x18] sm:$0xff] %v3580
        %s3587 = smul.u32 11, 4
        %s3588 = smul.addr %s3587, 8
        %s3589 = scalar_lea.vmem [#allocation4], %s3588
        %v3590 = vld [vmem:[%s3589] sm:$0xff]
        %v3591 = vld [vmem:[%s3589 + $0x8] sm:$0xff]
        %v3592 = vld [vmem:[%s3589 + $0x10] sm:$0xff]
        %v3593 = vld [vmem:[%s3589 + $0x18] sm:$0xff]
        %v3594 = vmul.f32 %v3590, %v3577
        %v3595 = vmul.f32 %v3591, %v3578
        %v3596 = vmul.f32 %v3592, %v3579
        %v3597 = vmul.f32 %v3593, %v3580
        %s3598 = smul.addr %s3587, 8
        %s3599 = scalar_lea.vmem [#allocation5], %s3598
        %v3600 = vld [vmem:[%s3599] sm:$0xff]
        %v3601 = vld [vmem:[%s3599 + $0x8] sm:$0xff]
        %v3602 = vld [vmem:[%s3599 + $0x10] sm:$0xff]
        %v3603 = vld [vmem:[%s3599 + $0x18] sm:$0xff]
        %v3604 = vadd.f32 %v3594, %v3600
        %v3605 = vadd.f32 %v3595, %v3601
        %v3606 = vadd.f32 %v3596, %v3602
        %v3607 = vadd.f32 %v3597, %v3603
        %s3608 = smul.addr %s3587, 8
        %s3609 = scalar_lea.vmem [#allocation6], %s3608
        %3610 = vst [vmem:[%s3609] sm:$0xff] %v3604
        %3611 = vst [vmem:[%s3609 + $0x8] sm:$0xff] %v3605
        %3612 = vst [vmem:[%s3609 + $0x10] sm:$0xff] %v3606
        %3613 = vst [vmem:[%s3609 + $0x18] sm:$0xff] %v3607
        %s3614 = smul.u32 12, 4
        %s3615 = smul.addr %s3614, 8
        %s3616 = scalar_lea.vmem [#allocation4], %s3615
        %v3617 = vld [vmem:[%s3616] sm:$0xff]
        %v3618 = vld [vmem:[%s3616 + $0x8] sm:$0xff]
        %v3619 = vld [vmem:[%s3616 + $0x10] sm:$0xff]
        %v3620 = vld [vmem:[%s3616 + $0x18] sm:$0xff]
        %v3621 = vmul.f32 %v3617, %v3604
        %v3622 = vmul.f32 %v3618, %v3605
        %v3623 = vmul.f32 %v3619, %v3606
        %v3624 = vmul.f32 %v3620, %v3607
        %s3625 = smul.addr %s3614, 8
        %s3626 = scalar_lea.vmem [#allocation5], %s3625
        %v3627 = vld [vmem:[%s3626] sm:$0xff]
        %v3628 = vld [vmem:[%s3626 + $0x8] sm:$0xff]
        %v3629 = vld [vmem:[%s3626 + $0x10] sm:$0xff]
        %v3630 = vld [vmem:[%s3626 + $0x18] sm:$0xff]
        %v3631 = vadd.f32 %v3621, %v3627
        %v3632 = vadd.f32 %v3622, %v3628
        %v3633 = vadd.f32 %v3623, %v3629
        %v3634 = vadd.f32 %v3624, %v3630
        %s3635 = smul.addr %s3614, 8
        %s3636 = scalar_lea.vmem [#allocation6], %s3635
        %3637 = vst [vmem:[%s3636] sm:$0xff] %v3631
        %3638 = vst [vmem:[%s3636 + $0x8] sm:$0xff] %v3632
        %3639 = vst [vmem:[%s3636 + $0x10] sm:$0xff] %v3633
        %3640 = vst [vmem:[%s3636 + $0x18] sm:$0xff] %v3634
        %s3641 = smul.u32 13, 4
        %s3642 = smul.addr %s3641, 8
        %s3643 = scalar_lea.vmem [#allocation4], %s3642
        %v3644 = vld [vmem:[%s3643] sm:$0xff]
        %v3645 = vld [vmem:[%s3643 + $0x8] sm:$0xff]
        %v3646 = vld [vmem:[%s3643 + $0x10] sm:$0xff]
        %v3647 = vld [vmem:[%s3643 + $0x18] sm:$0xff]
        %v3648 = vmul.f32 %v3644, %v3631
        %v3649 = vmul.f32 %v3645, %v3632
        %v3650 = vmul.f32 %v3646, %v3633
        %v3651 = vmul.f32 %v3647, %v3634
        %s3652 = smul.addr %s3641, 8
        %s3653 = scalar_lea.vmem [#allocation5], %s3652
        %v3654 = vld [vmem:[%s3653] sm:$0xff]
        %v3655 = vld [vmem:[%s3653 + $0x8] sm:$0xff]
        %v3656 = vld [vmem:[%s3653 + $0x10] sm:$0xff]
        %v3657 = vld [vmem:[%s3653 + $0x18] sm:$0xff]
        %v3658 = vadd.f32 %v3648, %v3654
        %v3659 = vadd.f32 %v3649, %v3655
        %v3660 = vadd.f32 %v3650, %v3656
        %v3661 = vadd.f32 %v3651, %v3657
        %s3662 = smul.addr %s3641, 8
        %s3663 = scalar_lea.vmem [#allocation6], %s3662
        %3664 = vst [vmem:[%s3663] sm:$0xff] %v3658
        %3665 = vst [vmem:[%s3663 + $0x8] sm:$0xff] %v3659
        %3666 = vst [vmem:[%s3663 + $0x10] sm:$0xff] %v3660
        %3667 = vst [vmem:[%s3663 + $0x18] sm:$0xff] %v3661
        %s3668 = smul.u32 14, 4
        %s3669 = smul.addr %s3668, 8
        %s3670 = scalar_lea.vmem [#allocation4], %s3669
        %v3671 = vld [vmem:[%s3670] sm:$0xff]
        %v3672 = vld [vmem:[%s3670 + $0x8] sm:$0xff]
        %v3673 = vld [vmem:[%s3670 + $0x10] sm:$0xff]
        %v3674 = vld [vmem:[%s3670 + $0x18] sm:$0xff]
        %v3675 = vmul.f32 %v3671, %v3658
        %v3676 = vmul.f32 %v3672, %v3659
        %v3677 = vmul.f32 %v3673, %v3660
        %v3678 = vmul.f32 %v3674, %v3661
        %s3679 = smul.addr %s3668, 8
        %s3680 = scalar_lea.vmem [#allocation5], %s3679
        %v3681 = vld [vmem:[%s3680] sm:$0xff]
        %v3682 = vld [vmem:[%s3680 + $0x8] sm:$0xff]
        %v3683 = vld [vmem:[%s3680 + $0x10] sm:$0xff]
        %v3684 = vld [vmem:[%s3680 + $0x18] sm:$0xff]
        %v3685 = vadd.f32 %v3675, %v3681
        %v3686 = vadd.f32 %v3676, %v3682
        %v3687 = vadd.f32 %v3677, %v3683
        %v3688 = vadd.f32 %v3678, %v3684
        %s3689 = smul.addr %s3668, 8
        %s3690 = scalar_lea.vmem [#allocation6], %s3689
        %3691 = vst [vmem:[%s3690] sm:$0xff] %v3685
        %3692 = vst [vmem:[%s3690 + $0x8] sm:$0xff] %v3686
        %3693 = vst [vmem:[%s3690 + $0x10] sm:$0xff] %v3687
        %3694 = vst [vmem:[%s3690 + $0x18] sm:$0xff] %v3688
        %s3695 = smul.u32 15, 4
        %s3696 = smul.addr %s3695, 8
        %s3697 = scalar_lea.vmem [#allocation4], %s3696
        %v3698 = vld [vmem:[%s3697] sm:$0xff]
        %v3699 = vld [vmem:[%s3697 + $0x8] sm:$0xff]
        %v3700 = vld [vmem:[%s3697 + $0x10] sm:$0xff]
        %v3701 = vld [vmem:[%s3697 + $0x18] sm:$0xff]
        %v3702 = vmul.f32 %v3698, %v3685
        %v3703 = vmul.f32 %v3699, %v3686
        %v3704 = vmul.f32 %v3700, %v3687
        %v3705 = vmul.f32 %v3701, %v3688
        %s3706 = smul.addr %s3695, 8
        %s3707 = scalar_lea.vmem [#allocation5], %s3706
        %v3708 = vld [vmem:[%s3707] sm:$0xff]
        %v3709 = vld [vmem:[%s3707 + $0x8] sm:$0xff]
        %v3710 = vld [vmem:[%s3707 + $0x10] sm:$0xff]
        %v3711 = vld [vmem:[%s3707 + $0x18] sm:$0xff]
        %v3712 = vadd.f32 %v3702, %v3708
        %v3713 = vadd.f32 %v3703, %v3709
        %v3714 = vadd.f32 %v3704, %v3710
        %v3715 = vadd.f32 %v3705, %v3711
        %s3716 = smul.addr %s3695, 8
        %s3717 = scalar_lea.vmem [#allocation6], %s3716
        %3718 = vst [vmem:[%s3717] sm:$0xff] %v3712
        %3719 = vst [vmem:[%s3717 + $0x8] sm:$0xff] %v3713
        %3720 = vst [vmem:[%s3717 + $0x10] sm:$0xff] %v3714
        %3721 = vst [vmem:[%s3717 + $0x18] sm:$0xff] %v3715
        %v3722 = vld [vmem:[#allocation6] sm:$0xff]
        %v3723 = vld [vmem:[#allocation6 + $0x8] sm:$0xff]
        %v3724 = vld [vmem:[#allocation6 + $0x10] sm:$0xff]
        %v3725 = vld [vmem:[#allocation6 + $0x18] sm:$0xff]
        %v3726 = vld [vmem:[#allocation6 + $0x20] sm:$0xff]
        %v3727 = vld [vmem:[#allocation6 + $0x28] sm:$0xff]
        %v3728 = vld [vmem:[#allocation6 + $0x30] sm:$0xff]
        %v3729 = vld [vmem:[#allocation6 + $0x38] sm:$0xff]
        %v3730 = vld [vmem:[#allocation6 + $0x40] sm:$0xff]
        %v3731 = vld [vmem:[#allocation6 + $0x48] sm:$0xff]
        %v3732 = vld [vmem:[#allocation6 + $0x50] sm:$0xff]
        %v3733 = vld [vmem:[#allocation6 + $0x58] sm:$0xff]
        %v3734 = vld [vmem:[#allocation6 + $0x60] sm:$0xff]
        %v3735 = vld [vmem:[#allocation6 + $0x68] sm:$0xff]
        %v3736 = vld [vmem:[#allocation6 + $0x70] sm:$0xff]
        %v3737 = vld [vmem:[#allocation6 + $0x78] sm:$0xff]
        %v3738 = vld [vmem:[#allocation6 + $0x80] sm:$0xff]
        %v3739 = vld [vmem:[#allocation6 + $0x88] sm:$0xff]
        %v3740 = vld [vmem:[#allocation6 + $0x90] sm:$0xff]
        %v3741 = vld [vmem:[#allocation6 + $0x98] sm:$0xff]
        %v3742 = vld [vmem:[#allocation6 + $0xa0] sm:$0xff]
        %v3743 = vld [vmem:[#allocation6 + $0xa8] sm:$0xff]
        %v3744 = vld [vmem:[#allocation6 + $0xb0] sm:$0xff]
        %v3745 = vld [vmem:[#allocation6 + $0xb8] sm:$0xff]
        %v3746 = vld [vmem:[#allocation6 + $0xc0] sm:$0xff]
        %v3747 = vld [vmem:[#allocation6 + $0xc8] sm:$0xff]
        %v3748 = vld [vmem:[#allocation6 + $0xd0] sm:$0xff]
        %v3749 = vld [vmem:[#allocation6 + $0xd8] sm:$0xff]
        %v3750 = vld [vmem:[#allocation6 + $0xe0] sm:$0xff]
        %v3751 = vld [vmem:[#allocation6 + $0xe8] sm:$0xff]
        %v3752 = vld [vmem:[#allocation6 + $0xf0] sm:$0xff]
        %v3753 = vld [vmem:[#allocation6 + $0xf8] sm:$0xff]
        %v3754 = vld [vmem:[#allocation6 + $0x100] sm:$0xff]
        %v3755 = vld [vmem:[#allocation6 + $0x108] sm:$0xff]
        %v3756 = vld [vmem:[#allocation6 + $0x110] sm:$0xff]
        %v3757 = vld [vmem:[#allocation6 + $0x118] sm:$0xff]
        %v3758 = vld [vmem:[#allocation6 + $0x120] sm:$0xff]
        %v3759 = vld [vmem:[#allocation6 + $0x128] sm:$0xff]
        %v3760 = vld [vmem:[#allocation6 + $0x130] sm:$0xff]
        %v3761 = vld [vmem:[#allocation6 + $0x138] sm:$0xff]
        %v3762 = vld [vmem:[#allocation6 + $0x140] sm:$0xff]
        %v3763 = vld [vmem:[#allocation6 + $0x148] sm:$0xff]
        %v3764 = vld [vmem:[#allocation6 + $0x150] sm:$0xff]
        %v3765 = vld [vmem:[#allocation6 + $0x158] sm:$0xff]
        %v3766 = vld [vmem:[#allocation6 + $0x160] sm:$0xff]
        %v3767 = vld [vmem:[#allocation6 + $0x168] sm:$0xff]
        %v3768 = vld [vmem:[#allocation6 + $0x170] sm:$0xff]
        %v3769 = vld [vmem:[#allocation6 + $0x178] sm:$0xff]
        %v3770 = vld [vmem:[#allocation6 + $0x180] sm:$0xff]
        %v3771 = vld [vmem:[#allocation6 + $0x188] sm:$0xff]
        %v3772 = vld [vmem:[#allocation6 + $0x190] sm:$0xff]
        %v3773 = vld [vmem:[#allocation6 + $0x198] sm:$0xff]
        %v3774 = vld [vmem:[#allocation6 + $0x1a0] sm:$0xff]
        %v3775 = vld [vmem:[#allocation6 + $0x1a8] sm:$0xff]
        %v3776 = vld [vmem:[#allocation6 + $0x1b0] sm:$0xff]
        %v3777 = vld [vmem:[#allocation6 + $0x1b8] sm:$0xff]
        %v3778 = vld [vmem:[#allocation6 + $0x1c0] sm:$0xff]
        %v3779 = vld [vmem:[#allocation6 + $0x1c8] sm:$0xff]
        %v3780 = vld [vmem:[#allocation6 + $0x1d0] sm:$0xff]
        %v3781 = vld [vmem:[#allocation6 + $0x1d8] sm:$0xff]
        %v3782 = vld [vmem:[#allocation6 + $0x1e0] sm:$0xff]
        %v3783 = vld [vmem:[#allocation6 + $0x1e8] sm:$0xff]
        %v3784 = vld [vmem:[#allocation6 + $0x1f0] sm:$0xff]
        %v3785 = vld [vmem:[#allocation6 + $0x1f8] sm:$0xff]
        %v3786 = vld [vmem:[#allocation3 + $0x20] sm:$0xff]
        %v3787 = vld [vmem:[#allocation3 + $0x28] sm:$0xff]
        %v3788 = vld [vmem:[#allocation3 + $0x30] sm:$0xff]
        %v3789 = vld [vmem:[#allocation3 + $0x38] sm:$0xff]
        %v3790 = vld [vmem:[#allocation3 + $0x68] sm:$0xff]
        %v3791 = vld [vmem:[#allocation3 + $0x70] sm:$0xff]
        %v3792 = vld [vmem:[#allocation3 + $0x78] sm:$0xff]
        %v3793 = vld [vmem:[#allocation3 + $0x80] sm:$0xff]
        %v3794 = vld [vmem:[#allocation3 + $0xb0] sm:$0xff]
        %v3795 = vld [vmem:[#allocation3 + $0xb8] sm:$0xff]
        %v3796 = vld [vmem:[#allocation3 + $0xc0] sm:$0xff]
        %v3797 = vld [vmem:[#allocation3 + $0xc8] sm:$0xff]
        %v3798 = vld [vmem:[#allocation3 + $0xf8] sm:$0xff]
        %v3799 = vld [vmem:[#allocation3 + $0x100] sm:$0xff]
        %v3800 = vld [vmem:[#allocation3 + $0x108] sm:$0xff]
        %v3801 = vld [vmem:[#allocation3 + $0x110] sm:$0xff]
        %v3802 = vld [vmem:[#allocation3 + $0x140] sm:$0xff]
        %v3803 = vld [vmem:[#allocation3 + $0x148] sm:$0xff]
        %v3804 = vld [vmem:[#allocation3 + $0x150] sm:$0xff]
        %v3805 = vld [vmem:[#allocation3 + $0x158] sm:$0xff]
        %v3806 = vld [vmem:[#allocation3 + $0x188] sm:$0xff]
        %v3807 = vld [vmem:[#allocation3 + $0x190] sm:$0xff]
        %v3808 = vld [vmem:[#allocation3 + $0x198] sm:$0xff]
        %v3809 = vld [vmem:[#allocation3 + $0x1a0] sm:$0xff]
        %v3810 = vld [vmem:[#allocation3 + $0x1d0] sm:$0xff]
        %v3811 = vld [vmem:[#allocation3 + $0x1d8] sm:$0xff]
        %v3812 = vld [vmem:[#allocation3 + $0x1e0] sm:$0xff]
        %v3813 = vld [vmem:[#allocation3 + $0x1e8] sm:$0xff]
        %v3814 = vld [vmem:[#allocation3 + $0x218] sm:$0xff]
        %v3815 = vld [vmem:[#allocation3 + $0x220] sm:$0xff]
        %v3816 = vld [vmem:[#allocation3 + $0x228] sm:$0xff]
        %v3817 = vld [vmem:[#allocation3 + $0x230] sm:$0xff]
        %v3818 = vld [vmem:[#allocation3 + $0x260] sm:$0xff]
        %v3819 = vld [vmem:[#allocation3 + $0x268] sm:$0xff]
        %v3820 = vld [vmem:[#allocation3 + $0x270] sm:$0xff]
        %v3821 = vld [vmem:[#allocation3 + $0x278] sm:$0xff]
        %v3822 = vld [vmem:[#allocation3 + $0x2a8] sm:$0xff]
        %v3823 = vld [vmem:[#allocation3 + $0x2b0] sm:$0xff]
        %v3824 = vld [vmem:[#allocation3 + $0x2b8] sm:$0xff]
        %v3825 = vld [vmem:[#allocation3 + $0x2c0] sm:$0xff]
        %v3826 = vld [vmem:[#allocation3 + $0x2f0] sm:$0xff]
        %v3827 = vld [vmem:[#allocation3 + $0x2f8] sm:$0xff]
        %v3828 = vld [vmem:[#allocation3 + $0x300] sm:$0xff]
        %v3829 = vld [vmem:[#allocation3 + $0x308] sm:$0xff]
        %v3830 = vld [vmem:[#allocation3 + $0x338] sm:$0xff]
        %v3831 = vld [vmem:[#allocation3 + $0x340] sm:$0xff]
        %v3832 = vld [vmem:[#allocation3 + $0x348] sm:$0xff]
        %v3833 = vld [vmem:[#allocation3 + $0x350] sm:$0xff]
        %v3834 = vld [vmem:[#allocation3 + $0x380] sm:$0xff]
        %v3835 = vld [vmem:[#allocation3 + $0x388] sm:$0xff]
        %v3836 = vld [vmem:[#allocation3 + $0x390] sm:$0xff]
        %v3837 = vld [vmem:[#allocation3 + $0x398] sm:$0xff]
        %v3838 = vld [vmem:[#allocation3 + $0x3c8] sm:$0xff]
        %v3839 = vld [vmem:[#allocation3 + $0x3d0] sm:$0xff]
        %v3840 = vld [vmem:[#allocation3 + $0x3d8] sm:$0xff]
        %v3841 = vld [vmem:[#allocation3 + $0x3e0] sm:$0xff]
        %v3842 = vld [vmem:[#allocation3 + $0x410] sm:$0xff]
        %v3843 = vld [vmem:[#allocation3 + $0x418] sm:$0xff]
        %v3844 = vld [vmem:[#allocation3 + $0x420] sm:$0xff]
        %v3845 = vld [vmem:[#allocation3 + $0x428] sm:$0xff]
        %v3846 = vld [vmem:[#allocation3 + $0x458] sm:$0xff]
        %v3847 = vld [vmem:[#allocation3 + $0x460] sm:$0xff]
        %v3848 = vld [vmem:[#allocation3 + $0x468] sm:$0xff]
        %v3849 = vld [vmem:[#allocation3 + $0x470] sm:$0xff]
        %v3850 = vmul.f32 %v3722, %v3786
        %v3851 = vmul.f32 %v3723, %v3787
        %v3852 = vmul.f32 %v3724, %v3788
        %v3853 = vmul.f32 %v3725, %v3789
        %v3854 = vmul.f32 %v3726, %v3790
        %v3855 = vmul.f32 %v3727, %v3791
        %v3856 = vmul.f32 %v3728, %v3792
        %v3857 = vmul.f32 %v3729, %v3793
        %v3858 = vmul.f32 %v3730, %v3794
        %v3859 = vmul.f32 %v3731, %v3795
        %v3860 = vmul.f32 %v3732, %v3796
        %v3861 = vmul.f32 %v3733, %v3797
        %v3862 = vmul.f32 %v3734, %v3798
        %v3863 = vmul.f32 %v3735, %v3799
        %v3864 = vmul.f32 %v3736, %v3800
        %v3865 = vmul.f32 %v3737, %v3801
        %v3866 = vmul.f32 %v3738, %v3802
        %v3867 = vmul.f32 %v3739, %v3803
        %v3868 = vmul.f32 %v3740, %v3804
        %v3869 = vmul.f32 %v3741, %v3805
        %v3870 = vmul.f32 %v3742, %v3806
        %v3871 = vmul.f32 %v3743, %v3807
        %v3872 = vmul.f32 %v3744, %v3808
        %v3873 = vmul.f32 %v3745, %v3809
        %v3874 = vmul.f32 %v3746, %v3810
        %v3875 = vmul.f32 %v3747, %v3811
        %v3876 = vmul.f32 %v3748, %v3812
        %v3877 = vmul.f32 %v3749, %v3813
        %v3878 = vmul.f32 %v3750, %v3814
        %v3879 = vmul.f32 %v3751, %v3815
        %v3880 = vmul.f32 %v3752, %v3816
        %v3881 = vmul.f32 %v3753, %v3817
        %v3882 = vmul.f32 %v3754, %v3818
        %v3883 = vmul.f32 %v3755, %v3819
        %v3884 = vmul.f32 %v3756, %v3820
        %v3885 = vmul.f32 %v3757, %v3821
        %v3886 = vmul.f32 %v3758, %v3822
        %v3887 = vmul.f32 %v3759, %v3823
        %v3888 = vmul.f32 %v3760, %v3824
        %v3889 = vmul.f32 %v3761, %v3825
        %v3890 = vmul.f32 %v3762, %v3826
        %v3891 = vmul.f32 %v3763, %v3827
        %v3892 = vmul.f32 %v3764, %v3828
        %v3893 = vmul.f32 %v3765, %v3829
        %v3894 = vmul.f32 %v3766, %v3830
        %v3895 = vmul.f32 %v3767, %v3831
        %v3896 = vmul.f32 %v3768, %v3832
        %v3897 = vmul.f32 %v3769, %v3833
        %v3898 = vmul.f32 %v3770, %v3834
        %v3899 = vmul.f32 %v3771, %v3835
        %v3900 = vmul.f32 %v3772, %v3836
        %v3901 = vmul.f32 %v3773, %v3837
        %v3902 = vmul.f32 %v3774, %v3838
        %v3903 = vmul.f32 %v3775, %v3839
        %v3904 = vmul.f32 %v3776, %v3840
        %v3905 = vmul.f32 %v3777, %v3841
        %v3906 = vmul.f32 %v3778, %v3842
        %v3907 = vmul.f32 %v3779, %v3843
        %v3908 = vmul.f32 %v3780, %v3844
        %v3909 = vmul.f32 %v3781, %v3845
        %v3910 = vmul.f32 %v3782, %v3846
        %v3911 = vmul.f32 %v3783, %v3847
        %v3912 = vmul.f32 %v3784, %v3848
        %v3913 = vmul.f32 %v3785, %v3849
        %v3914 = vsel %vm663, %v3026, %v2970
        %v3915 = vsel %vm663, %v3028, %v2971
        %v3916 = vsel %vm663, %v3030, %v2972
        %v3917 = vsel %vm663, %v3032, %v2973
        %v3918 = vsel %vm663, %v3034, %v2974
        %v3919 = vsel %vm663, %v3036, %v2975
        %v3920 = vsel %vm663, %v3038, %v2976
        %v3921 = vsel %vm663, %v3040, %v2977
        %v3922 = vsel %vm663, %v3042, %v2978
        %v3923 = vsel %vm663, %v3044, %v2979
        %v3924 = vsel %vm663, %v3046, %v2980
        %v3925 = vsel %vm663, %v3048, %v2981
        %v3926 = vsel %vm663, %v3050, %v2982
        %v3927 = vsel %vm663, %v3052, %v2983
        %v3928 = vsel %vm663, %v3054, %v2984
        %v3929 = vsel %vm663, %v3056, %v2985
        %v3930 = vmul.f32 %v3850, %v3914
        %v3931 = vmul.f32 %v3851, %v3914
        %v3932 = vmul.f32 %v3852, %v3914
        %v3933 = vmul.f32 %v3853, %v3914
        %v3934 = vmul.f32 %v3854, %v3915
        %v3935 = vmul.f32 %v3855, %v3915
        %v3936 = vmul.f32 %v3856, %v3915
        %v3937 = vmul.f32 %v3857, %v3915
        %v3938 = vmul.f32 %v3858, %v3916
        %v3939 = vmul.f32 %v3859, %v3916
        %v3940 = vmul.f32 %v3860, %v3916
        %v3941 = vmul.f32 %v3861, %v3916
        %v3942 = vmul.f32 %v3862, %v3917
        %v3943 = vmul.f32 %v3863, %v3917
        %v3944 = vmul.f32 %v3864, %v3917
        %v3945 = vmul.f32 %v3865, %v3917
        %v3946 = vmul.f32 %v3866, %v3918
        %v3947 = vmul.f32 %v3867, %v3918
        %v3948 = vmul.f32 %v3868, %v3918
        %v3949 = vmul.f32 %v3869, %v3918
        %v3950 = vmul.f32 %v3870, %v3919
        %v3951 = vmul.f32 %v3871, %v3919
        %v3952 = vmul.f32 %v3872, %v3919
        %v3953 = vmul.f32 %v3873, %v3919
        %v3954 = vmul.f32 %v3874, %v3920
        %v3955 = vmul.f32 %v3875, %v3920
        %v3956 = vmul.f32 %v3876, %v3920
        %v3957 = vmul.f32 %v3877, %v3920
        %v3958 = vmul.f32 %v3878, %v3921
        %v3959 = vmul.f32 %v3879, %v3921
        %v3960 = vmul.f32 %v3880, %v3921
        %v3961 = vmul.f32 %v3881, %v3921
        %v3962 = vmul.f32 %v3882, %v3922
        %v3963 = vmul.f32 %v3883, %v3922
        %v3964 = vmul.f32 %v3884, %v3922
        %v3965 = vmul.f32 %v3885, %v3922
        %v3966 = vmul.f32 %v3886, %v3923
        %v3967 = vmul.f32 %v3887, %v3923
        %v3968 = vmul.f32 %v3888, %v3923
        %v3969 = vmul.f32 %v3889, %v3923
        %v3970 = vmul.f32 %v3890, %v3924
        %v3971 = vmul.f32 %v3891, %v3924
        %v3972 = vmul.f32 %v3892, %v3924
        %v3973 = vmul.f32 %v3893, %v3924
        %v3974 = vmul.f32 %v3894, %v3925
        %v3975 = vmul.f32 %v3895, %v3925
        %v3976 = vmul.f32 %v3896, %v3925
        %v3977 = vmul.f32 %v3897, %v3925
        %v3978 = vmul.f32 %v3898, %v3926
        %v3979 = vmul.f32 %v3899, %v3926
        %v3980 = vmul.f32 %v3900, %v3926
        %v3981 = vmul.f32 %v3901, %v3926
        %v3982 = vmul.f32 %v3902, %v3927
        %v3983 = vmul.f32 %v3903, %v3927
        %v3984 = vmul.f32 %v3904, %v3927
        %v3985 = vmul.f32 %v3905, %v3927
        %v3986 = vmul.f32 %v3906, %v3928
        %v3987 = vmul.f32 %v3907, %v3928
        %v3988 = vmul.f32 %v3908, %v3928
        %v3989 = vmul.f32 %v3909, %v3928
        %v3990 = vmul.f32 %v3910, %v3929
        %v3991 = vmul.f32 %v3911, %v3929
        %v3992 = vmul.f32 %v3912, %v3929
        %v3993 = vmul.f32 %v3913, %v3929
        %v3994 = vld [vmem:[%s8] sm:$0xff]
        %v3995 = vld [vmem:[%s8 + $0x8] sm:$0xff]
        %v3996 = vld [vmem:[%s8 + $0x10] sm:$0xff]
        %v3997 = vld [vmem:[%s8 + $0x18] sm:$0xff]
        %v3998 = vld [vmem:[%s8 + $0x20] sm:$0xff]
        %v3999 = vld [vmem:[%s8 + $0x28] sm:$0xff]
        %v4000 = vld [vmem:[%s8 + $0x30] sm:$0xff]
        %v4001 = vld [vmem:[%s8 + $0x38] sm:$0xff]
        %v4002 = vld [vmem:[%s8 + $0x40] sm:$0xff]
        %v4003 = vld [vmem:[%s8 + $0x48] sm:$0xff]
        %v4004 = vld [vmem:[%s8 + $0x50] sm:$0xff]
        %v4005 = vld [vmem:[%s8 + $0x58] sm:$0xff]
        %v4006 = vld [vmem:[%s8 + $0x60] sm:$0xff]
        %v4007 = vld [vmem:[%s8 + $0x68] sm:$0xff]
        %v4008 = vld [vmem:[%s8 + $0x70] sm:$0xff]
        %v4009 = vld [vmem:[%s8 + $0x78] sm:$0xff]
        %v4010 = vld [vmem:[%s8 + $0x80] sm:$0xff]
        %v4011 = vld [vmem:[%s8 + $0x88] sm:$0xff]
        %v4012 = vld [vmem:[%s8 + $0x90] sm:$0xff]
        %v4013 = vld [vmem:[%s8 + $0x98] sm:$0xff]
        %v4014 = vld [vmem:[%s8 + $0xa0] sm:$0xff]
        %v4015 = vld [vmem:[%s8 + $0xa8] sm:$0xff]
        %v4016 = vld [vmem:[%s8 + $0xb0] sm:$0xff]
        %v4017 = vld [vmem:[%s8 + $0xb8] sm:$0xff]
        %v4018 = vld [vmem:[%s8 + $0xc0] sm:$0xff]
        %v4019 = vld [vmem:[%s8 + $0xc8] sm:$0xff]
        %v4020 = vld [vmem:[%s8 + $0xd0] sm:$0xff]
        %v4021 = vld [vmem:[%s8 + $0xd8] sm:$0xff]
        %v4022 = vld [vmem:[%s8 + $0xe0] sm:$0xff]
        %v4023 = vld [vmem:[%s8 + $0xe8] sm:$0xff]
        %v4024 = vld [vmem:[%s8 + $0xf0] sm:$0xff]
        %v4025 = vld [vmem:[%s8 + $0xf8] sm:$0xff]
        %v4026 = vld [vmem:[%s8 + $0x100] sm:$0xff]
        %v4027 = vld [vmem:[%s8 + $0x108] sm:$0xff]
        %v4028 = vld [vmem:[%s8 + $0x110] sm:$0xff]
        %v4029 = vld [vmem:[%s8 + $0x118] sm:$0xff]
        %v4030 = vld [vmem:[%s8 + $0x120] sm:$0xff]
        %v4031 = vld [vmem:[%s8 + $0x128] sm:$0xff]
        %v4032 = vld [vmem:[%s8 + $0x130] sm:$0xff]
        %v4033 = vld [vmem:[%s8 + $0x138] sm:$0xff]
        %v4034 = vld [vmem:[%s8 + $0x140] sm:$0xff]
        %v4035 = vld [vmem:[%s8 + $0x148] sm:$0xff]
        %v4036 = vld [vmem:[%s8 + $0x150] sm:$0xff]
        %v4037 = vld [vmem:[%s8 + $0x158] sm:$0xff]
        %v4038 = vld [vmem:[%s8 + $0x160] sm:$0xff]
        %v4039 = vld [vmem:[%s8 + $0x168] sm:$0xff]
        %v4040 = vld [vmem:[%s8 + $0x170] sm:$0xff]
        %v4041 = vld [vmem:[%s8 + $0x178] sm:$0xff]
        %v4042 = vld [vmem:[%s8 + $0x180] sm:$0xff]
        %v4043 = vld [vmem:[%s8 + $0x188] sm:$0xff]
        %v4044 = vld [vmem:[%s8 + $0x190] sm:$0xff]
        %v4045 = vld [vmem:[%s8 + $0x198] sm:$0xff]
        %v4046 = vld [vmem:[%s8 + $0x1a0] sm:$0xff]
        %v4047 = vld [vmem:[%s8 + $0x1a8] sm:$0xff]
        %v4048 = vld [vmem:[%s8 + $0x1b0] sm:$0xff]
        %v4049 = vld [vmem:[%s8 + $0x1b8] sm:$0xff]
        %v4050 = vld [vmem:[%s8 + $0x1c0] sm:$0xff]
        %v4051 = vld [vmem:[%s8 + $0x1c8] sm:$0xff]
        %v4052 = vld [vmem:[%s8 + $0x1d0] sm:$0xff]
        %v4053 = vld [vmem:[%s8 + $0x1d8] sm:$0xff]
        %v4054 = vld [vmem:[%s8 + $0x1e0] sm:$0xff]
        %v4055 = vld [vmem:[%s8 + $0x1e8] sm:$0xff]
        %v4056 = vld [vmem:[%s8 + $0x1f0] sm:$0xff]
        %v4057 = vld [vmem:[%s8 + $0x1f8] sm:$0xff]
        %4058 = vmatprep.subr.mxu0 0.0
        %4059 = vmatpush1.msra.mxu0 %v4009
        %4060 = vmatprep.subr.mxu0 0.0
        %4061 = vmatpush1.msra.mxu0 %v4008
        %4062 = vmatprep.subr.mxu0 0.0
        %4063 = vmatpush1.msra.mxu0 %v4007
        %4064 = vmatprep.subr.mxu0 0.0
        %4065 = vmatpush1.msra.mxu0 %v4006
        %4066 = vmatprep.subr.mxu0 0.0
        %4067 = vmatpush1.msra.mxu0 %v4005
        %4068 = vmatprep.subr.mxu0 0.0
        %4069 = vmatpush1.msra.mxu0 %v4004
        %4070 = vmatprep.subr.mxu0 0.0
        %4071 = vmatpush1.msra.mxu0 %v4003
        %4072 = vmatprep.subr.mxu0 0.0
        %4073 = vmatpush1.msra.mxu0 %v4002
        %4074 = vmatprep.subr.mxu0 0.0
        %4075 = vmatpush1.msra.mxu0 %v4001
        %4076 = vmatprep.subr.mxu0 0.0
        %4077 = vmatpush1.msra.mxu0 %v4000
        %4078 = vmatprep.subr.mxu0 0.0
        %4079 = vmatpush1.msra.mxu0 %v3999
        %4080 = vmatprep.subr.mxu0 0.0
        %4081 = vmatpush1.msra.mxu0 %v3998
        %4082 = vmatprep.subr.mxu0 0.0
        %4083 = vmatpush1.msra.mxu0 %v3997
        %4084 = vmatprep.subr.mxu0 0.0
        %4085 = vmatpush1.msra.mxu0 %v3996
        %4086 = vmatprep.subr.mxu0 0.0
        %4087 = vmatpush1.msra.mxu0 %v3995
        %4088 = vmatprep.subr.mxu0 0.0
        %4089 = vmatpush1.msra.mxu0 %v3994
        %4090 = vmatprep.subr.mxu0 0.0
        %4091 = vmatpush2.msra.mxu0 %v4025
        %4092 = vmatprep.subr.mxu0 0.0
        %4093 = vmatpush2.msra.mxu0 %v4024
        %4094 = vmatprep.subr.mxu0 0.0
        %4095 = vmatpush2.msra.mxu0 %v4023
        %4096 = vmatprep.subr.mxu0 0.0
        %4097 = vmatpush2.msra.mxu0 %v4022
        %4098 = vmatprep.subr.mxu0 0.0
        %4099 = vmatpush2.msra.mxu0 %v4021
        %4100 = vmatprep.subr.mxu0 0.0
        %4101 = vmatpush2.msra.mxu0 %v4020
        %4102 = vmatprep.subr.mxu0 0.0
        %4103 = vmatpush2.msra.mxu0 %v4019
        %4104 = vmatprep.subr.mxu0 0.0
        %4105 = vmatpush2.msra.mxu0 %v4018
        %4106 = vmatprep.subr.mxu0 0.0
        %4107 = vmatpush2.msra.mxu0 %v4017
        %4108 = vmatprep.subr.mxu0 0.0
        %4109 = vmatpush2.msra.mxu0 %v4016
        %4110 = vmatprep.subr.mxu0 0.0
        %4111 = vmatpush2.msra.mxu0 %v4015
        %4112 = vmatprep.subr.mxu0 0.0
        %4113 = vmatpush2.msra.mxu0 %v4014
        %4114 = vmatprep.subr.mxu0 0.0
        %4115 = vmatpush2.msra.mxu0 %v4013
        %4116 = vmatprep.subr.mxu0 0.0
        %4117 = vmatpush2.msra.mxu0 %v4012
        %4118 = vmatprep.subr.mxu0 0.0
        %4119 = vmatpush2.msra.mxu0 %v4011
        %4120 = vmatprep.subr.mxu0 0.0
        %4121 = vmatpush2.msra.mxu0 %v4010
        %4122 = vmatprep.mubr.f32.mxu0 %v3931
        %4123 = vmatmul.mubr.f32.gmra.mxu0 %v3930
        %v4124 = vpop.f32.mrf.mxu0
        %v4125 = vadd.f32 %v3212, %v4124
        %v4126 = vpop.f32.mrf.mxu0
        %4127 = vmatprep.mubr.f32.mxu0 %v3935
        %4128 = vmatmul.mubr.f32.gmra.mxu0 %v3934
        %v4129 = vpop.f32.mrf.mxu0
        %v4130 = vadd.f32 %v3217, %v4129
        %v4131 = vpop.f32.mrf.mxu0
        %4132 = vmatprep.mubr.f32.mxu0 %v3939
        %4133 = vmatmul.mubr.f32.gmra.mxu0 %v3938
        %v4134 = vpop.f32.mrf.mxu0
        %v4135 = vadd.f32 %v3222, %v4134
        %v4136 = vpop.f32.mrf.mxu0
        %4137 = vmatprep.mubr.f32.mxu0 %v3943
        %4138 = vmatmul.mubr.f32.gmra.mxu0 %v3942
        %v4139 = vpop.f32.mrf.mxu0
        %v4140 = vadd.f32 %v3227, %v4139
        %v4141 = vpop.f32.mrf.mxu0
        %4142 = vmatprep.mubr.f32.mxu0 %v3947
        %4143 = vmatmul.mubr.f32.gmra.mxu0 %v3946
        %v4144 = vpop.f32.mrf.mxu0
        %v4145 = vadd.f32 %v3232, %v4144
        %v4146 = vpop.f32.mrf.mxu0
        %4147 = vmatprep.mubr.f32.mxu0 %v3951
        %4148 = vmatmul.mubr.f32.gmra.mxu0 %v3950
        %v4149 = vpop.f32.mrf.mxu0
        %v4150 = vadd.f32 %v3237, %v4149
        %v4151 = vpop.f32.mrf.mxu0
        %4152 = vmatprep.mubr.f32.mxu0 %v3955
        %4153 = vmatmul.mubr.f32.gmra.mxu0 %v3954
        %v4154 = vpop.f32.mrf.mxu0
        %v4155 = vadd.f32 %v3242, %v4154
        %v4156 = vpop.f32.mrf.mxu0
        %4157 = vmatprep.mubr.f32.mxu0 %v3959
        %4158 = vmatmul.mubr.f32.gmra.mxu0 %v3958
        %v4159 = vpop.f32.mrf.mxu0
        %v4160 = vadd.f32 %v3247, %v4159
        %v4161 = vpop.f32.mrf.mxu0
        %4162 = vmatprep.mubr.f32.mxu0 %v3963
        %4163 = vmatmul.mubr.f32.gmra.mxu0 %v3962
        %v4164 = vpop.f32.mrf.mxu0
        %v4165 = vadd.f32 %v3252, %v4164
        %v4166 = vpop.f32.mrf.mxu0
        %4167 = vmatprep.mubr.f32.mxu0 %v3967
        %4168 = vmatmul.mubr.f32.gmra.mxu0 %v3966
        %v4169 = vpop.f32.mrf.mxu0
        %v4170 = vadd.f32 %v3257, %v4169
        %v4171 = vpop.f32.mrf.mxu0
        %4172 = vmatprep.mubr.f32.mxu0 %v3971
        %4173 = vmatmul.mubr.f32.gmra.mxu0 %v3970
        %v4174 = vpop.f32.mrf.mxu0
        %v4175 = vadd.f32 %v3262, %v4174
        %v4176 = vpop.f32.mrf.mxu0
        %4177 = vmatprep.mubr.f32.mxu0 %v3975
        %4178 = vmatmul.mubr.f32.gmra.mxu0 %v3974
        %v4179 = vpop.f32.mrf.mxu0
        %v4180 = vadd.f32 %v3267, %v4179
        %v4181 = vpop.f32.mrf.mxu0
        %4182 = vmatprep.mubr.f32.mxu0 %v3979
        %4183 = vmatmul.mubr.f32.gmra.mxu0 %v3978
        %v4184 = vpop.f32.mrf.mxu0
        %v4185 = vadd.f32 %v3272, %v4184
        %v4186 = vpop.f32.mrf.mxu0
        %4187 = vmatprep.mubr.f32.mxu0 %v3983
        %4188 = vmatmul.mubr.f32.gmra.mxu0 %v3982
        %v4189 = vpop.f32.mrf.mxu0
        %v4190 = vadd.f32 %v3277, %v4189
        %v4191 = vpop.f32.mrf.mxu0
        %4192 = vmatprep.mubr.f32.mxu0 %v3987
        %4193 = vmatmul.mubr.f32.gmra.mxu0 %v3986
        %v4194 = vpop.f32.mrf.mxu0
        %v4195 = vadd.f32 %v3282, %v4194
        %v4196 = vpop.f32.mrf.mxu0
        %4197 = vmatprep.mubr.f32.mxu0 %v3991
        %4198 = vmatmul.mubr.f32.gmra.mxu0 %v3990
        %v4199 = vpop.f32.mrf.mxu0
        %v4200 = vadd.f32 %v3287, %v4199
        %v4201 = vpop.f32.mrf.mxu0
        %4202 = vdwg.mxu0
        %4203 = vmatprep.subr.mxu0 0.0
        %4204 = vmatpush1.msra.mxu0 %v4041
        %4205 = vmatprep.subr.mxu0 0.0
        %4206 = vmatpush1.msra.mxu0 %v4040
        %4207 = vmatprep.subr.mxu0 0.0
        %4208 = vmatpush1.msra.mxu0 %v4039
        %4209 = vmatprep.subr.mxu0 0.0
        %4210 = vmatpush1.msra.mxu0 %v4038
        %4211 = vmatprep.subr.mxu0 0.0
        %4212 = vmatpush1.msra.mxu0 %v4037
        %4213 = vmatprep.subr.mxu0 0.0
        %4214 = vmatpush1.msra.mxu0 %v4036
        %4215 = vmatprep.subr.mxu0 0.0
        %4216 = vmatpush1.msra.mxu0 %v4035
        %4217 = vmatprep.subr.mxu0 0.0
        %4218 = vmatpush1.msra.mxu0 %v4034
        %4219 = vmatprep.subr.mxu0 0.0
        %4220 = vmatpush1.msra.mxu0 %v4033
        %4221 = vmatprep.subr.mxu0 0.0
        %4222 = vmatpush1.msra.mxu0 %v4032
        %4223 = vmatprep.subr.mxu0 0.0
        %4224 = vmatpush1.msra.mxu0 %v4031
        %4225 = vmatprep.subr.mxu0 0.0
        %4226 = vmatpush1.msra.mxu0 %v4030
        %4227 = vmatprep.subr.mxu0 0.0
        %4228 = vmatpush1.msra.mxu0 %v4029
        %4229 = vmatprep.subr.mxu0 0.0
        %4230 = vmatpush1.msra.mxu0 %v4028
        %4231 = vmatprep.subr.mxu0 0.0
        %4232 = vmatpush1.msra.mxu0 %v4027
        %4233 = vmatprep.subr.mxu0 0.0
        %4234 = vmatpush1.msra.mxu0 %v4026
        %4235 = vmatprep.subr.mxu0 0.0
        %4236 = vmatpush2.msra.mxu0 %v4057
        %4237 = vmatprep.subr.mxu0 0.0
        %4238 = vmatpush2.msra.mxu0 %v4056
        %4239 = vmatprep.subr.mxu0 0.0
        %4240 = vmatpush2.msra.mxu0 %v4055
        %4241 = vmatprep.subr.mxu0 0.0
        %4242 = vmatpush2.msra.mxu0 %v4054
        %4243 = vmatprep.subr.mxu0 0.0
        %4244 = vmatpush2.msra.mxu0 %v4053
        %4245 = vmatprep.subr.mxu0 0.0
        %4246 = vmatpush2.msra.mxu0 %v4052
        %4247 = vmatprep.subr.mxu0 0.0
        %4248 = vmatpush2.msra.mxu0 %v4051
        %4249 = vmatprep.subr.mxu0 0.0
        %4250 = vmatpush2.msra.mxu0 %v4050
        %4251 = vmatprep.subr.mxu0 0.0
        %4252 = vmatpush2.msra.mxu0 %v4049
        %4253 = vmatprep.subr.mxu0 0.0
        %4254 = vmatpush2.msra.mxu0 %v4048
        %4255 = vmatprep.subr.mxu0 0.0
        %4256 = vmatpush2.msra.mxu0 %v4047
        %4257 = vmatprep.subr.mxu0 0.0
        %4258 = vmatpush2.msra.mxu0 %v4046
        %4259 = vmatprep.subr.mxu0 0.0
        %4260 = vmatpush2.msra.mxu0 %v4045
        %4261 = vmatprep.subr.mxu0 0.0
        %4262 = vmatpush2.msra.mxu0 %v4044
        %4263 = vmatprep.subr.mxu0 0.0
        %4264 = vmatpush2.msra.mxu0 %v4043
        %4265 = vmatprep.subr.mxu0 0.0
        %4266 = vmatpush2.msra.mxu0 %v4042
        %4267 = vmatprep.mubr.f32.mxu0 %v3933
        %4268 = vmatmul.mubr.f32.gmra.mxu0 %v3932
        %v4269 = vpop.f32.mrf.mxu0
        %v4270 = vadd.f32 %v4125, %v4269
        %v4271 = vpop.f32.mrf.mxu0
        %4272 = vmatprep.mubr.f32.mxu0 %v3937
        %4273 = vmatmul.mubr.f32.gmra.mxu0 %v3936
        %v4274 = vpop.f32.mrf.mxu0
        %v4275 = vadd.f32 %v4130, %v4274
        %v4276 = vpop.f32.mrf.mxu0
        %4277 = vmatprep.mubr.f32.mxu0 %v3941
        %4278 = vmatmul.mubr.f32.gmra.mxu0 %v3940
        %v4279 = vpop.f32.mrf.mxu0
        %v4280 = vadd.f32 %v4135, %v4279
        %v4281 = vpop.f32.mrf.mxu0
        %4282 = vmatprep.mubr.f32.mxu0 %v3945
        %4283 = vmatmul.mubr.f32.gmra.mxu0 %v3944
        %v4284 = vpop.f32.mrf.mxu0
        %v4285 = vadd.f32 %v4140, %v4284
        %v4286 = vpop.f32.mrf.mxu0
        %4287 = vmatprep.mubr.f32.mxu0 %v3949
        %4288 = vmatmul.mubr.f32.gmra.mxu0 %v3948
        %v4289 = vpop.f32.mrf.mxu0
        %v4290 = vadd.f32 %v4145, %v4289
        %v4291 = vpop.f32.mrf.mxu0
        %4292 = vmatprep.mubr.f32.mxu0 %v3953
        %4293 = vmatmul.mubr.f32.gmra.mxu0 %v3952
        %v4294 = vpop.f32.mrf.mxu0
        %v4295 = vadd.f32 %v4150, %v4294
        %v4296 = vpop.f32.mrf.mxu0
        %4297 = vmatprep.mubr.f32.mxu0 %v3957
        %4298 = vmatmul.mubr.f32.gmra.mxu0 %v3956
        %v4299 = vpop.f32.mrf.mxu0
        %v4300 = vadd.f32 %v4155, %v4299
        %v4301 = vpop.f32.mrf.mxu0
        %4302 = vmatprep.mubr.f32.mxu0 %v3961
        %4303 = vmatmul.mubr.f32.gmra.mxu0 %v3960
        %v4304 = vpop.f32.mrf.mxu0
        %v4305 = vadd.f32 %v4160, %v4304
        %v4306 = vpop.f32.mrf.mxu0
        %4307 = vmatprep.mubr.f32.mxu0 %v3965
        %4308 = vmatmul.mubr.f32.gmra.mxu0 %v3964
        %v4309 = vpop.f32.mrf.mxu0
        %v4310 = vadd.f32 %v4165, %v4309
        %v4311 = vpop.f32.mrf.mxu0
        %4312 = vmatprep.mubr.f32.mxu0 %v3969
        %4313 = vmatmul.mubr.f32.gmra.mxu0 %v3968
        %v4314 = vpop.f32.mrf.mxu0
        %v4315 = vadd.f32 %v4170, %v4314
        %v4316 = vpop.f32.mrf.mxu0
        %4317 = vmatprep.mubr.f32.mxu0 %v3973
        %4318 = vmatmul.mubr.f32.gmra.mxu0 %v3972
        %v4319 = vpop.f32.mrf.mxu0
        %v4320 = vadd.f32 %v4175, %v4319
        %v4321 = vpop.f32.mrf.mxu0
        %4322 = vmatprep.mubr.f32.mxu0 %v3977
        %4323 = vmatmul.mubr.f32.gmra.mxu0 %v3976
        %v4324 = vpop.f32.mrf.mxu0
        %v4325 = vadd.f32 %v4180, %v4324
        %v4326 = vpop.f32.mrf.mxu0
        %4327 = vmatprep.mubr.f32.mxu0 %v3981
        %4328 = vmatmul.mubr.f32.gmra.mxu0 %v3980
        %v4329 = vpop.f32.mrf.mxu0
        %v4330 = vadd.f32 %v4185, %v4329
        %v4331 = vpop.f32.mrf.mxu0
        %4332 = vmatprep.mubr.f32.mxu0 %v3985
        %4333 = vmatmul.mubr.f32.gmra.mxu0 %v3984
        %v4334 = vpop.f32.mrf.mxu0
        %v4335 = vadd.f32 %v4190, %v4334
        %v4336 = vpop.f32.mrf.mxu0
        %4337 = vmatprep.mubr.f32.mxu0 %v3989
        %4338 = vmatmul.mubr.f32.gmra.mxu0 %v3988
        %v4339 = vpop.f32.mrf.mxu0
        %v4340 = vadd.f32 %v4195, %v4339
        %v4341 = vpop.f32.mrf.mxu0
        %4342 = vmatprep.mubr.f32.mxu0 %v3993
        %4343 = vmatmul.mubr.f32.gmra.mxu0 %v3992
        %v4344 = vpop.f32.mrf.mxu0
        %v4345 = vadd.f32 %v4200, %v4344
        %v4346 = vpop.f32.mrf.mxu0
        %4347 = vdwg.mxu0
        %4348 = vst.msk [vmem:[%s448] sm:$0xff] %vm469, %v4270
        %4349 = vst.msk [vmem:[%s448 + $0x8] sm:$0xff] %vm469, %v4275
        %4350 = vst.msk [vmem:[%s448 + $0x10] sm:$0xff] %vm469, %v4280
        %4351 = vst.msk [vmem:[%s448 + $0x18] sm:$0xff] %vm469, %v4285
        %4352 = vst.msk [vmem:[%s448 + $0x20] sm:$0xff] %vm469, %v4290
        %4353 = vst.msk [vmem:[%s448 + $0x28] sm:$0xff] %vm469, %v4295
        %4354 = vst.msk [vmem:[%s448 + $0x30] sm:$0xff] %vm469, %v4300
        %4355 = vst.msk [vmem:[%s448 + $0x38] sm:$0xff] %vm469, %v4305
        %4356 = vst.msk [vmem:[%s448 + $0x40] sm:$0xff] %vm469, %v4310
        %4357 = vst.msk [vmem:[%s448 + $0x48] sm:$0xff] %vm469, %v4315
        %4358 = vst.msk [vmem:[%s448 + $0x50] sm:$0xff] %vm469, %v4320
        %4359 = vst.msk [vmem:[%s448 + $0x58] sm:$0xff] %vm469, %v4325
        %4360 = vst.msk [vmem:[%s448 + $0x60] sm:$0xff] %vm469, %v4330
        %4361 = vst.msk [vmem:[%s448 + $0x68] sm:$0xff] %vm469, %v4335
        %4362 = vst.msk [vmem:[%s448 + $0x70] sm:$0xff] %vm469, %v4340
        %4363 = vst.msk [vmem:[%s448 + $0x78] sm:$0xff] %vm469, %v4345
        %s4364 = sand.u32 %s244, 1
        %s4365 = sand.u32 %s244, 1
        %s4366 = smul.addr %s4365, 128
        %s4367 = scalar_lea.vmem [#allocation8], %s4366
        // Predicated region
        $region99: #{group_mamba_forward.1} parent=93 // pred_check
          %p4368 = pneg %p254
        $region100: #{group_mamba_forward.1} parent=93 // pred_check_branch
          %4370 = sbr.rel (%p4368) target = $region102
        $region101: #{group_mamba_forward.1} parent=93 // pred_region
          %s4371 = smul.addr %s21, 8
          %s4372 = scalar_lea.vmem %s10, %s4371
          // Predicated region
          $region103: #{group_mamba_forward.1} parent=101 // pred_check
            _
          $region104: #{group_mamba_forward.1} parent=101 // pred_check_branch
            %4374 = sbr.rel (0) target = $region106
          $region105: #{group_mamba_forward.1} parent=101 // pred_region
            // Predicated region
            $region107: #{group_mamba_forward.1} parent=105 // pred_check
              _
            $region108: #{group_mamba_forward.1} parent=105 // pred_check_branch
              %4376 = sbr.rel (0) target = $region110
            $region109: #{group_mamba_forward.1} parent=105 // pred_region
              // Predicated region
              $region122: #{group_mamba_forward.1} parent=109 // pred_check
                _
              $region123: #{group_mamba_forward.1} parent=109 // pred_check_branch
                %4422 = sbr.rel (0) target = $region125
              $region124: #{group_mamba_forward.1} parent=109 // pred_region
                loop: start=0, step=1, limit=1
                $region126: #{group_mamba_forward.1} parent=124 // loop_pre_header
                  _
                $region127: #{group_mamba_forward.1} parent=124 // loop_header
                  %s4424 = sphi 0, %s4428
                  %p4425 = scmp.ge.s32.totalorder %s4424, 1
                  %s4429 = sphi %s4367, %s4367
                  %s4430 = sphi %s4372, %s4372
                $region128: #{group_mamba_forward.1} parent=124 // loop_header_branch
                  %4427 = sbr.rel (%p4425) target = $region132
                $region129: #{group_mamba_forward.1} parent=124 // loop_body
                  %v4431 = vld [vmem:[%s4429] sm:$0xff]
                  %4432 = vst [vmem:[%s4430] sm:$0xff] %v4431
                  %v4433 = vld [vmem:[%s4429 + $0x8] sm:$0xff]
                  %4434 = vst [vmem:[%s4430 + $0x10] sm:$0xff] %v4433
                  %v4435 = vld [vmem:[%s4429 + $0x10] sm:$0xff]
                  %4436 = vst [vmem:[%s4430 + $0x20] sm:$0xff] %v4435
                  %v4437 = vld [vmem:[%s4429 + $0x18] sm:$0xff]
                  %4438 = vst [vmem:[%s4430 + $0x30] sm:$0xff] %v4437
                  %v4439 = vld [vmem:[%s4429 + $0x20] sm:$0xff]
                  %4440 = vst [vmem:[%s4430 + $0x40] sm:$0xff] %v4439
                  %v4441 = vld [vmem:[%s4429 + $0x28] sm:$0xff]
                  %4442 = vst [vmem:[%s4430 + $0x50] sm:$0xff] %v4441
                  %v4443 = vld [vmem:[%s4429 + $0x30] sm:$0xff]
                  %4444 = vst [vmem:[%s4430 + $0x60] sm:$0xff] %v4443
                  %v4445 = vld [vmem:[%s4429 + $0x38] sm:$0xff]
                  %4446 = vst [vmem:[%s4430 + $0x70] sm:$0xff] %v4445
                  %v4447 = vld [vmem:[%s4429 + $0x40] sm:$0xff]
                  %4448 = vst [vmem:[%s4430 + $0x80] sm:$0xff] %v4447
                  %v4449 = vld [vmem:[%s4429 + $0x48] sm:$0xff]
                  %4450 = vst [vmem:[%s4430 + $0x90] sm:$0xff] %v4449
                  %v4451 = vld [vmem:[%s4429 + $0x50] sm:$0xff]
                  %4452 = vst [vmem:[%s4430 + $0xa0] sm:$0xff] %v4451
                  %v4453 = vld [vmem:[%s4429 + $0x58] sm:$0xff]
                  %4454 = vst [vmem:[%s4430 + $0xb0] sm:$0xff] %v4453
                  %v4455 = vld [vmem:[%s4429 + $0x60] sm:$0xff]
                  %4456 = vst [vmem:[%s4430 + $0xc0] sm:$0xff] %v4455
                  %v4457 = vld [vmem:[%s4429 + $0x68] sm:$0xff]
                  %4458 = vst [vmem:[%s4430 + $0xd0] sm:$0xff] %v4457
                  %v4459 = vld [vmem:[%s4429 + $0x70] sm:$0xff]
                  %4460 = vst [vmem:[%s4430 + $0xe0] sm:$0xff] %v4459
                  %v4461 = vld [vmem:[%s4429 + $0x78] sm:$0xff]
                  %4462 = vst [vmem:[%s4430 + $0xf0] sm:$0xff] %v4461
                $region130: #{group_mamba_forward.1} parent=124 // loop_footer
                  %s4428 = sadd.s32 1, %s4424
                $region131: #{group_mamba_forward.1} parent=124 // loop_footer_branch
                  %4423 = sbr.rel target = $region127
                $region132: #{group_mamba_forward.1} parent=124 // loop_exit
                  _
              $region125: #{group_mamba_forward.1} parent=109 // pred_fallthru
                _
              // Predicated region
              $region133: #{group_mamba_forward.1} parent=109 // pred_check
                _
              $region134: #{group_mamba_forward.1} parent=109 // pred_check_branch
                %4464 = sbr.rel target = $region136
              $region135: #{group_mamba_forward.1} parent=109 // pred_region
                _
              $region136: #{group_mamba_forward.1} parent=109 // pred_fallthru
                _
            $region110: #{group_mamba_forward.1} parent=105 // pred_fallthru
              _
            // Predicated region
            $region111: #{group_mamba_forward.1} parent=105 // pred_check
              _
            $region112: #{group_mamba_forward.1} parent=105 // pred_check_branch
              %4378 = sbr.rel target = $region114
            $region113: #{group_mamba_forward.1} parent=105 // pred_region
              %s4380 = ssub.s32 256, 1
              loop: start=0, step=1, limit=1
              $region115: #{group_mamba_forward.1} parent=113 // loop_pre_header
                _
              $region116: #{group_mamba_forward.1} parent=113 // loop_header
                %s4382 = sphi 0, %s4386
                %p4383 = scmp.ge.s32.totalorder %s4382, 1
                %s4387 = sphi %s4367, %s4367
                %s4388 = sphi %s4372, %s4372
              $region117: #{group_mamba_forward.1} parent=113 // loop_header_branch
                %4385 = sbr.rel (%p4383) target = $region121
              $region118: #{group_mamba_forward.1} parent=113 // loop_body
                %v4389 = vld [vmem:[%s4387] sm:%s4380]
                %4390 = vst [vmem:[%s4388] sm:%s4380] %v4389
                %v4391 = vld [vmem:[%s4387 + $0x8] sm:%s4380]
                %4392 = vst [vmem:[%s4388 + $0x10] sm:%s4380] %v4391
                %v4393 = vld [vmem:[%s4387 + $0x10] sm:%s4380]
                %4394 = vst [vmem:[%s4388 + $0x20] sm:%s4380] %v4393
                %v4395 = vld [vmem:[%s4387 + $0x18] sm:%s4380]
                %4396 = vst [vmem:[%s4388 + $0x30] sm:%s4380] %v4395
                %v4397 = vld [vmem:[%s4387 + $0x20] sm:%s4380]
                %4398 = vst [vmem:[%s4388 + $0x40] sm:%s4380] %v4397
                %v4399 = vld [vmem:[%s4387 + $0x28] sm:%s4380]
                %4400 = vst [vmem:[%s4388 + $0x50] sm:%s4380] %v4399
                %v4401 = vld [vmem:[%s4387 + $0x30] sm:%s4380]
                %4402 = vst [vmem:[%s4388 + $0x60] sm:%s4380] %v4401
                %v4403 = vld [vmem:[%s4387 + $0x38] sm:%s4380]
                %4404 = vst [vmem:[%s4388 + $0x70] sm:%s4380] %v4403
                %v4405 = vld [vmem:[%s4387 + $0x40] sm:%s4380]
                %4406 = vst [vmem:[%s4388 + $0x80] sm:%s4380] %v4405
                %v4407 = vld [vmem:[%s4387 + $0x48] sm:%s4380]
                %4408 = vst [vmem:[%s4388 + $0x90] sm:%s4380] %v4407
                %v4409 = vld [vmem:[%s4387 + $0x50] sm:%s4380]
                %4410 = vst [vmem:[%s4388 + $0xa0] sm:%s4380] %v4409
                %v4411 = vld [vmem:[%s4387 + $0x58] sm:%s4380]
                %4412 = vst [vmem:[%s4388 + $0xb0] sm:%s4380] %v4411
                %v4413 = vld [vmem:[%s4387 + $0x60] sm:%s4380]
                %4414 = vst [vmem:[%s4388 + $0xc0] sm:%s4380] %v4413
                %v4415 = vld [vmem:[%s4387 + $0x68] sm:%s4380]
                %4416 = vst [vmem:[%s4388 + $0xd0] sm:%s4380] %v4415
                %v4417 = vld [vmem:[%s4387 + $0x70] sm:%s4380]
                %4418 = vst [vmem:[%s4388 + $0xe0] sm:%s4380] %v4417
                %v4419 = vld [vmem:[%s4387 + $0x78] sm:%s4380]
                %4420 = vst [vmem:[%s4388 + $0xf0] sm:%s4380] %v4419
              $region119: #{group_mamba_forward.1} parent=113 // loop_footer
                %s4386 = sadd.s32 1, %s4382
              $region120: #{group_mamba_forward.1} parent=113 // loop_footer_branch
                %4381 = sbr.rel target = $region116
              $region121: #{group_mamba_forward.1} parent=113 // loop_exit
                _
            $region114: #{group_mamba_forward.1} parent=105 // pred_fallthru
              _
          $region106: #{group_mamba_forward.1} parent=101 // pred_fallthru
            _
          %4465 = vnop
        $region102: #{group_mamba_forward.1} parent=93 // pred_fallthru
          _
      $region94: #{group_mamba_forward.1} parent=5 // pred_fallthru
        _
      %p4466 = scmp.le.s32.totalorder 2, %s16
      // Predicated region
      $region137: #{group_mamba_forward.1} parent=5 // pred_check
        %p4467 = pneg %p4466
      $region138: #{group_mamba_forward.1} parent=5 // pred_check_branch
        %4469 = sbr.rel (%p4467) target = $region140
      $region139: #{group_mamba_forward.1} parent=5 // pred_region
        %s4470 = ssub.s32 %s16, 2
        // Predicated region
        $region141: #{group_mamba_forward.1} parent=139 // pred_check
          %p4471 = pneg %p260
        $region142: #{group_mamba_forward.1} parent=139 // pred_check_branch
          %4473 = sbr.rel (%p4471) target = $region144
        $region143: #{group_mamba_forward.1} parent=139 // pred_region
          %s4474 = sand.u32 %s245, 1
          %s4475 = sand.u32 %s245, 1
          %s4476 = smul.addr %s4475, 128
          %s4477 = scalar_lea.vmem [#allocation8], %s4476
        $region144: #{group_mamba_forward.1} parent=139 // pred_fallthru
          _
      $region140: #{group_mamba_forward.1} parent=5 // pred_fallthru
        _
    $region6: #{group_mamba_forward.1} parent=1 // loop_footer
      %s20 = sadd.s32 1, %s16
    $region7: #{group_mamba_forward.1} parent=1 // loop_footer_branch
      %15 = sbr.rel target = $region3
    $region8: #{group_mamba_forward.1} parent=1 // loop_exit
      _

</llo_original>
